<compile_context>
chip_gen: v5e
topology: v5e:2x2
jax: 0.10.0
libtpu: 0.0.40
codegen_flags: <defaults>
</compile_context>

<pallas_src>
import functools

import jax
import jax.numpy as jnp
from jax.experimental import pallas as pl
from jax.experimental.pallas import tpu as pltpu

_BN_EPS = 1e-5


def _round_up(x, m):
    return (x + m - 1) // m * m


# ------------------------------- Pallas kernel ------------------------------

def _maxpool_block_kernel(x_ref, w1_ref, shift_ref, w3_ref, b3_ref, mask_ref,
                          o_ref, y_scr, *, Ho, H1p, W1p):
    """Fused 1x1conv+BN+ReLU -> {maxpool 3x3/s2, conv 3x3/s2 + bias} (1 image).

    x_ref    : (R, cin_pad)        bf16  zero-padded, 4-parity-reordered input.
    w1_ref   : (cin_pad, cs_pad)   bf16  1x1 weights with BN scale folded in.
    shift_ref: (1, cs_pad)         f32   BN shift (beta - mean*scale).
    w3_ref   : (9, cs_pad, cs_pad) bf16  3x3 weights, tap-major, (ci, co).
    b3_ref   : (1, cs_pad)         f32   conv3 bias.
    mask_ref : (R, 1)              f32   1.0 at interior pixels, 0.0 at padding.
    o_ref    : (2, Ho*W1p, cs_pad) f32   [0] = maxpool branch, [1] = conv3.
    y_scr    : (R, cs_pad)         bf16  VMEM scratch holding padded y.
    """
    P = H1p * W1p                    # rows per parity plane in the scratch
    M = Ho * W1p                     # output slab rows (incl. junk columns)

    # ---- 1x1 conv (BN scale folded) + BN shift + ReLU; padded positions are
    #      explicitly re-zeroed so 0-padding is exact for both branches.
    y = jnp.dot(x_ref[...], w1_ref[...], preferred_element_type=jnp.float32)
    y = jnp.maximum(y + shift_ref[...], 0.0) * mask_ref[...]
    y_scr[...] = y.astype(y_scr.dtype)

    # ---- nine stride-2 taps as whole-image unit-stride slabs of the scratch.
    #      Tap (kh, kw) lives in parity plane (kh%2, kw%2) at a static offset,
    #      so every slice start is a compile-time constant.
    taps = []
    for kh in range(3):
        for kw in range(3):
            plane = (kh & 1) * 2 + (kw & 1)
            off = plane * P + (kh // 2) * W1p + (kw // 2)
            taps.append(y_scr[pl.ds(off, M), :])

    # ---- 3x3/s2 conv: nine full-image MXU matmuls, pure chained f32
    #      accumulation (v7x accumulates in-place in the MRB).
    acc = jnp.dot(taps[0], w3_ref[0], preferred_element_type=jnp.float32)
    for t in range(1, 9):
        acc = acc + jnp.dot(taps[t], w3_ref[t],
                            preferred_element_type=jnp.float32)

    # ---- 3x3/s2 max pool: elementwise max over the same nine slabs.
    #      y >= 0 and padded taps are exactly 0 -> 0-padding == true max pool.
    #      Running max kept in bf16 (native VPU lanes on v6e/v7x).
    mx = taps[0]
    for t in range(1, 9):
        mx = jnp.maximum(mx, taps[t])

    # ---- two dense lane/sublane-aligned slab stores (cs_pad % 128 == 0).
    o_ref[0] = mx.astype(o_ref.dtype)
    o_ref[1] = (acc + b3_ref[...]).astype(o_ref.dtype)


# ------------------------------- JAX wrapper ---------------------------------

def maxpool_block_forward(x, params):
    """x: (N, Cin, H, W) f32 NCHW -> (N, 2*(Cin//2), Ho, Wo) f32 NCHW."""
    w1, gamma, beta, mean, var, w3, b3 = params
    N, Cin, H, W = x.shape
    Cs = w1.shape[0]

    Ho = (H - 1) // 2 + 1            # output height (k=3, s=2, p=1)
    Wo = (W - 1) // 2 + 1            # output width
    H1p = (H + 3) // 2               # rows per row-parity plane (= ceil((H+2)/2))
    W1p = _round_up(Wo + 1, 8)       # cols per col-parity plane, sublane aligned
    P = H1p * W1p                    # flattened rows per parity plane
    R = 4 * P                        # total flattened scratch rows
    M = Ho * W1p                     # output slab rows (junk cols included)

    cin_pad = _round_up(Cin, 128)    # lane-dense MXU contraction dim
    cs_pad = _round_up(Cs, 128)      # lane-dense MXU output / store dim

    # ---- host-side prep (one cheap pass over x, fuses under jit) ----
    inv_std = jax.lax.rsqrt(var + _BN_EPS)
    scale = gamma * inv_std
    shift = beta - mean * scale

    # channels-last + channel padding to the lane width
    x_nhwc = jnp.transpose(x, (0, 2, 3, 1))
    x_nhwc = jnp.pad(x_nhwc, ((0, 0), (0, 0), (0, 0), (0, cin_pad - Cin)))
    # zero spatial pad (1 top/left) out to the full 2*H1p x 2*W1p parity grid
    x_sp = jnp.pad(x_nhwc, ((0, 0),
                            (1, 2 * H1p - H - 1),
                            (1, 2 * W1p - W - 1),
                            (0, 0)))
    # 4-way parity reorder + flatten:
    #   padded pixel (pr, pc) -> row  ((pr%2)*2 + pc%2)*P + (pr//2)*W1p + pc//2
    x_prep = (x_sp.reshape(N, H1p, 2, W1p, 2, cin_pad)
              .transpose(0, 2, 4, 1, 3, 5)
              .reshape(N, R, cin_pad)
              .astype(jnp.bfloat16))

    # interior-pixel mask in the same flattened parity layout (tiny, constant)
    mask2d = jnp.zeros((2 * H1p, 2 * W1p), jnp.float32)
    mask2d = mask2d.at[1:H + 1, 1:W + 1].set(1.0)
    mask = (mask2d.reshape(H1p, 2, W1p, 2)
            .transpose(1, 3, 0, 2)
            .reshape(R, 1))

    # 1x1 weights with BN scale folded in, (ci, co) layout, channel-padded
    w1_prep = jnp.zeros((cin_pad, cs_pad), jnp.float32)
    w1_prep = w1_prep.at[:Cin, :Cs].set((w1.reshape(Cs, Cin) * scale[:, None]).T)
    w1_prep = w1_prep.astype(jnp.bfloat16)

    shift_prep = jnp.zeros((1, cs_pad), jnp.float32).at[0, :Cs].set(shift)

    # 3x3 weights: tap-major, (ci, co) layout, channel-padded
    w3_prep = jnp.zeros((9, cs_pad, cs_pad), jnp.float32)
    w3_prep = w3_prep.at[:, :Cs, :Cs].set(
        jnp.transpose(w3, (2, 3, 1, 0)).reshape(9, Cs, Cs))
    w3_prep = w3_prep.astype(jnp.bfloat16)

    b3_prep = jnp.zeros((1, cs_pad), jnp.float32).at[0, :Cs].set(b3)

    kernel = functools.partial(_maxpool_block_kernel, Ho=Ho, H1p=H1p, W1p=W1p)

    # VMEM budget: 2x x-block + y_scr + 2x out-block + weights/bias/mask.
    est = (2 * R * cin_pad * 2            # x block, double-buffered, bf16
           + R * cs_pad * 2               # y scratch, bf16
           + 2 * 2 * M * cs_pad * 4       # out block, double-buffered, f32
           + 2 * (cin_pad * cs_pad * 2    # w1
                  + 9 * cs_pad * cs_pad * 2   # w3
                  + 2 * cs_pad * 4            # shift + bias
                  + R * 4))                   # mask
    vmem_limit = int(min(max(2 * est, 32 * 1024 * 1024), 64 * 1024 * 1024))

    out4 = pl.pallas_call(
        kernel,
        out_shape=jax.ShapeDtypeStruct((N, 2, M, cs_pad), jnp.float32),
        grid=(N,),
        in_specs=[
            pl.BlockSpec((None, R, cin_pad), lambda n: (n, 0, 0)),
            pl.BlockSpec((cin_pad, cs_pad), lambda n: (0, 0)),
            pl.BlockSpec((1, cs_pad), lambda n: (0, 0)),
            pl.BlockSpec((9, cs_pad, cs_pad), lambda n: (0, 0, 0)),
            pl.BlockSpec((1, cs_pad), lambda n: (0, 0)),
            pl.BlockSpec((R, 1), lambda n: (0, 0)),
        ],
        out_specs=pl.BlockSpec((None, 2, M, cs_pad), lambda n: (n, 0, 0, 0)),
        scratch_shapes=[pltpu.VMEM((R, cs_pad), jnp.bfloat16)],
        compiler_params=pltpu.CompilerParams(
            dimension_semantics=("parallel",),
            vmem_limit_bytes=vmem_limit),
    )(x_prep, w1_prep, shift_prep, w3_prep, b3_prep, mask)

    # (N, 2, Ho, W1p, cs_pad) -> drop junk cols / padded channels -> NCHW
    out = out4.reshape(N, 2, Ho, W1p, cs_pad)[:, :, :, :Wo, :Cs]
    out = out.transpose(0, 1, 4, 2, 3).reshape(N, 2 * Cs, Ho, Wo)
    return out


# --------------------------- Reference (pure JAX) ----------------------------

def reference_forward(x, params):
    w1, gamma, beta, mean, var, w3, b3 = params
    dn = ('NCHW', 'OIHW', 'NCHW')
    y = jax.lax.conv_general_dilated(x, w1, (1, 1), 'VALID', dimension_numbers=dn)
    y = (y - mean[None, :, None, None]) / jnp.sqrt(var[None, :, None, None] + _BN_EPS)
    y = y * gamma[None, :, None, None] + beta[None, :, None, None]
    y = jnp.maximum(y, 0.0)
    x1 = jax.lax.reduce_window(y, -jnp.inf, jax.lax.max,
                               (1, 1, 3, 3), (1, 1, 2, 2),
                               ((0, 0), (0, 0), (1, 1), (1, 1)))
    x2 = jax.lax.conv_general_dilated(y, w3, (2, 2), ((1, 1), (1, 1)),
                                      dimension_numbers=dn)
    x2 = x2 + b3[None, :, None, None]
    return jnp.concatenate([x1, x2], axis=1)


# ----------------------------------- main ------------------------------------

if __name__ == "__main__":
    key = jax.random.PRNGKey(0)
    N, Cin, H, W = 2, 4, 16, 16
    Cstage = Cin // 2  # stage_channel = in_channels // 2

    k_x, k_w1, k_g, k_b, k_m, k_v, k_w3, k_b3 = jax.random.split(key, 8)
    x = jax.random.normal(k_x, (N, Cin, H, W), dtype=jnp.float32)

    # Deterministic synthetic parameters (inference-mode BatchNorm statistics).
    w1 = 0.3 * jax.random.normal(k_w1, (Cstage, Cin, 1, 1), dtype=jnp.float32)
    gamma = jax.random.uniform(k_g, (Cstage,), minval=0.5, maxval=1.5, dtype=jnp.float32)
    beta = 0.1 * jax.random.normal(k_b, (Cstage,), dtype=jnp.float32)
    mean = 0.1 * jax.random.normal(k_m, (Cstage,), dtype=jnp.float32)
    var = jax.random.uniform(k_v, (Cstage,), minval=0.5, maxval=1.5, dtype=jnp.float32)
    w3 = 0.2 * jax.random.normal(k_w3, (Cstage, Cstage, 3, 3), dtype=jnp.float32)
    b3 = 0.1 * jax.random.normal(k_b3, (Cstage,), dtype=jnp.float32)

    params = (w1, gamma, beta, mean, var, w3, b3)

    fwd = jax.jit(maxpool_block_forward)
    out = jax.block_until_ready(fwd(x, params))
    ref = jax.block_until_ready(reference_forward(x, params))

    assert out.shape == (N, Cin, H // 2, W // 2), out.shape
    assert out.dtype == jnp.float32
    max_err = float(jnp.max(jnp.abs(out - ref)))
    assert jnp.allclose(out, ref, atol=2e-2, rtol=2e-2), max_err

    print("KERNEL_OK")
</pallas_src>

<mosaic_0001>
module attributes {stable_mosaic.version = 11 : i64} {
  func.func @_maxpool_block_kernel(%arg0: i32, %arg1: memref<1x576x128xbf16, #tpu.memory_space<vmem>>, %arg2: memref<128x128xbf16, #tpu.memory_space<vmem>>, %arg3: memref<1x128xf32, #tpu.memory_space<vmem>>, %arg4: memref<9x128x128xbf16, #tpu.memory_space<vmem>>, %arg5: memref<1x128xf32, #tpu.memory_space<vmem>>, %arg6: memref<576x1xf32, #tpu.memory_space<vmem>>, %arg7: memref<1x2x128x128xf32, #tpu.memory_space<vmem>>, %arg8: memref<576x128xbf16, #tpu.memory_space<vmem>>) attributes {dimension_semantics = [#tpu.dimension_semantics<parallel>], iteration_bounds = array<i64: 2>, scalar_prefetch = 0 : i64, scratch_operands = 1 : i64, tpu.core_type = #tpu.core_type<tc>, window_params = [{transform_indices = @transform_0, window_bounds = array<i64: 1, 576, 128>}, {pipeline_mode = #tpu.pipeline_mode<synchronous>, transform_indices = @transform_1, window_bounds = array<i64: 128, 128>}, {pipeline_mode = #tpu.pipeline_mode<synchronous>, transform_indices = @transform_2, window_bounds = array<i64: 1, 128>}, {pipeline_mode = #tpu.pipeline_mode<synchronous>, transform_indices = @transform_3, window_bounds = array<i64: 9, 128, 128>}, {pipeline_mode = #tpu.pipeline_mode<synchronous>, transform_indices = @transform_4, window_bounds = array<i64: 1, 128>}, {pipeline_mode = #tpu.pipeline_mode<synchronous>, transform_indices = @transform_5, window_bounds = array<i64: 576, 1>}, {transform_indices = @transform_6, window_bounds = array<i64: 1, 2, 128, 128>}]} {
    %c0 = arith.constant 0 : index
    %c0_0 = arith.constant 0 : index
    %c0_1 = arith.constant 0 : index
    %0 = vector.load %arg1[%c0, %c0_0, %c0_1] : memref<1x576x128xbf16, #tpu.memory_space<vmem>>, vector<1x576x128xbf16>
    %1 = vector.shape_cast %0 : vector<1x576x128xbf16> to vector<576x128xbf16>
    %c0_2 = arith.constant 0 : index
    %c0_3 = arith.constant 0 : index
    %2 = vector.load %arg2[%c0_2, %c0_3] : memref<128x128xbf16, #tpu.memory_space<vmem>>, vector<128x128xbf16>
    %cst = arith.constant dense<0.000000e+00> : vector<576x128xf32>
    %3 = tpu.matmul %1, %2, %cst {dimension_numbers = #tpu.dot_dimension_numbers<[1], [0], [0], [1], [0, 0, 1, 1], [], []>} : vector<576x128xbf16>, vector<128x128xbf16>, vector<576x128xf32> -> vector<576x128xf32>
    %c0_4 = arith.constant 0 : index
    %c0_5 = arith.constant 0 : index
    %4 = vector.load %arg3[%c0_4, %c0_5] : memref<1x128xf32, #tpu.memory_space<vmem>>, vector<1x128xf32>
    %5 = vector.broadcast %4 : vector<1x128xf32> to vector<576x128xf32>
    %6 = arith.addf %3, %5 : vector<576x128xf32>
    %cst_6 = arith.constant 0.000000e+00 : f32
    %7 = vector.broadcast %cst_6 : f32 to vector<576x128xf32>
    %8 = arith.maximumf %6, %7 : vector<576x128xf32>
    %c0_7 = arith.constant 0 : index
    %c0_8 = arith.constant 0 : index
    %9 = vector.load %arg6[%c0_7, %c0_8] : memref<576x1xf32, #tpu.memory_space<vmem>>, vector<576x1xf32>
    %10 = vector.broadcast %9 : vector<576x1xf32> to vector<576x128xf32>
    %11 = arith.mulf %8, %10 : vector<576x128xf32>
    %12 = arith.truncf %11 : vector<576x128xf32> to vector<576x128xbf16>
    %c0_9 = arith.constant 0 : index
    %c0_10 = arith.constant 0 : index
    %13 = vector.load %arg8[%c0_9, %c0_10] : memref<576x128xbf16, #tpu.memory_space<vmem>>, vector<576x128xbf16>
    tpu.vector_store %arg8[%c0_9, %c0_10], %12 {strides = array<i32>} : memref<576x128xbf16, #tpu.memory_space<vmem>>, vector<576x128xbf16>,
    %c0_11 = arith.constant 0 : index
    %c0_12 = arith.constant 0 : index
    %14 = vector.load %arg8[%c0_11, %c0_12] : memref<576x128xbf16, #tpu.memory_space<vmem>>, vector<128x128xbf16>
    %c144 = arith.constant 144 : index
    %c0_13 = arith.constant 0 : index
    %15 = vector.load %arg8[%c144, %c0_13] : memref<576x128xbf16, #tpu.memory_space<vmem>>, vector<128x128xbf16>
    %c1 = arith.constant 1 : index
    %c0_14 = arith.constant 0 : index
    %16 = vector.load %arg8[%c1, %c0_14] : memref<576x128xbf16, #tpu.memory_space<vmem>>, vector<128x128xbf16>
    %c288 = arith.constant 288 : index
    %c0_15 = arith.constant 0 : index
    %17 = vector.load %arg8[%c288, %c0_15] : memref<576x128xbf16, #tpu.memory_space<vmem>>, vector<128x128xbf16>
    %c432 = arith.constant 432 : index
    %c0_16 = arith.constant 0 : index
    %18 = vector.load %arg8[%c432, %c0_16] : memref<576x128xbf16, #tpu.memory_space<vmem>>, vector<128x128xbf16>
    %c289 = arith.constant 289 : index
    %c0_17 = arith.constant 0 : index
    %19 = vector.load %arg8[%c289, %c0_17] : memref<576x128xbf16, #tpu.memory_space<vmem>>, vector<128x128xbf16>
    %c16 = arith.constant 16 : index
    %c0_18 = arith.constant 0 : index
    %20 = vector.load %arg8[%c16, %c0_18] : memref<576x128xbf16, #tpu.memory_space<vmem>>, vector<128x128xbf16>
    %c160 = arith.constant 160 : index
    %c0_19 = arith.constant 0 : index
    %21 = vector.load %arg8[%c160, %c0_19] : memref<576x128xbf16, #tpu.memory_space<vmem>>, vector<128x128xbf16>
    %c17 = arith.constant 17 : index
    %c0_20 = arith.constant 0 : index
    %22 = vector.load %arg8[%c17, %c0_20] : memref<576x128xbf16, #tpu.memory_space<vmem>>, vector<128x128xbf16>
    %c0_21 = arith.constant 0 : index
    %c0_22 = arith.constant 0 : index
    %c0_23 = arith.constant 0 : index
    %23 = vector.load %arg4[%c0_21, %c0_22, %c0_23] : memref<9x128x128xbf16, #tpu.memory_space<vmem>>, vector<1x128x128xbf16>
    %24 = vector.shape_cast %23 : vector<1x128x128xbf16> to vector<128x128xbf16>
    %cst_24 = arith.constant dense<0.000000e+00> : vector<128x128xf32>
    %25 = tpu.matmul %14, %24, %cst_24 {dimension_numbers = #tpu.dot_dimension_numbers<[1], [0], [0], [1], [0, 0, 1, 1], [], []>} : vector<128x128xbf16>, vector<128x128xbf16>, vector<128x128xf32> -> vector<128x128xf32>
    %c1_25 = arith.constant 1 : index
    %c0_26 = arith.constant 0 : index
    %c0_27 = arith.constant 0 : index
    %26 = vector.load %arg4[%c1_25, %c0_26, %c0_27] : memref<9x128x128xbf16, #tpu.memory_space<vmem>>, vector<1x128x128xbf16>
    %27 = vector.shape_cast %26 : vector<1x128x128xbf16> to vector<128x128xbf16>
    %cst_28 = arith.constant dense<0.000000e+00> : vector<128x128xf32>
    %28 = tpu.matmul %15, %27, %cst_28 {dimension_numbers = #tpu.dot_dimension_numbers<[1], [0], [0], [1], [0, 0, 1, 1], [], []>} : vector<128x128xbf16>, vector<128x128xbf16>, vector<128x128xf32> -> vector<128x128xf32>
    %29 = arith.addf %25, %28 : vector<128x128xf32>
    %c2 = arith.constant 2 : index
    %c0_29 = arith.constant 0 : index
    %c0_30 = arith.constant 0 : index
    %30 = vector.load %arg4[%c2, %c0_29, %c0_30] : memref<9x128x128xbf16, #tpu.memory_space<vmem>>, vector<1x128x128xbf16>
    %31 = vector.shape_cast %30 : vector<1x128x128xbf16> to vector<128x128xbf16>
    %cst_31 = arith.constant dense<0.000000e+00> : vector<128x128xf32>
    %32 = tpu.matmul %16, %31, %cst_31 {dimension_numbers = #tpu.dot_dimension_numbers<[1], [0], [0], [1], [0, 0, 1, 1], [], []>} : vector<128x128xbf16>, vector<128x128xbf16>, vector<128x128xf32> -> vector<128x128xf32>
    %33 = arith.addf %29, %32 : vector<128x128xf32>
    %c3 = arith.constant 3 : index
    %c0_32 = arith.constant 0 : index
    %c0_33 = arith.constant 0 : index
    %34 = vector.load %arg4[%c3, %c0_32, %c0_33] : memref<9x128x128xbf16, #tpu.memory_space<vmem>>, vector<1x128x128xbf16>
    %35 = vector.shape_cast %34 : vector<1x128x128xbf16> to vector<128x128xbf16>
    %cst_34 = arith.constant dense<0.000000e+00> : vector<128x128xf32>
    %36 = tpu.matmul %17, %35, %cst_34 {dimension_numbers = #tpu.dot_dimension_numbers<[1], [0], [0], [1], [0, 0, 1, 1], [], []>} : vector<128x128xbf16>, vector<128x128xbf16>, vector<128x128xf32> -> vector<128x128xf32>
    %37 = arith.addf %33, %36 : vector<128x128xf32>
    %c4 = arith.constant 4 : index
    %c0_35 = arith.constant 0 : index
    %c0_36 = arith.constant 0 : index
    %38 = vector.load %arg4[%c4, %c0_35, %c0_36] : memref<9x128x128xbf16, #tpu.memory_space<vmem>>, vector<1x128x128xbf16>
    %39 = vector.shape_cast %38 : vector<1x128x128xbf16> to vector<128x128xbf16>
    %cst_37 = arith.constant dense<0.000000e+00> : vector<128x128xf32>
    %40 = tpu.matmul %18, %39, %cst_37 {dimension_numbers = #tpu.dot_dimension_numbers<[1], [0], [0], [1], [0, 0, 1, 1], [], []>} : vector<128x128xbf16>, vector<128x128xbf16>, vector<128x128xf32> -> vector<128x128xf32>
    %41 = arith.addf %37, %40 : vector<128x128xf32>
    %c5 = arith.constant 5 : index
    %c0_38 = arith.constant 0 : index
    %c0_39 = arith.constant 0 : index
    %42 = vector.load %arg4[%c5, %c0_38, %c0_39] : memref<9x128x128xbf16, #tpu.memory_space<vmem>>, vector<1x128x128xbf16>
    %43 = vector.shape_cast %42 : vector<1x128x128xbf16> to vector<128x128xbf16>
    %cst_40 = arith.constant dense<0.000000e+00> : vector<128x128xf32>
    %44 = tpu.matmul %19, %43, %cst_40 {dimension_numbers = #tpu.dot_dimension_numbers<[1], [0], [0], [1], [0, 0, 1, 1], [], []>} : vector<128x128xbf16>, vector<128x128xbf16>, vector<128x128xf32> -> vector<128x128xf32>
    %45 = arith.addf %41, %44 : vector<128x128xf32>
    %c6 = arith.constant 6 : index
    %c0_41 = arith.constant 0 : index
    %c0_42 = arith.constant 0 : index
    %46 = vector.load %arg4[%c6, %c0_41, %c0_42] : memref<9x128x128xbf16, #tpu.memory_space<vmem>>, vector<1x128x128xbf16>
    %47 = vector.shape_cast %46 : vector<1x128x128xbf16> to vector<128x128xbf16>
    %cst_43 = arith.constant dense<0.000000e+00> : vector<128x128xf32>
    %48 = tpu.matmul %20, %47, %cst_43 {dimension_numbers = #tpu.dot_dimension_numbers<[1], [0], [0], [1], [0, 0, 1, 1], [], []>} : vector<128x128xbf16>, vector<128x128xbf16>, vector<128x128xf32> -> vector<128x128xf32>
    %49 = arith.addf %45, %48 : vector<128x128xf32>
    %c7 = arith.constant 7 : index
    %c0_44 = arith.constant 0 : index
    %c0_45 = arith.constant 0 : index
    %50 = vector.load %arg4[%c7, %c0_44, %c0_45] : memref<9x128x128xbf16, #tpu.memory_space<vmem>>, vector<1x128x128xbf16>
    %51 = vector.shape_cast %50 : vector<1x128x128xbf16> to vector<128x128xbf16>
    %cst_46 = arith.constant dense<0.000000e+00> : vector<128x128xf32>
    %52 = tpu.matmul %21, %51, %cst_46 {dimension_numbers = #tpu.dot_dimension_numbers<[1], [0], [0], [1], [0, 0, 1, 1], [], []>} : vector<128x128xbf16>, vector<128x128xbf16>, vector<128x128xf32> -> vector<128x128xf32>
    %53 = arith.addf %49, %52 : vector<128x128xf32>
    %c8 = arith.constant 8 : index
    %c0_47 = arith.constant 0 : index
    %c0_48 = arith.constant 0 : index
    %54 = vector.load %arg4[%c8, %c0_47, %c0_48] : memref<9x128x128xbf16, #tpu.memory_space<vmem>>, vector<1x128x128xbf16>
    %55 = vector.shape_cast %54 : vector<1x128x128xbf16> to vector<128x128xbf16>
    %cst_49 = arith.constant dense<0.000000e+00> : vector<128x128xf32>
    %56 = tpu.matmul %22, %55, %cst_49 {dimension_numbers = #tpu.dot_dimension_numbers<[1], [0], [0], [1], [0, 0, 1, 1], [], []>} : vector<128x128xbf16>, vector<128x128xbf16>, vector<128x128xf32> -> vector<128x128xf32>
    %57 = arith.addf %53, %56 : vector<128x128xf32>
    %58 = arith.maximumf %14, %15 : vector<128x128xbf16>
    %59 = arith.maximumf %58, %16 : vector<128x128xbf16>
    %60 = arith.maximumf %59, %17 : vector<128x128xbf16>
    %61 = arith.maximumf %60, %18 : vector<128x128xbf16>
    %62 = arith.maximumf %61, %19 : vector<128x128xbf16>
    %63 = arith.maximumf %62, %20 : vector<128x128xbf16>
    %64 = arith.maximumf %63, %21 : vector<128x128xbf16>
    %65 = arith.maximumf %64, %22 : vector<128x128xbf16>
    %66 = arith.extf %65 : vector<128x128xbf16> to vector<128x128xf32>
    %c0_50 = arith.constant 0 : index
    %c0_51 = arith.constant 0 : index
    %c0_52 = arith.constant 0 : index
    %c0_53 = arith.constant 0 : index
    %67 = vector.load %arg7[%c0_50, %c0_51, %c0_52, %c0_53] : memref<1x2x128x128xf32, #tpu.memory_space<vmem>>, vector<1x1x128x128xf32>
    %68 = vector.shape_cast %67 : vector<1x1x128x128xf32> to vector<128x128xf32>
    %69 = vector.shape_cast %66 : vector<128x128xf32> to vector<1x1x128x128xf32>
    tpu.vector_store %arg7[%c0_50, %c0_51, %c0_52, %c0_53], %69 {strides = array<i32>} : memref<1x2x128x128xf32, #tpu.memory_space<vmem>>, vector<1x1x128x128xf32>,
    %c0_54 = arith.constant 0 : index
    %c0_55 = arith.constant 0 : index
    %70 = vector.load %arg5[%c0_54, %c0_55] : memref<1x128xf32, #tpu.memory_space<vmem>>, vector<1x128xf32>
    %71 = vector.broadcast %70 : vector<1x128xf32> to vector<128x128xf32>
    %72 = arith.addf %57, %71 : vector<128x128xf32>
    %c0_56 = arith.constant 0 : index
    %c1_57 = arith.constant 1 : index
    %c0_58 = arith.constant 0 : index
    %c0_59 = arith.constant 0 : index
    %73 = vector.load %arg7[%c0_56, %c1_57, %c0_58, %c0_59] : memref<1x2x128x128xf32, #tpu.memory_space<vmem>>, vector<1x1x128x128xf32>
    %74 = vector.shape_cast %73 : vector<1x1x128x128xf32> to vector<128x128xf32>
    %75 = vector.shape_cast %72 : vector<128x128xf32> to vector<1x1x128x128xf32>
    tpu.vector_store %arg7[%c0_56, %c1_57, %c0_58, %c0_59], %75 {strides = array<i32>} : memref<1x2x128x128xf32, #tpu.memory_space<vmem>>, vector<1x1x128x128xf32>,
    return
  }
  func.func @transform_0(%arg0: i32) -> (i32, i32, i32) {
    %c0_i32 = arith.constant 0 : i32
    %c0_i32_0 = arith.constant 0 : i32
    %c0_i32_1 = arith.constant 0 : i32
    return %arg0, %c0_i32, %c0_i32_0 : i32, i32, i32
  }
  func.func @transform_1(%arg0: i32) -> (i32, i32) {
    %c0_i32 = arith.constant 0 : i32
    %c0_i32_0 = arith.constant 0 : i32
    %c0_i32_1 = arith.constant 0 : i32
    return %c0_i32, %c0_i32_0 : i32, i32
  }
  func.func @transform_2(%arg0: i32) -> (i32, i32) {
    %c0_i32 = arith.constant 0 : i32
    %c0_i32_0 = arith.constant 0 : i32
    %c0_i32_1 = arith.constant 0 : i32
    return %c0_i32, %c0_i32_0 : i32, i32
  }
  func.func @transform_3(%arg0: i32) -> (i32, i32, i32) {
    %c0_i32 = arith.constant 0 : i32
    %c0_i32_0 = arith.constant 0 : i32
    %c0_i32_1 = arith.constant 0 : i32
    %c0_i32_2 = arith.constant 0 : i32
    return %c0_i32, %c0_i32_0, %c0_i32_1 : i32, i32, i32
  }
  func.func @transform_4(%arg0: i32) -> (i32, i32) {
    %c0_i32 = arith.constant 0 : i32
    %c0_i32_0 = arith.constant 0 : i32
    %c0_i32_1 = arith.constant 0 : i32
    return %c0_i32, %c0_i32_0 : i32, i32
  }
  func.func @transform_5(%arg0: i32) -> (i32, i32) {
    %c0_i32 = arith.constant 0 : i32
    %c0_i32_0 = arith.constant 0 : i32
    %c0_i32_1 = arith.constant 0 : i32
    return %c0_i32, %c0_i32_0 : i32, i32
  }
  func.func @transform_6(%arg0: i32) -> (i32, i32, i32, i32) {
    %c0_i32 = arith.constant 0 : i32
    %c0_i32_0 = arith.constant 0 : i32
    %c0_i32_1 = arith.constant 0 : i32
    %c0_i32_2 = arith.constant 0 : i32
    return %arg0, %c0_i32, %c0_i32_0, %c0_i32_1 : i32, i32, i32, i32
  }
}

</mosaic_0001>

<llo_original>
// kernel: maxpool_block_forward.1
$region0: #{maxpool_block_forward.1}
  #allocation0 [shape = 'u32[]', space=smem, size = 0x4, offset = 0x4, fixed_abs, tag = 'smem constant byte address 0x4 - core index']
  #allocation1 [shape = 'u32[72,128]{1,0:T(1,128)}', space=vmem, size = 0x9000, scoped, tag = 'internal scratch']
  #allocation2 [shape = 'bf16[576,128]{1,0:T(8,128)(2,1)}', space=vmem, size = 0x24000, scoped, tag = 'scratch operand']
  %s0 = inlined_call_operand.vmem [shape: bf16[2,576,128], index: 0, kind: input, shape index: {}]
  %s1 = inlined_call_operand.vmem [shape: bf16[128,128], index: 1, kind: input, shape index: {}]
  %s2 = inlined_call_operand.vmem [shape: f32[1,128], index: 2, kind: input, shape index: {}]
  %s3 = inlined_call_operand.vmem [shape: bf16[9,128,128], index: 3, kind: input, shape index: {}]
  %s4 = inlined_call_operand.vmem [shape: f32[1,128], index: 4, kind: input, shape index: {}]
  %s5 = inlined_call_operand.vmem [shape: f32[576,1], index: 5, kind: input, shape index: {}]
  %s6 = inlined_call_operand.vmem [shape: f32[2,2,128,128], index: 6, kind: output, shape index: {}]
  %s7 = sld [smem:[#allocation0]]
  $region57: #{maxpool_block_forward.1} parent=0
    _
  %s9 = ssub.s32 1, %s7
  %s10 = scalar_select 0, %s9, %s7
  loop: start=0, step=1, limit=4
  $region2: #{maxpool_block_forward.1} parent=0 // loop_pre_header
    _
  $region3: #{maxpool_block_forward.1} parent=0 // loop_header
    %s12 = sphi 0, %s16
    %p13 = scmp.ge.s32.totalorder %s12, 4
    %s22 = sphi 0, %s24
    %s25 = sphi 0, %s22
    %s26 = sphi 0, %s25
    %s42 = sphi 0, %s26
    %s46 = sphi 0, %s46
    %s48 = sphi 0, %s46
    %s49 = sphi 0, %s48
    %s63 = sphi 0, %s49
    %s67 = sphi 0, %s67
    %s69 = sphi 0, %s67
    %s70 = sphi 0, %s69
    %s84 = sphi 0, %s70
    %s88 = sphi 0, %s88
    %s90 = sphi 0, %s88
    %s91 = sphi 0, %s90
    %s105 = sphi 0, %s91
    %s109 = sphi 0, %s109
    %s111 = sphi 0, %s109
    %s112 = sphi 0, %s111
    %s126 = sphi 0, %s112
    %s130 = sphi 0, %s130
    %s132 = sphi 0, %s130
    %s133 = sphi 0, %s132
    %s147 = sphi 0, %s133
    %s153 = sphi 0, %s155
    %s156 = sphi 0, %s153
    %s157 = sphi 0, %s156
    %s173 = sphi 0, %s157
  $region4: #{maxpool_block_forward.1} parent=0 // loop_header_branch
    %15 = sbr.rel (%p13) target = $region8
  $region5: #{maxpool_block_forward.1} parent=0 // loop_body
    %s17 = ssub.s32 %s12, 1
    %s18 = ssub.s32 %s12, 2
    %s19 = sadd.s32 %s12, 1
    %s20 = ssub.s32 %s12, %s19
    %p21 = scmp.eq.s32.totalorder %s20, 0
    %s23 = sadd.s32 %s22, 1
    %s24 = scalar_select %p21, %s22, %s23
    %p27 = pneg %p21
    %p28 = scmp.eq.s32.totalorder %s12, 1
    %p29 = por %p27, %p28
    %p30 = scmp.ne.s32.totalorder %s22, %s25
    %p31 = scmp.eq.s32.totalorder %s12, 0
    %p32 = por %p30, %p31
    %p33 = scmp.ne.s32.totalorder %s22, %s25
    %p34 = scmp.eq.s32.totalorder %s17, 1
    %p35 = por %p33, %p34
    %p36 = scmp.ne.s32.totalorder %s25, %s26
    %p37 = scmp.eq.s32.totalorder %s17, 0
    %p38 = por %p36, %p37
    %p39 = scmp.ne.s32.totalorder %s25, %s26
    %p40 = scmp.eq.s32.totalorder %s18, 1
    %p41 = por %p39, %p40
    %p43 = scmp.ne.s32.totalorder %s26, %s42
    %p44 = scmp.eq.s32.totalorder %s18, 0
    %p45 = por %p43, %p44
    %s47 = sadd.s32 %s46, 1
    %p50 = scmp.eq.s32.totalorder %s12, 1
    %p51 = scmp.ne.s32.totalorder %s46, %s48
    %p52 = scmp.eq.s32.totalorder %s12, 0
    %p53 = por %p51, %p52
    %p54 = scmp.ne.s32.totalorder %s46, %s48
    %p55 = scmp.eq.s32.totalorder %s17, 1
    %p56 = por %p54, %p55
    %p57 = scmp.ne.s32.totalorder %s48, %s49
    %p58 = scmp.eq.s32.totalorder %s17, 0
    %p59 = por %p57, %p58
    %p60 = scmp.ne.s32.totalorder %s48, %s49
    %p61 = scmp.eq.s32.totalorder %s18, 1
    %p62 = por %p60, %p61
    %p64 = scmp.ne.s32.totalorder %s49, %s63
    %p65 = scmp.eq.s32.totalorder %s18, 0
    %p66 = por %p64, %p65
    %s68 = sadd.s32 %s67, 1
    %p71 = scmp.eq.s32.totalorder %s12, 1
    %p72 = scmp.ne.s32.totalorder %s67, %s69
    %p73 = scmp.eq.s32.totalorder %s12, 0
    %p74 = por %p72, %p73
    %p75 = scmp.ne.s32.totalorder %s67, %s69
    %p76 = scmp.eq.s32.totalorder %s17, 1
    %p77 = por %p75, %p76
    %p78 = scmp.ne.s32.totalorder %s69, %s70
    %p79 = scmp.eq.s32.totalorder %s17, 0
    %p80 = por %p78, %p79
    %p81 = scmp.ne.s32.totalorder %s69, %s70
    %p82 = scmp.eq.s32.totalorder %s18, 1
    %p83 = por %p81, %p82
    %p85 = scmp.ne.s32.totalorder %s70, %s84
    %p86 = scmp.eq.s32.totalorder %s18, 0
    %p87 = por %p85, %p86
    %s89 = sadd.s32 %s88, 1
    %p92 = scmp.eq.s32.totalorder %s12, 1
    %p93 = scmp.ne.s32.totalorder %s88, %s90
    %p94 = scmp.eq.s32.totalorder %s12, 0
    %p95 = por %p93, %p94
    %p96 = scmp.ne.s32.totalorder %s88, %s90
    %p97 = scmp.eq.s32.totalorder %s17, 1
    %p98 = por %p96, %p97
    %p99 = scmp.ne.s32.totalorder %s90, %s91
    %p100 = scmp.eq.s32.totalorder %s17, 0
    %p101 = por %p99, %p100
    %p102 = scmp.ne.s32.totalorder %s90, %s91
    %p103 = scmp.eq.s32.totalorder %s18, 1
    %p104 = por %p102, %p103
    %p106 = scmp.ne.s32.totalorder %s91, %s105
    %p107 = scmp.eq.s32.totalorder %s18, 0
    %p108 = por %p106, %p107
    %s110 = sadd.s32 %s109, 1
    %p113 = scmp.eq.s32.totalorder %s12, 1
    %p114 = scmp.ne.s32.totalorder %s109, %s111
    %p115 = scmp.eq.s32.totalorder %s12, 0
    %p116 = por %p114, %p115
    %p117 = scmp.ne.s32.totalorder %s109, %s111
    %p118 = scmp.eq.s32.totalorder %s17, 1
    %p119 = por %p117, %p118
    %p120 = scmp.ne.s32.totalorder %s111, %s112
    %p121 = scmp.eq.s32.totalorder %s17, 0
    %p122 = por %p120, %p121
    %p123 = scmp.ne.s32.totalorder %s111, %s112
    %p124 = scmp.eq.s32.totalorder %s18, 1
    %p125 = por %p123, %p124
    %p127 = scmp.ne.s32.totalorder %s112, %s126
    %p128 = scmp.eq.s32.totalorder %s18, 0
    %p129 = por %p127, %p128
    %s131 = sadd.s32 %s130, 1
    %p134 = scmp.eq.s32.totalorder %s12, 1
    %p135 = scmp.ne.s32.totalorder %s130, %s132
    %p136 = scmp.eq.s32.totalorder %s12, 0
    %p137 = por %p135, %p136
    %p138 = scmp.ne.s32.totalorder %s130, %s132
    %p139 = scmp.eq.s32.totalorder %s17, 1
    %p140 = por %p138, %p139
    %p141 = scmp.ne.s32.totalorder %s132, %s133
    %p142 = scmp.eq.s32.totalorder %s17, 0
    %p143 = por %p141, %p142
    %p144 = scmp.ne.s32.totalorder %s132, %s133
    %p145 = scmp.eq.s32.totalorder %s18, 1
    %p146 = por %p144, %p145
    %p148 = scmp.ne.s32.totalorder %s133, %s147
    %p149 = scmp.eq.s32.totalorder %s18, 0
    %p150 = por %p148, %p149
    %s151 = ssub.s32 %s12, %s19
    %p152 = scmp.eq.s32.totalorder %s151, 0
    %s154 = sadd.s32 %s153, 1
    %s155 = scalar_select %p152, %s153, %s154
    %p158 = pneg %p152
    %p159 = scmp.eq.s32.totalorder %s12, 1
    %p160 = por %p158, %p159
    %p161 = scmp.ne.s32.totalorder %s153, %s156
    %p162 = scmp.eq.s32.totalorder %s12, 0
    %p163 = por %p161, %p162
    %p164 = scmp.ne.s32.totalorder %s153, %s156
    %p165 = scmp.eq.s32.totalorder %s17, 1
    %p166 = por %p164, %p165
    %p167 = scmp.ne.s32.totalorder %s156, %s157
    %p168 = scmp.eq.s32.totalorder %s17, 0
    %p169 = por %p167, %p168
    %p170 = scmp.ne.s32.totalorder %s156, %s157
    %p171 = scmp.eq.s32.totalorder %s18, 1
    %p172 = por %p170, %p171
    %p174 = scmp.ne.s32.totalorder %s157, %s173
    %p175 = scmp.eq.s32.totalorder %s18, 0
    %p176 = por %p174, %p175
    %p177 = scmp.le.s32.totalorder 1, %s12
    %p178 = scmp.lt.s32.totalorder %s12, 3
    %p179 = pnand %p177, %p178
    %p180 = pneg %p179
    // Predicated region
    $region9: #{maxpool_block_forward.1} parent=5 // pred_check
      _
    $region10: #{maxpool_block_forward.1} parent=5 // pred_check_branch
      %182 = sbr.rel (%p179) target = $region12
    $region11: #{maxpool_block_forward.1} parent=5 // pred_region
      %s183 = ssub.s32 %s12, 1
      // Predicated region
      $region13: #{maxpool_block_forward.1} parent=11 // pred_check
        %p184 = pneg %p59
      $region14: #{maxpool_block_forward.1} parent=11 // pred_check_branch
        %186 = sbr.rel (%p184) target = $region16
      $region15: #{maxpool_block_forward.1} parent=11 // pred_region
        _
      $region16: #{maxpool_block_forward.1} parent=11 // pred_fallthru
        _
      // Predicated region
      $region17: #{maxpool_block_forward.1} parent=11 // pred_check
        %p187 = pneg %p80
      $region18: #{maxpool_block_forward.1} parent=11 // pred_check_branch
        %189 = sbr.rel (%p187) target = $region20
      $region19: #{maxpool_block_forward.1} parent=11 // pred_region
        _
      $region20: #{maxpool_block_forward.1} parent=11 // pred_fallthru
        _
      // Predicated region
      $region21: #{maxpool_block_forward.1} parent=11 // pred_check
        %p190 = pneg %p101
      $region22: #{maxpool_block_forward.1} parent=11 // pred_check_branch
        %192 = sbr.rel (%p190) target = $region24
      $region23: #{maxpool_block_forward.1} parent=11 // pred_region
        _
      $region24: #{maxpool_block_forward.1} parent=11 // pred_fallthru
        _
      // Predicated region
      $region25: #{maxpool_block_forward.1} parent=11 // pred_check
        %p193 = pneg %p122
      $region26: #{maxpool_block_forward.1} parent=11 // pred_check_branch
        %195 = sbr.rel (%p193) target = $region28
      $region27: #{maxpool_block_forward.1} parent=11 // pred_region
        _
      $region28: #{maxpool_block_forward.1} parent=11 // pred_fallthru
        _
      // Predicated region
      $region29: #{maxpool_block_forward.1} parent=11 // pred_check
        %p196 = pneg %p143
      $region30: #{maxpool_block_forward.1} parent=11 // pred_check_branch
        %198 = sbr.rel (%p196) target = $region32
      $region31: #{maxpool_block_forward.1} parent=11 // pred_region
        _
      $region32: #{maxpool_block_forward.1} parent=11 // pred_fallthru
        _
    $region12: #{maxpool_block_forward.1} parent=5 // pred_fallthru
      _
    %p199 = scmp.lt.s32.totalorder %s12, 2
    // Predicated region
    $region33: #{maxpool_block_forward.1} parent=5 // pred_check
      %p200 = pneg %p199
    $region34: #{maxpool_block_forward.1} parent=5 // pred_check_branch
      %202 = sbr.rel (%p200) target = $region36
    $region35: #{maxpool_block_forward.1} parent=5 // pred_region
      // Predicated region
      $region37: #{maxpool_block_forward.1} parent=35 // pred_check
        %p203 = pneg %p32
      $region38: #{maxpool_block_forward.1} parent=35 // pred_check_branch
        %205 = sbr.rel (%p203) target = $region40
      $region39: #{maxpool_block_forward.1} parent=35 // pred_region
        %p206 = scmp.lt.s32.totalorder %s12, 1
        %s207 = scalar_select %p206, %s12, 1
        %s208 = smul.addr %s207, 72
        %s209 = smul.addr %s208, 4
        %s210 = scalar_lea.vmem %s0, %s209
      $region40: #{maxpool_block_forward.1} parent=35 // pred_fallthru
        _
    $region36: #{maxpool_block_forward.1} parent=5 // pred_fallthru
      _
    %p211 = scmp.le.s32.totalorder 1, %s12
    %p212 = scmp.lt.s32.totalorder %s12, 3
    %p213 = pnand %p211, %p212
    %p214 = pneg %p213
    // Predicated region
    $region41: #{maxpool_block_forward.1} parent=5 // pred_check
      _
    $region42: #{maxpool_block_forward.1} parent=5 // pred_check_branch
      %216 = sbr.rel (%p213) target = $region44
    $region43: #{maxpool_block_forward.1} parent=5 // pred_region
      %s217 = ssub.s32 %s12, 1
      %p218 = scmp.lt.s32.totalorder %s17, 1
      %s219 = scalar_select %p218, %s17, 1
      %s220 = smul.addr %s219, 72
      %s221 = smul.addr %s220, 4
      %s222 = scalar_lea.vmem %s0, %s221
      %p223 = pneg %p38
      %p224 = pneg %p35
      %p225 = pneg %p59
      %p226 = pneg %p56
      %p227 = pneg %p80
      %p228 = pneg %p77
      %p229 = pneg %p101
      %p230 = pneg %p98
      %p231 = pneg %p122
      %p232 = pneg %p119
      %p233 = pneg %p143
      %p234 = pneg %p140
      %p235 = pneg %p169
      %p236 = pneg %p166
      %p237 = scmp.lt.s32.totalorder %s17, 1
      %s238 = scalar_select %p237, %s17, 1
      %s239 = smul.addr %s238, 32
      %s240 = smul.addr %s239, 8
      %s241 = scalar_lea.vmem %s6, %s240
      %p242 = scmp.lt.s32.totalorder %s17, 1
      %s243 = scalar_select %p242, %s17, 1
      %s244 = smul.addr %s243, 72
      %s245 = smul.addr %s244, 4
      %s246 = scalar_lea.vmem %s0, %s245
      %p247 = scmp.lt.s32.totalorder %s17, 1
      %s248 = scalar_select %p247, %s17, 1
      %s249 = smul.addr %s248, 32
      %s250 = smul.addr %s249, 8
      %s251 = scalar_lea.vmem %s6, %s250
      %v252 = vld [vmem:[%s246] sm:$0xf]
      %v253 = vld [vmem:[%s246 + $0x4] sm:$0xf]
      %v254 = vld [vmem:[%s246 + $0x8] sm:$0xf]
      %v255 = vld [vmem:[%s246 + $0xc] sm:$0xf]
      %v256 = vld [vmem:[%s246 + $0x10] sm:$0xf]
      %v257 = vld [vmem:[%s246 + $0x14] sm:$0xf]
      %v258 = vld [vmem:[%s246 + $0x18] sm:$0xf]
      %v259 = vld [vmem:[%s246 + $0x1c] sm:$0xf]
      %v260 = vld [vmem:[%s246 + $0x20] sm:$0xf]
      %v261 = vld [vmem:[%s246 + $0x24] sm:$0xf]
      %v262 = vld [vmem:[%s246 + $0x28] sm:$0xf]
      %v263 = vld [vmem:[%s246 + $0x2c] sm:$0xf]
      %v264 = vld [vmem:[%s246 + $0x30] sm:$0xf]
      %v265 = vld [vmem:[%s246 + $0x34] sm:$0xf]
      %v266 = vld [vmem:[%s246 + $0x38] sm:$0xf]
      %v267 = vld [vmem:[%s246 + $0x3c] sm:$0xf]
      %v268 = vld [vmem:[%s246 + $0x40] sm:$0xf]
      %v269 = vld [vmem:[%s246 + $0x44] sm:$0xf]
      %v270 = vld [vmem:[%s246 + $0x48] sm:$0xf]
      %v271 = vld [vmem:[%s246 + $0x4c] sm:$0xf]
      %v272 = vld [vmem:[%s246 + $0x50] sm:$0xf]
      %v273 = vld [vmem:[%s246 + $0x54] sm:$0xf]
      %v274 = vld [vmem:[%s246 + $0x58] sm:$0xf]
      %v275 = vld [vmem:[%s246 + $0x5c] sm:$0xf]
      %v276 = vld [vmem:[%s246 + $0x60] sm:$0xf]
      %v277 = vld [vmem:[%s246 + $0x64] sm:$0xf]
      %v278 = vld [vmem:[%s246 + $0x68] sm:$0xf]
      %v279 = vld [vmem:[%s246 + $0x6c] sm:$0xf]
      %v280 = vld [vmem:[%s246 + $0x70] sm:$0xf]
      %v281 = vld [vmem:[%s246 + $0x74] sm:$0xf]
      %v282 = vld [vmem:[%s246 + $0x78] sm:$0xf]
      %v283 = vld [vmem:[%s246 + $0x7c] sm:$0xf]
      %v284 = vld [vmem:[%s246 + $0x80] sm:$0xf]
      %v285 = vld [vmem:[%s246 + $0x84] sm:$0xf]
      %v286 = vld [vmem:[%s246 + $0x88] sm:$0xf]
      %v287 = vld [vmem:[%s246 + $0x8c] sm:$0xf]
      %v288 = vld [vmem:[%s246 + $0x90] sm:$0xf]
      %v289 = vld [vmem:[%s246 + $0x94] sm:$0xf]
      %v290 = vld [vmem:[%s246 + $0x98] sm:$0xf]
      %v291 = vld [vmem:[%s246 + $0x9c] sm:$0xf]
      %v292 = vld [vmem:[%s246 + $0xa0] sm:$0xf]
      %v293 = vld [vmem:[%s246 + $0xa4] sm:$0xf]
      %v294 = vld [vmem:[%s246 + $0xa8] sm:$0xf]
      %v295 = vld [vmem:[%s246 + $0xac] sm:$0xf]
      %v296 = vld [vmem:[%s246 + $0xb0] sm:$0xf]
      %v297 = vld [vmem:[%s246 + $0xb4] sm:$0xf]
      %v298 = vld [vmem:[%s246 + $0xb8] sm:$0xf]
      %v299 = vld [vmem:[%s246 + $0xbc] sm:$0xf]
      %v300 = vld [vmem:[%s246 + $0xc0] sm:$0xf]
      %v301 = vld [vmem:[%s246 + $0xc4] sm:$0xf]
      %v302 = vld [vmem:[%s246 + $0xc8] sm:$0xf]
      %v303 = vld [vmem:[%s246 + $0xcc] sm:$0xf]
      %v304 = vld [vmem:[%s246 + $0xd0] sm:$0xf]
      %v305 = vld [vmem:[%s246 + $0xd4] sm:$0xf]
      %v306 = vld [vmem:[%s246 + $0xd8] sm:$0xf]
      %v307 = vld [vmem:[%s246 + $0xdc] sm:$0xf]
      %v308 = vld [vmem:[%s246 + $0xe0] sm:$0xf]
      %v309 = vld [vmem:[%s246 + $0xe4] sm:$0xf]
      %v310 = vld [vmem:[%s246 + $0xe8] sm:$0xf]
      %v311 = vld [vmem:[%s246 + $0xec] sm:$0xf]
      %v312 = vld [vmem:[%s246 + $0xf0] sm:$0xf]
      %v313 = vld [vmem:[%s246 + $0xf4] sm:$0xf]
      %v314 = vld [vmem:[%s246 + $0xf8] sm:$0xf]
      %v315 = vld [vmem:[%s246 + $0xfc] sm:$0xf]
      %v316 = vld [vmem:[%s246 + $0x100] sm:$0xf]
      %v317 = vld [vmem:[%s246 + $0x104] sm:$0xf]
      %v318 = vld [vmem:[%s246 + $0x108] sm:$0xf]
      %v319 = vld [vmem:[%s246 + $0x10c] sm:$0xf]
      %v320 = vld [vmem:[%s246 + $0x110] sm:$0xf]
      %v321 = vld [vmem:[%s246 + $0x114] sm:$0xf]
      %v322 = vld [vmem:[%s246 + $0x118] sm:$0xf]
      %v323 = vld [vmem:[%s246 + $0x11c] sm:$0xf]
      %v324 = vld [vmem:[%s1] sm:$0xf]
      %v325 = vld [vmem:[%s1 + $0x4] sm:$0xf]
      %v326 = vld [vmem:[%s1 + $0x8] sm:$0xf]
      %v327 = vld [vmem:[%s1 + $0xc] sm:$0xf]
      %v328 = vld [vmem:[%s1 + $0x10] sm:$0xf]
      %v329 = vld [vmem:[%s1 + $0x14] sm:$0xf]
      %v330 = vld [vmem:[%s1 + $0x18] sm:$0xf]
      %v331 = vld [vmem:[%s1 + $0x1c] sm:$0xf]
      %v332 = vld [vmem:[%s1 + $0x20] sm:$0xf]
      %v333 = vld [vmem:[%s1 + $0x24] sm:$0xf]
      %v334 = vld [vmem:[%s1 + $0x28] sm:$0xf]
      %v335 = vld [vmem:[%s1 + $0x2c] sm:$0xf]
      %v336 = vld [vmem:[%s1 + $0x30] sm:$0xf]
      %v337 = vld [vmem:[%s1 + $0x34] sm:$0xf]
      %v338 = vld [vmem:[%s1 + $0x38] sm:$0xf]
      %v339 = vld [vmem:[%s1 + $0x3c] sm:$0xf]
      %v340 = vld [vmem:[%s2] sm:$0x1]
      %v342 = vperm.slane %v340, 0
      %v416 = vunpack.c.l.b16 %v252
      %v417 = vunpack.c.l.b16 %v253
      %v418 = vunpack.c.l.b16 %v254
      %v419 = vunpack.c.l.b16 %v255
      %v420 = vunpack.c.l.b16 %v256
      %v421 = vunpack.c.l.b16 %v257
      %v422 = vunpack.c.l.b16 %v258
      %v423 = vunpack.c.l.b16 %v259
      %v424 = vunpack.c.l.b16 %v260
      %v425 = vunpack.c.l.b16 %v261
      %v426 = vunpack.c.l.b16 %v262
      %v427 = vunpack.c.l.b16 %v263
      %v428 = vunpack.c.l.b16 %v264
      %v429 = vunpack.c.l.b16 %v265
      %v430 = vunpack.c.l.b16 %v266
      %v431 = vunpack.c.l.b16 %v267
      %v432 = vunpack.c.l.b16 %v268
      %v433 = vunpack.c.l.b16 %v269
      %v434 = vunpack.c.l.b16 %v270
      %v435 = vunpack.c.l.b16 %v271
      %v436 = vunpack.c.l.b16 %v272
      %v437 = vunpack.c.l.b16 %v273
      %v438 = vunpack.c.l.b16 %v274
      %v439 = vunpack.c.l.b16 %v275
      %v440 = vunpack.c.l.b16 %v276
      %v441 = vunpack.c.l.b16 %v277
      %v442 = vunpack.c.l.b16 %v278
      %v443 = vunpack.c.l.b16 %v279
      %v444 = vunpack.c.l.b16 %v280
      %v445 = vunpack.c.l.b16 %v281
      %v446 = vunpack.c.l.b16 %v282
      %v447 = vunpack.c.l.b16 %v283
      %v448 = vunpack.c.l.b16 %v284
      %v449 = vunpack.c.l.b16 %v285
      %v450 = vunpack.c.l.b16 %v286
      %v451 = vunpack.c.l.b16 %v287
      %v452 = vunpack.c.l.b16 %v288
      %v453 = vunpack.c.l.b16 %v289
      %v454 = vunpack.c.l.b16 %v290
      %v455 = vunpack.c.l.b16 %v291
      %v456 = vunpack.c.l.b16 %v292
      %v457 = vunpack.c.l.b16 %v293
      %v458 = vunpack.c.l.b16 %v294
      %v459 = vunpack.c.l.b16 %v295
      %v460 = vunpack.c.l.b16 %v296
      %v461 = vunpack.c.l.b16 %v297
      %v462 = vunpack.c.l.b16 %v298
      %v463 = vunpack.c.l.b16 %v299
      %v464 = vunpack.c.l.b16 %v300
      %v465 = vunpack.c.l.b16 %v301
      %v466 = vunpack.c.l.b16 %v302
      %v467 = vunpack.c.l.b16 %v303
      %v468 = vunpack.c.l.b16 %v304
      %v469 = vunpack.c.l.b16 %v305
      %v470 = vunpack.c.l.b16 %v306
      %v471 = vunpack.c.l.b16 %v307
      %v472 = vunpack.c.l.b16 %v308
      %v473 = vunpack.c.l.b16 %v309
      %v474 = vunpack.c.l.b16 %v310
      %v475 = vunpack.c.l.b16 %v311
      %v476 = vunpack.c.l.b16 %v312
      %v477 = vunpack.c.l.b16 %v313
      %v478 = vunpack.c.l.b16 %v314
      %v479 = vunpack.c.l.b16 %v315
      %v480 = vunpack.c.l.b16 %v316
      %v481 = vunpack.c.l.b16 %v317
      %v482 = vunpack.c.l.b16 %v318
      %v483 = vunpack.c.l.b16 %v319
      %v484 = vunpack.c.l.b16 %v320
      %v485 = vunpack.c.l.b16 %v321
      %v486 = vunpack.c.l.b16 %v322
      %v487 = vunpack.c.l.b16 %v323
      %v488 = vpack.c.b16 %v417, %v416
      %v489 = vpack.c.b16 %v419, %v418
      %v490 = vpack.c.b16 %v421, %v420
      %v491 = vpack.c.b16 %v423, %v422
      %v492 = vpack.c.b16 %v425, %v424
      %v493 = vpack.c.b16 %v427, %v426
      %v494 = vpack.c.b16 %v429, %v428
      %v495 = vpack.c.b16 %v431, %v430
      %v496 = vpack.c.b16 %v433, %v432
      %v497 = vpack.c.b16 %v435, %v434
      %v498 = vpack.c.b16 %v437, %v436
      %v499 = vpack.c.b16 %v439, %v438
      %v500 = vpack.c.b16 %v441, %v440
      %v501 = vpack.c.b16 %v443, %v442
      %v502 = vpack.c.b16 %v445, %v444
      %v503 = vpack.c.b16 %v447, %v446
      %v504 = vpack.c.b16 %v449, %v448
      %v505 = vpack.c.b16 %v451, %v450
      %v506 = vpack.c.b16 %v453, %v452
      %v507 = vpack.c.b16 %v455, %v454
      %v508 = vpack.c.b16 %v457, %v456
      %v509 = vpack.c.b16 %v459, %v458
      %v510 = vpack.c.b16 %v461, %v460
      %v511 = vpack.c.b16 %v463, %v462
      %v512 = vpack.c.b16 %v465, %v464
      %v513 = vpack.c.b16 %v467, %v466
      %v514 = vpack.c.b16 %v469, %v468
      %v515 = vpack.c.b16 %v471, %v470
      %v516 = vpack.c.b16 %v473, %v472
      %v517 = vpack.c.b16 %v475, %v474
      %v518 = vpack.c.b16 %v477, %v476
      %v519 = vpack.c.b16 %v479, %v478
      %v520 = vpack.c.b16 %v481, %v480
      %v521 = vpack.c.b16 %v483, %v482
      %v522 = vpack.c.b16 %v485, %v484
      %v523 = vpack.c.b16 %v487, %v486
      %v576 = vunpack.c.l.b16 %v324
      %v577 = vunpack.c.l.b16 %v325
      %v578 = vunpack.c.l.b16 %v326
      %v579 = vunpack.c.l.b16 %v327
      %v580 = vunpack.c.l.b16 %v328
      %v581 = vunpack.c.l.b16 %v329
      %v582 = vunpack.c.l.b16 %v330
      %v583 = vunpack.c.l.b16 %v331
      %v584 = vunpack.c.l.b16 %v332
      %v585 = vunpack.c.l.b16 %v333
      %v586 = vunpack.c.l.b16 %v334
      %v587 = vunpack.c.l.b16 %v335
      %v588 = vunpack.c.l.b16 %v336
      %v589 = vunpack.c.l.b16 %v337
      %v590 = vunpack.c.l.b16 %v338
      %v591 = vunpack.c.l.b16 %v339
      %v592 = vpack.c.b16 %v577, %v576
      %v593 = vpack.c.b16 %v579, %v578
      %v594 = vpack.c.b16 %v581, %v580
      %v595 = vpack.c.b16 %v583, %v582
      %v596 = vpack.c.b16 %v585, %v584
      %v597 = vpack.c.b16 %v587, %v586
      %v598 = vpack.c.b16 %v589, %v588
      %v599 = vpack.c.b16 %v591, %v590
      %608 = vmatpush.bf16.msra.mxu0 %v599
      %609 = vmatpush.bf16.msra.mxu0 %v598
      %610 = vmatpush.bf16.msra.mxu0 %v597
      %611 = vmatpush.bf16.msra.mxu0 %v596
      %612 = vmatpush.bf16.msra.mxu0 %v595
      %613 = vmatpush.bf16.msra.mxu0 %v594
      %614 = vmatpush.bf16.msra.mxu0 %v593
      %615 = vmatpush.bf16.msra.mxu0 %v592
      %616 = vmatmul.bf16.gmra.mxu0 %v488
      %v617 = vpop.f32.mrf.mxu0
      %v618 = vadd.f32 %v342, %v617
      %v619 = vpop.f32.mrf.mxu0
      %v620 = vadd.f32 %v342, %v619
      %621 = vmatmul.bf16.gmra.mxu0 %v489
      %v622 = vpop.f32.mrf.mxu0
      %v623 = vadd.f32 %v342, %v622
      %v624 = vpop.f32.mrf.mxu0
      %v625 = vadd.f32 %v342, %v624
      %626 = vmatmul.bf16.gmra.mxu0 %v490
      %v627 = vpop.f32.mrf.mxu0
      %v628 = vadd.f32 %v342, %v627
      %v629 = vpop.f32.mrf.mxu0
      %v630 = vadd.f32 %v342, %v629
      %631 = vmatmul.bf16.gmra.mxu0 %v491
      %v632 = vpop.f32.mrf.mxu0
      %v633 = vadd.f32 %v342, %v632
      %v634 = vpop.f32.mrf.mxu0
      %v635 = vadd.f32 %v342, %v634
      %636 = vmatmul.bf16.gmra.mxu0 %v492
      %v637 = vpop.f32.mrf.mxu0
      %v638 = vadd.f32 %v342, %v637
      %v639 = vpop.f32.mrf.mxu0
      %v640 = vadd.f32 %v342, %v639
      %641 = vmatmul.bf16.gmra.mxu0 %v493
      %v642 = vpop.f32.mrf.mxu0
      %v643 = vadd.f32 %v342, %v642
      %v644 = vpop.f32.mrf.mxu0
      %v645 = vadd.f32 %v342, %v644
      %646 = vmatmul.bf16.gmra.mxu0 %v494
      %v647 = vpop.f32.mrf.mxu0
      %v648 = vadd.f32 %v342, %v647
      %v649 = vpop.f32.mrf.mxu0
      %v650 = vadd.f32 %v342, %v649
      %651 = vmatmul.bf16.gmra.mxu0 %v495
      %v652 = vpop.f32.mrf.mxu0
      %v653 = vadd.f32 %v342, %v652
      %v654 = vpop.f32.mrf.mxu0
      %v655 = vadd.f32 %v342, %v654
      %656 = vmatmul.bf16.gmra.mxu0 %v496
      %v657 = vpop.f32.mrf.mxu0
      %v658 = vadd.f32 %v342, %v657
      %v659 = vpop.f32.mrf.mxu0
      %v660 = vadd.f32 %v342, %v659
      %661 = vmatmul.bf16.gmra.mxu0 %v497
      %v662 = vpop.f32.mrf.mxu0
      %v663 = vadd.f32 %v342, %v662
      %v664 = vpop.f32.mrf.mxu0
      %v665 = vadd.f32 %v342, %v664
      %666 = vmatmul.bf16.gmra.mxu0 %v498
      %v667 = vpop.f32.mrf.mxu0
      %v668 = vadd.f32 %v342, %v667
      %v669 = vpop.f32.mrf.mxu0
      %v670 = vadd.f32 %v342, %v669
      %671 = vmatmul.bf16.gmra.mxu0 %v499
      %v672 = vpop.f32.mrf.mxu0
      %v673 = vadd.f32 %v342, %v672
      %v674 = vpop.f32.mrf.mxu0
      %v675 = vadd.f32 %v342, %v674
      %676 = vmatmul.bf16.gmra.mxu0 %v500
      %v677 = vpop.f32.mrf.mxu0
      %v678 = vadd.f32 %v342, %v677
      %v679 = vpop.f32.mrf.mxu0
      %v680 = vadd.f32 %v342, %v679
      %681 = vmatmul.bf16.gmra.mxu0 %v501
      %v682 = vpop.f32.mrf.mxu0
      %v683 = vadd.f32 %v342, %v682
      %v684 = vpop.f32.mrf.mxu0
      %v685 = vadd.f32 %v342, %v684
      %686 = vmatmul.bf16.gmra.mxu0 %v502
      %v687 = vpop.f32.mrf.mxu0
      %v688 = vadd.f32 %v342, %v687
      %v689 = vpop.f32.mrf.mxu0
      %v690 = vadd.f32 %v342, %v689
      %691 = vmatmul.bf16.gmra.mxu0 %v503
      %v692 = vpop.f32.mrf.mxu0
      %v693 = vadd.f32 %v342, %v692
      %v694 = vpop.f32.mrf.mxu0
      %v695 = vadd.f32 %v342, %v694
      %696 = vmatmul.bf16.gmra.mxu0 %v504
      %v697 = vpop.f32.mrf.mxu0
      %v698 = vadd.f32 %v342, %v697
      %v699 = vpop.f32.mrf.mxu0
      %v700 = vadd.f32 %v342, %v699
      %701 = vmatmul.bf16.gmra.mxu0 %v505
      %v702 = vpop.f32.mrf.mxu0
      %v703 = vadd.f32 %v342, %v702
      %v704 = vpop.f32.mrf.mxu0
      %v705 = vadd.f32 %v342, %v704
      %706 = vmatmul.bf16.gmra.mxu0 %v506
      %v707 = vpop.f32.mrf.mxu0
      %v708 = vadd.f32 %v342, %v707
      %v709 = vpop.f32.mrf.mxu0
      %v710 = vadd.f32 %v342, %v709
      %711 = vmatmul.bf16.gmra.mxu0 %v507
      %v712 = vpop.f32.mrf.mxu0
      %v713 = vadd.f32 %v342, %v712
      %v714 = vpop.f32.mrf.mxu0
      %v715 = vadd.f32 %v342, %v714
      %716 = vmatmul.bf16.gmra.mxu0 %v508
      %v717 = vpop.f32.mrf.mxu0
      %v718 = vadd.f32 %v342, %v717
      %v719 = vpop.f32.mrf.mxu0
      %v720 = vadd.f32 %v342, %v719
      %721 = vmatmul.bf16.gmra.mxu0 %v509
      %v722 = vpop.f32.mrf.mxu0
      %v723 = vadd.f32 %v342, %v722
      %v724 = vpop.f32.mrf.mxu0
      %v725 = vadd.f32 %v342, %v724
      %726 = vmatmul.bf16.gmra.mxu0 %v510
      %v727 = vpop.f32.mrf.mxu0
      %v728 = vadd.f32 %v342, %v727
      %v729 = vpop.f32.mrf.mxu0
      %v730 = vadd.f32 %v342, %v729
      %731 = vmatmul.bf16.gmra.mxu0 %v511
      %v732 = vpop.f32.mrf.mxu0
      %v733 = vadd.f32 %v342, %v732
      %v734 = vpop.f32.mrf.mxu0
      %v735 = vadd.f32 %v342, %v734
      %736 = vmatmul.bf16.gmra.mxu0 %v512
      %v737 = vpop.f32.mrf.mxu0
      %v738 = vadd.f32 %v342, %v737
      %v739 = vpop.f32.mrf.mxu0
      %v740 = vadd.f32 %v342, %v739
      %741 = vmatmul.bf16.gmra.mxu0 %v513
      %v742 = vpop.f32.mrf.mxu0
      %v743 = vadd.f32 %v342, %v742
      %v744 = vpop.f32.mrf.mxu0
      %v745 = vadd.f32 %v342, %v744
      %746 = vmatmul.bf16.gmra.mxu0 %v514
      %v747 = vpop.f32.mrf.mxu0
      %v748 = vadd.f32 %v342, %v747
      %v749 = vpop.f32.mrf.mxu0
      %v750 = vadd.f32 %v342, %v749
      %751 = vmatmul.bf16.gmra.mxu0 %v515
      %v752 = vpop.f32.mrf.mxu0
      %v753 = vadd.f32 %v342, %v752
      %v754 = vpop.f32.mrf.mxu0
      %v755 = vadd.f32 %v342, %v754
      %756 = vmatmul.bf16.gmra.mxu0 %v516
      %v757 = vpop.f32.mrf.mxu0
      %v758 = vadd.f32 %v342, %v757
      %v759 = vpop.f32.mrf.mxu0
      %v760 = vadd.f32 %v342, %v759
      %761 = vmatmul.bf16.gmra.mxu0 %v517
      %v762 = vpop.f32.mrf.mxu0
      %v763 = vadd.f32 %v342, %v762
      %v764 = vpop.f32.mrf.mxu0
      %v765 = vadd.f32 %v342, %v764
      %766 = vmatmul.bf16.gmra.mxu0 %v518
      %v767 = vpop.f32.mrf.mxu0
      %v768 = vadd.f32 %v342, %v767
      %v769 = vpop.f32.mrf.mxu0
      %v770 = vadd.f32 %v342, %v769
      %771 = vmatmul.bf16.gmra.mxu0 %v519
      %v772 = vpop.f32.mrf.mxu0
      %v773 = vadd.f32 %v342, %v772
      %v774 = vpop.f32.mrf.mxu0
      %v775 = vadd.f32 %v342, %v774
      %776 = vmatmul.bf16.gmra.mxu0 %v520
      %v777 = vpop.f32.mrf.mxu0
      %v778 = vadd.f32 %v342, %v777
      %v779 = vpop.f32.mrf.mxu0
      %v780 = vadd.f32 %v342, %v779
      %781 = vmatmul.bf16.gmra.mxu0 %v521
      %v782 = vpop.f32.mrf.mxu0
      %v783 = vadd.f32 %v342, %v782
      %v784 = vpop.f32.mrf.mxu0
      %v785 = vadd.f32 %v342, %v784
      %786 = vmatmul.bf16.gmra.mxu0 %v522
      %v787 = vpop.f32.mrf.mxu0
      %v788 = vadd.f32 %v342, %v787
      %v789 = vpop.f32.mrf.mxu0
      %v790 = vadd.f32 %v342, %v789
      %791 = vmatmul.bf16.gmra.mxu0 %v523
      %v792 = vpop.f32.mrf.mxu0
      %v793 = vadd.f32 %v342, %v792
      %v794 = vpop.f32.mrf.mxu0
      %v795 = vadd.f32 %v342, %v794
      %796 = vdwg.mxu0
      %v797 = vmax.f32 %v618, 0.0
      %v798 = vmax.f32 %v620, 0.0
      %v799 = vmax.f32 %v623, 0.0
      %v800 = vmax.f32 %v625, 0.0
      %v801 = vmax.f32 %v628, 0.0
      %v802 = vmax.f32 %v630, 0.0
      %v803 = vmax.f32 %v633, 0.0
      %v804 = vmax.f32 %v635, 0.0
      %v805 = vmax.f32 %v638, 0.0
      %v806 = vmax.f32 %v640, 0.0
      %v807 = vmax.f32 %v643, 0.0
      %v808 = vmax.f32 %v645, 0.0
      %v809 = vmax.f32 %v648, 0.0
      %v810 = vmax.f32 %v650, 0.0
      %v811 = vmax.f32 %v653, 0.0
      %v812 = vmax.f32 %v655, 0.0
      %v813 = vmax.f32 %v658, 0.0
      %v814 = vmax.f32 %v660, 0.0
      %v815 = vmax.f32 %v663, 0.0
      %v816 = vmax.f32 %v665, 0.0
      %v817 = vmax.f32 %v668, 0.0
      %v818 = vmax.f32 %v670, 0.0
      %v819 = vmax.f32 %v673, 0.0
      %v820 = vmax.f32 %v675, 0.0
      %v821 = vmax.f32 %v678, 0.0
      %v822 = vmax.f32 %v680, 0.0
      %v823 = vmax.f32 %v683, 0.0
      %v824 = vmax.f32 %v685, 0.0
      %v825 = vmax.f32 %v688, 0.0
      %v826 = vmax.f32 %v690, 0.0
      %v827 = vmax.f32 %v693, 0.0
      %v828 = vmax.f32 %v695, 0.0
      %v829 = vmax.f32 %v698, 0.0
      %v830 = vmax.f32 %v700, 0.0
      %v831 = vmax.f32 %v703, 0.0
      %v832 = vmax.f32 %v705, 0.0
      %v833 = vmax.f32 %v708, 0.0
      %v834 = vmax.f32 %v710, 0.0
      %v835 = vmax.f32 %v713, 0.0
      %v836 = vmax.f32 %v715, 0.0
      %v837 = vmax.f32 %v718, 0.0
      %v838 = vmax.f32 %v720, 0.0
      %v839 = vmax.f32 %v723, 0.0
      %v840 = vmax.f32 %v725, 0.0
      %v841 = vmax.f32 %v728, 0.0
      %v842 = vmax.f32 %v730, 0.0
      %v843 = vmax.f32 %v733, 0.0
      %v844 = vmax.f32 %v735, 0.0
      %v845 = vmax.f32 %v738, 0.0
      %v846 = vmax.f32 %v740, 0.0
      %v847 = vmax.f32 %v743, 0.0
      %v848 = vmax.f32 %v745, 0.0
      %v849 = vmax.f32 %v748, 0.0
      %v850 = vmax.f32 %v750, 0.0
      %v851 = vmax.f32 %v753, 0.0
      %v852 = vmax.f32 %v755, 0.0
      %v853 = vmax.f32 %v758, 0.0
      %v854 = vmax.f32 %v760, 0.0
      %v855 = vmax.f32 %v763, 0.0
      %v856 = vmax.f32 %v765, 0.0
      %v857 = vmax.f32 %v768, 0.0
      %v858 = vmax.f32 %v770, 0.0
      %v859 = vmax.f32 %v773, 0.0
      %v860 = vmax.f32 %v775, 0.0
      %v861 = vmax.f32 %v778, 0.0
      %v862 = vmax.f32 %v780, 0.0
      %v863 = vmax.f32 %v783, 0.0
      %v864 = vmax.f32 %v785, 0.0
      %v865 = vmax.f32 %v788, 0.0
      %v866 = vmax.f32 %v790, 0.0
      %v867 = vmax.f32 %v793, 0.0
      %v868 = vmax.f32 %v795, 0.0
      %v869 = vld [vmem:[%s5] sm:$0xff]
      %v870 = vld [vmem:[%s5 + $0x8] sm:$0xff]
      %v871 = vld [vmem:[%s5 + $0x10] sm:$0xff]
      %v872 = vld [vmem:[%s5 + $0x18] sm:$0xff]
      %v873 = vld [vmem:[%s5 + $0x20] sm:$0xff]
      %v874 = vld [vmem:[%s5 + $0x28] sm:$0xff]
      %v875 = vld [vmem:[%s5 + $0x30] sm:$0xff]
      %v876 = vld [vmem:[%s5 + $0x38] sm:$0xff]
      %v877 = vld [vmem:[%s5 + $0x40] sm:$0xff]
      %v878 = vld [vmem:[%s5 + $0x48] sm:$0xff]
      %v879 = vld [vmem:[%s5 + $0x50] sm:$0xff]
      %v880 = vld [vmem:[%s5 + $0x58] sm:$0xff]
      %v881 = vld [vmem:[%s5 + $0x60] sm:$0xff]
      %v882 = vld [vmem:[%s5 + $0x68] sm:$0xff]
      %v883 = vld [vmem:[%s5 + $0x70] sm:$0xff]
      %v884 = vld [vmem:[%s5 + $0x78] sm:$0xff]
      %v885 = vld [vmem:[%s5 + $0x80] sm:$0xff]
      %v886 = vld [vmem:[%s5 + $0x88] sm:$0xff]
      %v887 = vld [vmem:[%s5 + $0x90] sm:$0xff]
      %v888 = vld [vmem:[%s5 + $0x98] sm:$0xff]
      %v889 = vld [vmem:[%s5 + $0xa0] sm:$0xff]
      %v890 = vld [vmem:[%s5 + $0xa8] sm:$0xff]
      %v891 = vld [vmem:[%s5 + $0xb0] sm:$0xff]
      %v892 = vld [vmem:[%s5 + $0xb8] sm:$0xff]
      %v893 = vld [vmem:[%s5 + $0xc0] sm:$0xff]
      %v894 = vld [vmem:[%s5 + $0xc8] sm:$0xff]
      %v895 = vld [vmem:[%s5 + $0xd0] sm:$0xff]
      %v896 = vld [vmem:[%s5 + $0xd8] sm:$0xff]
      %v897 = vld [vmem:[%s5 + $0xe0] sm:$0xff]
      %v898 = vld [vmem:[%s5 + $0xe8] sm:$0xff]
      %v899 = vld [vmem:[%s5 + $0xf0] sm:$0xff]
      %v900 = vld [vmem:[%s5 + $0xf8] sm:$0xff]
      %v901 = vld [vmem:[%s5 + $0x100] sm:$0xff]
      %v902 = vld [vmem:[%s5 + $0x108] sm:$0xff]
      %v903 = vld [vmem:[%s5 + $0x110] sm:$0xff]
      %v904 = vld [vmem:[%s5 + $0x118] sm:$0xff]
      %v905 = vld [vmem:[%s5 + $0x120] sm:$0xff]
      %v906 = vld [vmem:[%s5 + $0x128] sm:$0xff]
      %v907 = vld [vmem:[%s5 + $0x130] sm:$0xff]
      %v908 = vld [vmem:[%s5 + $0x138] sm:$0xff]
      %v909 = vld [vmem:[%s5 + $0x140] sm:$0xff]
      %v910 = vld [vmem:[%s5 + $0x148] sm:$0xff]
      %v911 = vld [vmem:[%s5 + $0x150] sm:$0xff]
      %v912 = vld [vmem:[%s5 + $0x158] sm:$0xff]
      %v913 = vld [vmem:[%s5 + $0x160] sm:$0xff]
      %v914 = vld [vmem:[%s5 + $0x168] sm:$0xff]
      %v915 = vld [vmem:[%s5 + $0x170] sm:$0xff]
      %v916 = vld [vmem:[%s5 + $0x178] sm:$0xff]
      %v917 = vld [vmem:[%s5 + $0x180] sm:$0xff]
      %v918 = vld [vmem:[%s5 + $0x188] sm:$0xff]
      %v919 = vld [vmem:[%s5 + $0x190] sm:$0xff]
      %v920 = vld [vmem:[%s5 + $0x198] sm:$0xff]
      %v921 = vld [vmem:[%s5 + $0x1a0] sm:$0xff]
      %v922 = vld [vmem:[%s5 + $0x1a8] sm:$0xff]
      %v923 = vld [vmem:[%s5 + $0x1b0] sm:$0xff]
      %v924 = vld [vmem:[%s5 + $0x1b8] sm:$0xff]
      %v925 = vld [vmem:[%s5 + $0x1c0] sm:$0xff]
      %v926 = vld [vmem:[%s5 + $0x1c8] sm:$0xff]
      %v927 = vld [vmem:[%s5 + $0x1d0] sm:$0xff]
      %v928 = vld [vmem:[%s5 + $0x1d8] sm:$0xff]
      %v929 = vld [vmem:[%s5 + $0x1e0] sm:$0xff]
      %v930 = vld [vmem:[%s5 + $0x1e8] sm:$0xff]
      %v931 = vld [vmem:[%s5 + $0x1f0] sm:$0xff]
      %v932 = vld [vmem:[%s5 + $0x1f8] sm:$0xff]
      %v933 = vld [vmem:[%s5 + $0x200] sm:$0xff]
      %v934 = vld [vmem:[%s5 + $0x208] sm:$0xff]
      %v935 = vld [vmem:[%s5 + $0x210] sm:$0xff]
      %v936 = vld [vmem:[%s5 + $0x218] sm:$0xff]
      %v937 = vld [vmem:[%s5 + $0x220] sm:$0xff]
      %v938 = vld [vmem:[%s5 + $0x228] sm:$0xff]
      %v939 = vld [vmem:[%s5 + $0x230] sm:$0xff]
      %v940 = vld [vmem:[%s5 + $0x238] sm:$0xff]
      %942 = vset.pattern.permute.xlu0 0
      %943 = vperm.xlu0 %942, %v869
      %v944 = vpop.permute.xlu0 %943
      %947 = vset.pattern.permute.xlu0 0
      %948 = vperm.xlu0 %947, %v870
      %v949 = vpop.permute.xlu0 %948
      %952 = vset.pattern.permute.xlu0 0
      %953 = vperm.xlu0 %952, %v871
      %v954 = vpop.permute.xlu0 %953
      %957 = vset.pattern.permute.xlu0 0
      %958 = vperm.xlu0 %957, %v872
      %v959 = vpop.permute.xlu0 %958
      %962 = vset.pattern.permute.xlu0 0
      %963 = vperm.xlu0 %962, %v873
      %v964 = vpop.permute.xlu0 %963
      %967 = vset.pattern.permute.xlu0 0
      %968 = vperm.xlu0 %967, %v874
      %v969 = vpop.permute.xlu0 %968
      %972 = vset.pattern.permute.xlu0 0
      %973 = vperm.xlu0 %972, %v875
      %v974 = vpop.permute.xlu0 %973
      %977 = vset.pattern.permute.xlu0 0
      %978 = vperm.xlu0 %977, %v876
      %v979 = vpop.permute.xlu0 %978
      %982 = vset.pattern.permute.xlu0 0
      %983 = vperm.xlu0 %982, %v877
      %v984 = vpop.permute.xlu0 %983
      %987 = vset.pattern.permute.xlu0 0
      %988 = vperm.xlu0 %987, %v878
      %v989 = vpop.permute.xlu0 %988
      %992 = vset.pattern.permute.xlu0 0
      %993 = vperm.xlu0 %992, %v879
      %v994 = vpop.permute.xlu0 %993
      %997 = vset.pattern.permute.xlu0 0
      %998 = vperm.xlu0 %997, %v880
      %v999 = vpop.permute.xlu0 %998
      %1002 = vset.pattern.permute.xlu0 0
      %1003 = vperm.xlu0 %1002, %v881
      %v1004 = vpop.permute.xlu0 %1003
      %1007 = vset.pattern.permute.xlu0 0
      %1008 = vperm.xlu0 %1007, %v882
      %v1009 = vpop.permute.xlu0 %1008
      %1012 = vset.pattern.permute.xlu0 0
      %1013 = vperm.xlu0 %1012, %v883
      %v1014 = vpop.permute.xlu0 %1013
      %1017 = vset.pattern.permute.xlu0 0
      %1018 = vperm.xlu0 %1017, %v884
      %v1019 = vpop.permute.xlu0 %1018
      %1022 = vset.pattern.permute.xlu0 0
      %1023 = vperm.xlu0 %1022, %v885
      %v1024 = vpop.permute.xlu0 %1023
      %1027 = vset.pattern.permute.xlu0 0
      %1028 = vperm.xlu0 %1027, %v886
      %v1029 = vpop.permute.xlu0 %1028
      %1032 = vset.pattern.permute.xlu0 0
      %1033 = vperm.xlu0 %1032, %v887
      %v1034 = vpop.permute.xlu0 %1033
      %1037 = vset.pattern.permute.xlu0 0
      %1038 = vperm.xlu0 %1037, %v888
      %v1039 = vpop.permute.xlu0 %1038
      %1042 = vset.pattern.permute.xlu0 0
      %1043 = vperm.xlu0 %1042, %v889
      %v1044 = vpop.permute.xlu0 %1043
      %1047 = vset.pattern.permute.xlu0 0
      %1048 = vperm.xlu0 %1047, %v890
      %v1049 = vpop.permute.xlu0 %1048
      %1052 = vset.pattern.permute.xlu0 0
      %1053 = vperm.xlu0 %1052, %v891
      %v1054 = vpop.permute.xlu0 %1053
      %1057 = vset.pattern.permute.xlu0 0
      %1058 = vperm.xlu0 %1057, %v892
      %v1059 = vpop.permute.xlu0 %1058
      %1062 = vset.pattern.permute.xlu0 0
      %1063 = vperm.xlu0 %1062, %v893
      %v1064 = vpop.permute.xlu0 %1063
      %1067 = vset.pattern.permute.xlu0 0
      %1068 = vperm.xlu0 %1067, %v894
      %v1069 = vpop.permute.xlu0 %1068
      %1072 = vset.pattern.permute.xlu0 0
      %1073 = vperm.xlu0 %1072, %v895
      %v1074 = vpop.permute.xlu0 %1073
      %1077 = vset.pattern.permute.xlu0 0
      %1078 = vperm.xlu0 %1077, %v896
      %v1079 = vpop.permute.xlu0 %1078
      %1082 = vset.pattern.permute.xlu0 0
      %1083 = vperm.xlu0 %1082, %v897
      %v1084 = vpop.permute.xlu0 %1083
      %1087 = vset.pattern.permute.xlu0 0
      %1088 = vperm.xlu0 %1087, %v898
      %v1089 = vpop.permute.xlu0 %1088
      %1092 = vset.pattern.permute.xlu0 0
      %1093 = vperm.xlu0 %1092, %v899
      %v1094 = vpop.permute.xlu0 %1093
      %1097 = vset.pattern.permute.xlu0 0
      %1098 = vperm.xlu0 %1097, %v900
      %v1099 = vpop.permute.xlu0 %1098
      %1102 = vset.pattern.permute.xlu0 0
      %1103 = vperm.xlu0 %1102, %v901
      %v1104 = vpop.permute.xlu0 %1103
      %1107 = vset.pattern.permute.xlu0 0
      %1108 = vperm.xlu0 %1107, %v902
      %v1109 = vpop.permute.xlu0 %1108
      %1112 = vset.pattern.permute.xlu0 0
      %1113 = vperm.xlu0 %1112, %v903
      %v1114 = vpop.permute.xlu0 %1113
      %1117 = vset.pattern.permute.xlu0 0
      %1118 = vperm.xlu0 %1117, %v904
      %v1119 = vpop.permute.xlu0 %1118
      %1122 = vset.pattern.permute.xlu0 0
      %1123 = vperm.xlu0 %1122, %v905
      %v1124 = vpop.permute.xlu0 %1123
      %1127 = vset.pattern.permute.xlu0 0
      %1128 = vperm.xlu0 %1127, %v906
      %v1129 = vpop.permute.xlu0 %1128
      %1132 = vset.pattern.permute.xlu0 0
      %1133 = vperm.xlu0 %1132, %v907
      %v1134 = vpop.permute.xlu0 %1133
      %1137 = vset.pattern.permute.xlu0 0
      %1138 = vperm.xlu0 %1137, %v908
      %v1139 = vpop.permute.xlu0 %1138
      %1142 = vset.pattern.permute.xlu0 0
      %1143 = vperm.xlu0 %1142, %v909
      %v1144 = vpop.permute.xlu0 %1143
      %1147 = vset.pattern.permute.xlu0 0
      %1148 = vperm.xlu0 %1147, %v910
      %v1149 = vpop.permute.xlu0 %1148
      %1152 = vset.pattern.permute.xlu0 0
      %1153 = vperm.xlu0 %1152, %v911
      %v1154 = vpop.permute.xlu0 %1153
      %1157 = vset.pattern.permute.xlu0 0
      %1158 = vperm.xlu0 %1157, %v912
      %v1159 = vpop.permute.xlu0 %1158
      %1162 = vset.pattern.permute.xlu0 0
      %1163 = vperm.xlu0 %1162, %v913
      %v1164 = vpop.permute.xlu0 %1163
      %1167 = vset.pattern.permute.xlu0 0
      %1168 = vperm.xlu0 %1167, %v914
      %v1169 = vpop.permute.xlu0 %1168
      %1172 = vset.pattern.permute.xlu0 0
      %1173 = vperm.xlu0 %1172, %v915
      %v1174 = vpop.permute.xlu0 %1173
      %1177 = vset.pattern.permute.xlu0 0
      %1178 = vperm.xlu0 %1177, %v916
      %v1179 = vpop.permute.xlu0 %1178
      %1182 = vset.pattern.permute.xlu0 0
      %1183 = vperm.xlu0 %1182, %v917
      %v1184 = vpop.permute.xlu0 %1183
      %1187 = vset.pattern.permute.xlu0 0
      %1188 = vperm.xlu0 %1187, %v918
      %v1189 = vpop.permute.xlu0 %1188
      %1192 = vset.pattern.permute.xlu0 0
      %1193 = vperm.xlu0 %1192, %v919
      %v1194 = vpop.permute.xlu0 %1193
      %1197 = vset.pattern.permute.xlu0 0
      %1198 = vperm.xlu0 %1197, %v920
      %v1199 = vpop.permute.xlu0 %1198
      %1202 = vset.pattern.permute.xlu0 0
      %1203 = vperm.xlu0 %1202, %v921
      %v1204 = vpop.permute.xlu0 %1203
      %1207 = vset.pattern.permute.xlu0 0
      %1208 = vperm.xlu0 %1207, %v922
      %v1209 = vpop.permute.xlu0 %1208
      %1212 = vset.pattern.permute.xlu0 0
      %1213 = vperm.xlu0 %1212, %v923
      %v1214 = vpop.permute.xlu0 %1213
      %1217 = vset.pattern.permute.xlu0 0
      %1218 = vperm.xlu0 %1217, %v924
      %v1219 = vpop.permute.xlu0 %1218
      %1222 = vset.pattern.permute.xlu0 0
      %1223 = vperm.xlu0 %1222, %v925
      %v1224 = vpop.permute.xlu0 %1223
      %1227 = vset.pattern.permute.xlu0 0
      %1228 = vperm.xlu0 %1227, %v926
      %v1229 = vpop.permute.xlu0 %1228
      %1232 = vset.pattern.permute.xlu0 0
      %1233 = vperm.xlu0 %1232, %v927
      %v1234 = vpop.permute.xlu0 %1233
      %1237 = vset.pattern.permute.xlu0 0
      %1238 = vperm.xlu0 %1237, %v928
      %v1239 = vpop.permute.xlu0 %1238
      %1242 = vset.pattern.permute.xlu0 0
      %1243 = vperm.xlu0 %1242, %v929
      %v1244 = vpop.permute.xlu0 %1243
      %1247 = vset.pattern.permute.xlu0 0
      %1248 = vperm.xlu0 %1247, %v930
      %v1249 = vpop.permute.xlu0 %1248
      %1252 = vset.pattern.permute.xlu0 0
      %1253 = vperm.xlu0 %1252, %v931
      %v1254 = vpop.permute.xlu0 %1253
      %1257 = vset.pattern.permute.xlu0 0
      %1258 = vperm.xlu0 %1257, %v932
      %v1259 = vpop.permute.xlu0 %1258
      %1262 = vset.pattern.permute.xlu0 0
      %1263 = vperm.xlu0 %1262, %v933
      %v1264 = vpop.permute.xlu0 %1263
      %1267 = vset.pattern.permute.xlu0 0
      %1268 = vperm.xlu0 %1267, %v934
      %v1269 = vpop.permute.xlu0 %1268
      %1272 = vset.pattern.permute.xlu0 0
      %1273 = vperm.xlu0 %1272, %v935
      %v1274 = vpop.permute.xlu0 %1273
      %1277 = vset.pattern.permute.xlu0 0
      %1278 = vperm.xlu0 %1277, %v936
      %v1279 = vpop.permute.xlu0 %1278
      %1282 = vset.pattern.permute.xlu0 0
      %1283 = vperm.xlu0 %1282, %v937
      %v1284 = vpop.permute.xlu0 %1283
      %1287 = vset.pattern.permute.xlu0 0
      %1288 = vperm.xlu0 %1287, %v938
      %v1289 = vpop.permute.xlu0 %1288
      %1292 = vset.pattern.permute.xlu0 0
      %1293 = vperm.xlu0 %1292, %v939
      %v1294 = vpop.permute.xlu0 %1293
      %1297 = vset.pattern.permute.xlu0 0
      %1298 = vperm.xlu0 %1297, %v940
      %v1299 = vpop.permute.xlu0 %1298
      %v1301 = vmul.f32 %v797, %v944
      %v1302 = vmul.f32 %v798, %v949
      %v1303 = vmul.f32 %v799, %v954
      %v1304 = vmul.f32 %v800, %v959
      %v1305 = vmul.f32 %v801, %v964
      %v1306 = vmul.f32 %v802, %v969
      %v1307 = vmul.f32 %v803, %v974
      %v1308 = vmul.f32 %v804, %v979
      %v1309 = vmul.f32 %v805, %v984
      %v1310 = vmul.f32 %v806, %v989
      %v1311 = vmul.f32 %v807, %v994
      %v1312 = vmul.f32 %v808, %v999
      %v1313 = vmul.f32 %v809, %v1004
      %v1314 = vmul.f32 %v810, %v1009
      %v1315 = vmul.f32 %v811, %v1014
      %v1316 = vmul.f32 %v812, %v1019
      %v1317 = vmul.f32 %v813, %v1024
      %v1318 = vmul.f32 %v814, %v1029
      %v1319 = vmul.f32 %v815, %v1034
      %v1320 = vmul.f32 %v816, %v1039
      %v1321 = vmul.f32 %v817, %v1044
      %v1322 = vmul.f32 %v818, %v1049
      %v1323 = vmul.f32 %v819, %v1054
      %v1324 = vmul.f32 %v820, %v1059
      %v1325 = vmul.f32 %v821, %v1064
      %v1326 = vmul.f32 %v822, %v1069
      %v1327 = vmul.f32 %v823, %v1074
      %v1328 = vmul.f32 %v824, %v1079
      %v1329 = vmul.f32 %v825, %v1084
      %v1330 = vmul.f32 %v826, %v1089
      %v1331 = vmul.f32 %v827, %v1094
      %v1332 = vmul.f32 %v828, %v1099
      %v1333 = vmul.f32 %v829, %v1104
      %v1334 = vmul.f32 %v830, %v1109
      %v1335 = vmul.f32 %v831, %v1114
      %v1336 = vmul.f32 %v832, %v1119
      %v1337 = vmul.f32 %v833, %v1124
      %v1338 = vmul.f32 %v834, %v1129
      %v1339 = vmul.f32 %v835, %v1134
      %v1340 = vmul.f32 %v836, %v1139
      %v1341 = vmul.f32 %v837, %v1144
      %v1342 = vmul.f32 %v838, %v1149
      %v1343 = vmul.f32 %v839, %v1154
      %v1344 = vmul.f32 %v840, %v1159
      %v1345 = vmul.f32 %v841, %v1164
      %v1346 = vmul.f32 %v842, %v1169
      %v1347 = vmul.f32 %v843, %v1174
      %v1348 = vmul.f32 %v844, %v1179
      %v1349 = vmul.f32 %v845, %v1184
      %v1350 = vmul.f32 %v846, %v1189
      %v1351 = vmul.f32 %v847, %v1194
      %v1352 = vmul.f32 %v848, %v1199
      %v1353 = vmul.f32 %v849, %v1204
      %v1354 = vmul.f32 %v850, %v1209
      %v1355 = vmul.f32 %v851, %v1214
      %v1356 = vmul.f32 %v852, %v1219
      %v1357 = vmul.f32 %v853, %v1224
      %v1358 = vmul.f32 %v854, %v1229
      %v1359 = vmul.f32 %v855, %v1234
      %v1360 = vmul.f32 %v856, %v1239
      %v1361 = vmul.f32 %v857, %v1244
      %v1362 = vmul.f32 %v858, %v1249
      %v1363 = vmul.f32 %v859, %v1254
      %v1364 = vmul.f32 %v860, %v1259
      %v1365 = vmul.f32 %v861, %v1264
      %v1366 = vmul.f32 %v862, %v1269
      %v1367 = vmul.f32 %v863, %v1274
      %v1368 = vmul.f32 %v864, %v1279
      %v1369 = vmul.f32 %v865, %v1284
      %v1370 = vmul.f32 %v866, %v1289
      %v1371 = vmul.f32 %v867, %v1294
      %v1372 = vmul.f32 %v868, %v1299
      %v1373 = vpack.c.bf16 %v1301, %v1301
      %v1374 = vpack.c.bf16 %v1302, %v1302
      %v1375 = vpack.c.bf16 %v1303, %v1303
      %v1376 = vpack.c.bf16 %v1304, %v1304
      %v1377 = vpack.c.bf16 %v1305, %v1305
      %v1378 = vpack.c.bf16 %v1306, %v1306
      %v1379 = vpack.c.bf16 %v1307, %v1307
      %v1380 = vpack.c.bf16 %v1308, %v1308
      %v1381 = vpack.c.bf16 %v1309, %v1309
      %v1382 = vpack.c.bf16 %v1310, %v1310
      %v1383 = vpack.c.bf16 %v1311, %v1311
      %v1384 = vpack.c.bf16 %v1312, %v1312
      %v1385 = vpack.c.bf16 %v1313, %v1313
      %v1386 = vpack.c.bf16 %v1314, %v1314
      %v1387 = vpack.c.bf16 %v1315, %v1315
      %v1388 = vpack.c.bf16 %v1316, %v1316
      %v1389 = vpack.c.bf16 %v1317, %v1317
      %v1390 = vpack.c.bf16 %v1318, %v1318
      %v1391 = vpack.c.bf16 %v1319, %v1319
      %v1392 = vpack.c.bf16 %v1320, %v1320
      %v1393 = vpack.c.bf16 %v1321, %v1321
      %v1394 = vpack.c.bf16 %v1322, %v1322
      %v1395 = vpack.c.bf16 %v1323, %v1323
      %v1396 = vpack.c.bf16 %v1324, %v1324
      %v1397 = vpack.c.bf16 %v1325, %v1325
      %v1398 = vpack.c.bf16 %v1326, %v1326
      %v1399 = vpack.c.bf16 %v1327, %v1327
      %v1400 = vpack.c.bf16 %v1328, %v1328
      %v1401 = vpack.c.bf16 %v1329, %v1329
      %v1402 = vpack.c.bf16 %v1330, %v1330
      %v1403 = vpack.c.bf16 %v1331, %v1331
      %v1404 = vpack.c.bf16 %v1332, %v1332
      %v1405 = vpack.c.bf16 %v1333, %v1333
      %v1406 = vpack.c.bf16 %v1334, %v1334
      %v1407 = vpack.c.bf16 %v1335, %v1335
      %v1408 = vpack.c.bf16 %v1336, %v1336
      %v1409 = vpack.c.bf16 %v1337, %v1337
      %v1410 = vpack.c.bf16 %v1338, %v1338
      %v1411 = vpack.c.bf16 %v1339, %v1339
      %v1412 = vpack.c.bf16 %v1340, %v1340
      %v1413 = vpack.c.bf16 %v1341, %v1341
      %v1414 = vpack.c.bf16 %v1342, %v1342
      %v1415 = vpack.c.bf16 %v1343, %v1343
      %v1416 = vpack.c.bf16 %v1344, %v1344
      %v1417 = vpack.c.bf16 %v1345, %v1345
      %v1418 = vpack.c.bf16 %v1346, %v1346
      %v1419 = vpack.c.bf16 %v1347, %v1347
      %v1420 = vpack.c.bf16 %v1348, %v1348
      %v1421 = vpack.c.bf16 %v1349, %v1349
      %v1422 = vpack.c.bf16 %v1350, %v1350
      %v1423 = vpack.c.bf16 %v1351, %v1351
      %v1424 = vpack.c.bf16 %v1352, %v1352
      %v1425 = vpack.c.bf16 %v1353, %v1353
      %v1426 = vpack.c.bf16 %v1354, %v1354
      %v1427 = vpack.c.bf16 %v1355, %v1355
      %v1428 = vpack.c.bf16 %v1356, %v1356
      %v1429 = vpack.c.bf16 %v1357, %v1357
      %v1430 = vpack.c.bf16 %v1358, %v1358
      %v1431 = vpack.c.bf16 %v1359, %v1359
      %v1432 = vpack.c.bf16 %v1360, %v1360
      %v1433 = vpack.c.bf16 %v1361, %v1361
      %v1434 = vpack.c.bf16 %v1362, %v1362
      %v1435 = vpack.c.bf16 %v1363, %v1363
      %v1436 = vpack.c.bf16 %v1364, %v1364
      %v1437 = vpack.c.bf16 %v1365, %v1365
      %v1438 = vpack.c.bf16 %v1366, %v1366
      %v1439 = vpack.c.bf16 %v1367, %v1367
      %v1440 = vpack.c.bf16 %v1368, %v1368
      %v1441 = vpack.c.bf16 %v1369, %v1369
      %v1442 = vpack.c.bf16 %v1370, %v1370
      %v1443 = vpack.c.bf16 %v1371, %v1371
      %v1444 = vpack.c.bf16 %v1372, %v1372
      %1445 = vst [vmem:[#allocation2] sm:$0xf] %v1373
      %1446 = vst [vmem:[#allocation2 + $0x4] sm:$0xf] %v1374
      %1447 = vst [vmem:[#allocation2 + $0x8] sm:$0xf] %v1375
      %1448 = vst [vmem:[#allocation2 + $0xc] sm:$0xf] %v1376
      %1449 = vst [vmem:[#allocation2 + $0x10] sm:$0xf] %v1377
      %1450 = vst [vmem:[#allocation2 + $0x14] sm:$0xf] %v1378
      %1451 = vst [vmem:[#allocation2 + $0x18] sm:$0xf] %v1379
      %1452 = vst [vmem:[#allocation2 + $0x1c] sm:$0xf] %v1380
      %1453 = vst [vmem:[#allocation2 + $0x20] sm:$0xf] %v1381
      %1454 = vst [vmem:[#allocation2 + $0x24] sm:$0xf] %v1382
      %1455 = vst [vmem:[#allocation2 + $0x28] sm:$0xf] %v1383
      %1456 = vst [vmem:[#allocation2 + $0x2c] sm:$0xf] %v1384
      %1457 = vst [vmem:[#allocation2 + $0x30] sm:$0xf] %v1385
      %1458 = vst [vmem:[#allocation2 + $0x34] sm:$0xf] %v1386
      %1459 = vst [vmem:[#allocation2 + $0x38] sm:$0xf] %v1387
      %1460 = vst [vmem:[#allocation2 + $0x3c] sm:$0xf] %v1388
      %1461 = vst [vmem:[#allocation2 + $0x40] sm:$0xf] %v1389
      %1462 = vst [vmem:[#allocation2 + $0x44] sm:$0xf] %v1390
      %1463 = vst [vmem:[#allocation2 + $0x48] sm:$0xf] %v1391
      %1464 = vst [vmem:[#allocation2 + $0x4c] sm:$0xf] %v1392
      %1465 = vst [vmem:[#allocation2 + $0x50] sm:$0xf] %v1393
      %1466 = vst [vmem:[#allocation2 + $0x54] sm:$0xf] %v1394
      %1467 = vst [vmem:[#allocation2 + $0x58] sm:$0xf] %v1395
      %1468 = vst [vmem:[#allocation2 + $0x5c] sm:$0xf] %v1396
      %1469 = vst [vmem:[#allocation2 + $0x60] sm:$0xf] %v1397
      %1470 = vst [vmem:[#allocation2 + $0x64] sm:$0xf] %v1398
      %1471 = vst [vmem:[#allocation2 + $0x68] sm:$0xf] %v1399
      %1472 = vst [vmem:[#allocation2 + $0x6c] sm:$0xf] %v1400
      %1473 = vst [vmem:[#allocation2 + $0x70] sm:$0xf] %v1401
      %1474 = vst [vmem:[#allocation2 + $0x74] sm:$0xf] %v1402
      %1475 = vst [vmem:[#allocation2 + $0x78] sm:$0xf] %v1403
      %1476 = vst [vmem:[#allocation2 + $0x7c] sm:$0xf] %v1404
      %1477 = vst [vmem:[#allocation2 + $0x80] sm:$0xf] %v1405
      %1478 = vst [vmem:[#allocation2 + $0x84] sm:$0xf] %v1406
      %1479 = vst [vmem:[#allocation2 + $0x88] sm:$0xf] %v1407
      %1480 = vst [vmem:[#allocation2 + $0x8c] sm:$0xf] %v1408
      %1481 = vst [vmem:[#allocation2 + $0x90] sm:$0xf] %v1409
      %1482 = vst [vmem:[#allocation2 + $0x94] sm:$0xf] %v1410
      %1483 = vst [vmem:[#allocation2 + $0x98] sm:$0xf] %v1411
      %1484 = vst [vmem:[#allocation2 + $0x9c] sm:$0xf] %v1412
      %1485 = vst [vmem:[#allocation2 + $0xa0] sm:$0xf] %v1413
      %1486 = vst [vmem:[#allocation2 + $0xa4] sm:$0xf] %v1414
      %1487 = vst [vmem:[#allocation2 + $0xa8] sm:$0xf] %v1415
      %1488 = vst [vmem:[#allocation2 + $0xac] sm:$0xf] %v1416
      %1489 = vst [vmem:[#allocation2 + $0xb0] sm:$0xf] %v1417
      %1490 = vst [vmem:[#allocation2 + $0xb4] sm:$0xf] %v1418
      %1491 = vst [vmem:[#allocation2 + $0xb8] sm:$0xf] %v1419
      %1492 = vst [vmem:[#allocation2 + $0xbc] sm:$0xf] %v1420
      %1493 = vst [vmem:[#allocation2 + $0xc0] sm:$0xf] %v1421
      %1494 = vst [vmem:[#allocation2 + $0xc4] sm:$0xf] %v1422
      %1495 = vst [vmem:[#allocation2 + $0xc8] sm:$0xf] %v1423
      %1496 = vst [vmem:[#allocation2 + $0xcc] sm:$0xf] %v1424
      %1497 = vst [vmem:[#allocation2 + $0xd0] sm:$0xf] %v1425
      %1498 = vst [vmem:[#allocation2 + $0xd4] sm:$0xf] %v1426
      %1499 = vst [vmem:[#allocation2 + $0xd8] sm:$0xf] %v1427
      %1500 = vst [vmem:[#allocation2 + $0xdc] sm:$0xf] %v1428
      %1501 = vst [vmem:[#allocation2 + $0xe0] sm:$0xf] %v1429
      %1502 = vst [vmem:[#allocation2 + $0xe4] sm:$0xf] %v1430
      %1503 = vst [vmem:[#allocation2 + $0xe8] sm:$0xf] %v1431
      %1504 = vst [vmem:[#allocation2 + $0xec] sm:$0xf] %v1432
      %1505 = vst [vmem:[#allocation2 + $0xf0] sm:$0xf] %v1433
      %1506 = vst [vmem:[#allocation2 + $0xf4] sm:$0xf] %v1434
      %1507 = vst [vmem:[#allocation2 + $0xf8] sm:$0xf] %v1435
      %1508 = vst [vmem:[#allocation2 + $0xfc] sm:$0xf] %v1436
      %1509 = vst [vmem:[#allocation2 + $0x100] sm:$0xf] %v1437
      %1510 = vst [vmem:[#allocation2 + $0x104] sm:$0xf] %v1438
      %1511 = vst [vmem:[#allocation2 + $0x108] sm:$0xf] %v1439
      %1512 = vst [vmem:[#allocation2 + $0x10c] sm:$0xf] %v1440
      %1513 = vst [vmem:[#allocation2 + $0x110] sm:$0xf] %v1441
      %1514 = vst [vmem:[#allocation2 + $0x114] sm:$0xf] %v1442
      %1515 = vst [vmem:[#allocation2 + $0x118] sm:$0xf] %v1443
      %1516 = vst [vmem:[#allocation2 + $0x11c] sm:$0xf] %v1444
      %v1517 = vld [vmem:[#allocation2] sm:$0xf]
      %v1518 = vld [vmem:[#allocation2 + $0x4] sm:$0xf]
      %v1519 = vld [vmem:[#allocation2 + $0x8] sm:$0xf]
      %v1520 = vld [vmem:[#allocation2 + $0xc] sm:$0xf]
      %v1521 = vld [vmem:[#allocation2 + $0x10] sm:$0xf]
      %v1522 = vld [vmem:[#allocation2 + $0x14] sm:$0xf]
      %v1523 = vld [vmem:[#allocation2 + $0x18] sm:$0xf]
      %v1524 = vld [vmem:[#allocation2 + $0x1c] sm:$0xf]
      %v1525 = vld [vmem:[#allocation2 + $0x20] sm:$0xf]
      %v1526 = vld [vmem:[#allocation2 + $0x24] sm:$0xf]
      %v1527 = vld [vmem:[#allocation2 + $0x28] sm:$0xf]
      %v1528 = vld [vmem:[#allocation2 + $0x2c] sm:$0xf]
      %v1529 = vld [vmem:[#allocation2 + $0x30] sm:$0xf]
      %v1530 = vld [vmem:[#allocation2 + $0x34] sm:$0xf]
      %v1531 = vld [vmem:[#allocation2 + $0x38] sm:$0xf]
      %v1532 = vld [vmem:[#allocation2 + $0x3c] sm:$0xf]
      %v1533 = vld [vmem:[#allocation2 + $0x48] sm:$0xf]
      %v1534 = vld [vmem:[#allocation2 + $0x4c] sm:$0xf]
      %v1535 = vld [vmem:[#allocation2 + $0x50] sm:$0xf]
      %v1536 = vld [vmem:[#allocation2 + $0x54] sm:$0xf]
      %v1537 = vld [vmem:[#allocation2 + $0x58] sm:$0xf]
      %v1538 = vld [vmem:[#allocation2 + $0x5c] sm:$0xf]
      %v1539 = vld [vmem:[#allocation2 + $0x60] sm:$0xf]
      %v1540 = vld [vmem:[#allocation2 + $0x64] sm:$0xf]
      %v1541 = vld [vmem:[#allocation2 + $0x68] sm:$0xf]
      %v1542 = vld [vmem:[#allocation2 + $0x6c] sm:$0xf]
      %v1543 = vld [vmem:[#allocation2 + $0x70] sm:$0xf]
      %v1544 = vld [vmem:[#allocation2 + $0x74] sm:$0xf]
      %v1545 = vld [vmem:[#allocation2 + $0x78] sm:$0xf]
      %v1546 = vld [vmem:[#allocation2 + $0x7c] sm:$0xf]
      %v1547 = vld [vmem:[#allocation2 + $0x80] sm:$0xf]
      %v1548 = vld [vmem:[#allocation2 + $0x84] sm:$0xf]
      %v1549 = vld [vmem:[#allocation2 + $0x40] sm:$0x1]
      %v1550 = vld [vmem:[#allocation2 + $0x90] sm:$0xf]
      %v1551 = vld [vmem:[#allocation2 + $0x94] sm:$0xf]
      %v1552 = vld [vmem:[#allocation2 + $0x98] sm:$0xf]
      %v1553 = vld [vmem:[#allocation2 + $0x9c] sm:$0xf]
      %v1554 = vld [vmem:[#allocation2 + $0xa0] sm:$0xf]
      %v1555 = vld [vmem:[#allocation2 + $0xa4] sm:$0xf]
      %v1556 = vld [vmem:[#allocation2 + $0xa8] sm:$0xf]
      %v1557 = vld [vmem:[#allocation2 + $0xac] sm:$0xf]
      %v1558 = vld [vmem:[#allocation2 + $0xb0] sm:$0xf]
      %v1559 = vld [vmem:[#allocation2 + $0xb4] sm:$0xf]
      %v1560 = vld [vmem:[#allocation2 + $0xb8] sm:$0xf]
      %v1561 = vld [vmem:[#allocation2 + $0xbc] sm:$0xf]
      %v1562 = vld [vmem:[#allocation2 + $0xc0] sm:$0xf]
      %v1563 = vld [vmem:[#allocation2 + $0xc4] sm:$0xf]
      %v1564 = vld [vmem:[#allocation2 + $0xc8] sm:$0xf]
      %v1565 = vld [vmem:[#allocation2 + $0xcc] sm:$0xf]
      %v1566 = vld [vmem:[#allocation2 + $0xd8] sm:$0xf]
      %v1567 = vld [vmem:[#allocation2 + $0xdc] sm:$0xf]
      %v1568 = vld [vmem:[#allocation2 + $0xe0] sm:$0xf]
      %v1569 = vld [vmem:[#allocation2 + $0xe4] sm:$0xf]
      %v1570 = vld [vmem:[#allocation2 + $0xe8] sm:$0xf]
      %v1571 = vld [vmem:[#allocation2 + $0xec] sm:$0xf]
      %v1572 = vld [vmem:[#allocation2 + $0xf0] sm:$0xf]
      %v1573 = vld [vmem:[#allocation2 + $0xf4] sm:$0xf]
      %v1574 = vld [vmem:[#allocation2 + $0xf8] sm:$0xf]
      %v1575 = vld [vmem:[#allocation2 + $0xfc] sm:$0xf]
      %v1576 = vld [vmem:[#allocation2 + $0x100] sm:$0xf]
      %v1577 = vld [vmem:[#allocation2 + $0x104] sm:$0xf]
      %v1578 = vld [vmem:[#allocation2 + $0x108] sm:$0xf]
      %v1579 = vld [vmem:[#allocation2 + $0x10c] sm:$0xf]
      %v1580 = vld [vmem:[#allocation2 + $0x110] sm:$0xf]
      %v1581 = vld [vmem:[#allocation2 + $0x114] sm:$0xf]
      %v1582 = vld [vmem:[#allocation2 + $0xd0] sm:$0x1]
      %v1583 = vld [vmem:[#allocation2 + $0x40] sm:$0xf]
      %v1584 = vld [vmem:[#allocation2 + $0x44] sm:$0xf]
      %v1585 = vld [vmem:[#allocation2 + $0x88] sm:$0xf]
      %v1586 = vld [vmem:[#allocation2 + $0x8c] sm:$0xf]
      %v1587 = vld [vmem:[#allocation2 + $0x48] sm:$0x1]
      %v1588 = vld [vmem:[%s3] sm:$0xf]
      %v1589 = vld [vmem:[%s3 + $0x4] sm:$0xf]
      %v1590 = vld [vmem:[%s3 + $0x8] sm:$0xf]
      %v1591 = vld [vmem:[%s3 + $0xc] sm:$0xf]
      %v1592 = vld [vmem:[%s3 + $0x10] sm:$0xf]
      %v1593 = vld [vmem:[%s3 + $0x14] sm:$0xf]
      %v1594 = vld [vmem:[%s3 + $0x18] sm:$0xf]
      %v1595 = vld [vmem:[%s3 + $0x1c] sm:$0xf]
      %v1596 = vld [vmem:[%s3 + $0x20] sm:$0xf]
      %v1597 = vld [vmem:[%s3 + $0x24] sm:$0xf]
      %v1598 = vld [vmem:[%s3 + $0x28] sm:$0xf]
      %v1599 = vld [vmem:[%s3 + $0x2c] sm:$0xf]
      %v1600 = vld [vmem:[%s3 + $0x30] sm:$0xf]
      %v1601 = vld [vmem:[%s3 + $0x34] sm:$0xf]
      %v1602 = vld [vmem:[%s3 + $0x38] sm:$0xf]
      %v1603 = vld [vmem:[%s3 + $0x3c] sm:$0xf]
      %s1604 = scalar_lea.vmem %s3, 64
      %v1605 = vld [vmem:[%s1604] sm:$0xf]
      %v1606 = vld [vmem:[%s1604 + $0x4] sm:$0xf]
      %v1607 = vld [vmem:[%s1604 + $0x8] sm:$0xf]
      %v1608 = vld [vmem:[%s1604 + $0xc] sm:$0xf]
      %v1609 = vld [vmem:[%s1604 + $0x10] sm:$0xf]
      %v1610 = vld [vmem:[%s1604 + $0x14] sm:$0xf]
      %v1611 = vld [vmem:[%s1604 + $0x18] sm:$0xf]
      %v1612 = vld [vmem:[%s1604 + $0x1c] sm:$0xf]
      %v1613 = vld [vmem:[%s1604 + $0x20] sm:$0xf]
      %v1614 = vld [vmem:[%s1604 + $0x24] sm:$0xf]
      %v1615 = vld [vmem:[%s1604 + $0x28] sm:$0xf]
      %v1616 = vld [vmem:[%s1604 + $0x2c] sm:$0xf]
      %v1617 = vld [vmem:[%s1604 + $0x30] sm:$0xf]
      %v1618 = vld [vmem:[%s1604 + $0x34] sm:$0xf]
      %v1619 = vld [vmem:[%s1604 + $0x38] sm:$0xf]
      %v1620 = vld [vmem:[%s1604 + $0x3c] sm:$0xf]
      %v1637 = vunpack.c.l.b16 %v1533
      %v1638 = vunpack.c.l.b16 %v1534
      %v1639 = vunpack.c.l.b16 %v1535
      %v1640 = vunpack.c.l.b16 %v1536
      %v1641 = vunpack.c.l.b16 %v1537
      %v1642 = vunpack.c.l.b16 %v1538
      %v1643 = vunpack.c.l.b16 %v1539
      %v1644 = vunpack.c.l.b16 %v1540
      %v1645 = vunpack.c.l.b16 %v1541
      %v1646 = vunpack.c.l.b16 %v1542
      %v1647 = vunpack.c.l.b16 %v1543
      %v1648 = vunpack.c.l.b16 %v1544
      %v1649 = vunpack.c.l.b16 %v1545
      %v1650 = vunpack.c.l.b16 %v1546
      %v1651 = vunpack.c.l.b16 %v1547
      %v1652 = vunpack.c.l.b16 %v1548
      %v1653 = vpack.c.b16 %v1638, %v1637
      %v1654 = vpack.c.b16 %v1640, %v1639
      %v1655 = vpack.c.b16 %v1642, %v1641
      %v1656 = vpack.c.b16 %v1644, %v1643
      %v1657 = vpack.c.b16 %v1646, %v1645
      %v1658 = vpack.c.b16 %v1648, %v1647
      %v1659 = vpack.c.b16 %v1650, %v1649
      %v1660 = vpack.c.b16 %v1652, %v1651
      %v1685 = vunpack.c.l.b16 %v1605
      %v1686 = vunpack.c.l.b16 %v1606
      %v1687 = vunpack.c.l.b16 %v1607
      %v1688 = vunpack.c.l.b16 %v1608
      %v1689 = vunpack.c.l.b16 %v1609
      %v1690 = vunpack.c.l.b16 %v1610
      %v1691 = vunpack.c.l.b16 %v1611
      %v1692 = vunpack.c.l.b16 %v1612
      %v1693 = vunpack.c.l.b16 %v1613
      %v1694 = vunpack.c.l.b16 %v1614
      %v1695 = vunpack.c.l.b16 %v1615
      %v1696 = vunpack.c.l.b16 %v1616
      %v1697 = vunpack.c.l.b16 %v1617
      %v1698 = vunpack.c.l.b16 %v1618
      %v1699 = vunpack.c.l.b16 %v1619
      %v1700 = vunpack.c.l.b16 %v1620
      %v1701 = vpack.c.b16 %v1686, %v1685
      %v1702 = vpack.c.b16 %v1688, %v1687
      %v1703 = vpack.c.b16 %v1690, %v1689
      %v1704 = vpack.c.b16 %v1692, %v1691
      %v1705 = vpack.c.b16 %v1694, %v1693
      %v1706 = vpack.c.b16 %v1696, %v1695
      %v1707 = vpack.c.b16 %v1698, %v1697
      %v1708 = vpack.c.b16 %v1700, %v1699
      %1717 = vmatpush.bf16.msra.mxu0 %v1708
      %1718 = vmatpush.bf16.msra.mxu0 %v1707
      %1719 = vmatpush.bf16.msra.mxu0 %v1706
      %1720 = vmatpush.bf16.msra.mxu0 %v1705
      %1721 = vmatpush.bf16.msra.mxu0 %v1704
      %1722 = vmatpush.bf16.msra.mxu0 %v1703
      %1723 = vmatpush.bf16.msra.mxu0 %v1702
      %1724 = vmatpush.bf16.msra.mxu0 %v1701
      %1725 = vmatmul.bf16.gmra.mxu0 %v1653
      %v1726 = vpop.f32.mrf.mxu0
      %v1727 = vadd.f32 0.0, %v1726
      %v1728 = vpop.f32.mrf.mxu0
      %v1729 = vadd.f32 0.0, %v1728
      %1730 = vmatmul.bf16.gmra.mxu0 %v1654
      %v1731 = vpop.f32.mrf.mxu0
      %v1732 = vadd.f32 0.0, %v1731
      %v1733 = vpop.f32.mrf.mxu0
      %v1734 = vadd.f32 0.0, %v1733
      %1735 = vmatmul.bf16.gmra.mxu0 %v1655
      %v1736 = vpop.f32.mrf.mxu0
      %v1737 = vadd.f32 0.0, %v1736
      %v1738 = vpop.f32.mrf.mxu0
      %v1739 = vadd.f32 0.0, %v1738
      %1740 = vmatmul.bf16.gmra.mxu0 %v1656
      %v1741 = vpop.f32.mrf.mxu0
      %v1742 = vadd.f32 0.0, %v1741
      %v1743 = vpop.f32.mrf.mxu0
      %v1744 = vadd.f32 0.0, %v1743
      %1745 = vmatmul.bf16.gmra.mxu0 %v1657
      %v1746 = vpop.f32.mrf.mxu0
      %v1747 = vadd.f32 0.0, %v1746
      %v1748 = vpop.f32.mrf.mxu0
      %v1749 = vadd.f32 0.0, %v1748
      %1750 = vmatmul.bf16.gmra.mxu0 %v1658
      %v1751 = vpop.f32.mrf.mxu0
      %v1752 = vadd.f32 0.0, %v1751
      %v1753 = vpop.f32.mrf.mxu0
      %v1754 = vadd.f32 0.0, %v1753
      %1755 = vmatmul.bf16.gmra.mxu0 %v1659
      %v1756 = vpop.f32.mrf.mxu0
      %v1757 = vadd.f32 0.0, %v1756
      %v1758 = vpop.f32.mrf.mxu0
      %v1759 = vadd.f32 0.0, %v1758
      %1760 = vmatmul.bf16.gmra.mxu0 %v1660
      %v1761 = vpop.f32.mrf.mxu0
      %v1762 = vadd.f32 0.0, %v1761
      %v1763 = vpop.f32.mrf.mxu0
      %v1764 = vadd.f32 0.0, %v1763
      %1765 = vdwg.mxu0
      %v1782 = vunpack.c.l.b16 %v1517
      %v1783 = vunpack.c.l.b16 %v1518
      %v1784 = vunpack.c.l.b16 %v1519
      %v1785 = vunpack.c.l.b16 %v1520
      %v1786 = vunpack.c.l.b16 %v1521
      %v1787 = vunpack.c.l.b16 %v1522
      %v1788 = vunpack.c.l.b16 %v1523
      %v1789 = vunpack.c.l.b16 %v1524
      %v1790 = vunpack.c.l.b16 %v1525
      %v1791 = vunpack.c.l.b16 %v1526
      %v1792 = vunpack.c.l.b16 %v1527
      %v1793 = vunpack.c.l.b16 %v1528
      %v1794 = vunpack.c.l.b16 %v1529
      %v1795 = vunpack.c.l.b16 %v1530
      %v1796 = vunpack.c.l.b16 %v1531
      %v1797 = vunpack.c.l.b16 %v1532
      %v1798 = vpack.c.b16 %v1783, %v1782
      %v1799 = vpack.c.b16 %v1785, %v1784
      %v1800 = vpack.c.b16 %v1787, %v1786
      %v1801 = vpack.c.b16 %v1789, %v1788
      %v1802 = vpack.c.b16 %v1791, %v1790
      %v1803 = vpack.c.b16 %v1793, %v1792
      %v1804 = vpack.c.b16 %v1795, %v1794
      %v1805 = vpack.c.b16 %v1797, %v1796
      %v1830 = vunpack.c.l.b16 %v1588
      %v1831 = vunpack.c.l.b16 %v1589
      %v1832 = vunpack.c.l.b16 %v1590
      %v1833 = vunpack.c.l.b16 %v1591
      %v1834 = vunpack.c.l.b16 %v1592
      %v1835 = vunpack.c.l.b16 %v1593
      %v1836 = vunpack.c.l.b16 %v1594
      %v1837 = vunpack.c.l.b16 %v1595
      %v1838 = vunpack.c.l.b16 %v1596
      %v1839 = vunpack.c.l.b16 %v1597
      %v1840 = vunpack.c.l.b16 %v1598
      %v1841 = vunpack.c.l.b16 %v1599
      %v1842 = vunpack.c.l.b16 %v1600
      %v1843 = vunpack.c.l.b16 %v1601
      %v1844 = vunpack.c.l.b16 %v1602
      %v1845 = vunpack.c.l.b16 %v1603
      %v1846 = vpack.c.b16 %v1831, %v1830
      %v1847 = vpack.c.b16 %v1833, %v1832
      %v1848 = vpack.c.b16 %v1835, %v1834
      %v1849 = vpack.c.b16 %v1837, %v1836
      %v1850 = vpack.c.b16 %v1839, %v1838
      %v1851 = vpack.c.b16 %v1841, %v1840
      %v1852 = vpack.c.b16 %v1843, %v1842
      %v1853 = vpack.c.b16 %v1845, %v1844
      %1862 = vmatpush.bf16.msra.mxu0 %v1853
      %1863 = vmatpush.bf16.msra.mxu0 %v1852
      %1864 = vmatpush.bf16.msra.mxu0 %v1851
      %1865 = vmatpush.bf16.msra.mxu0 %v1850
      %1866 = vmatpush.bf16.msra.mxu0 %v1849
      %1867 = vmatpush.bf16.msra.mxu0 %v1848
      %1868 = vmatpush.bf16.msra.mxu0 %v1847
      %1869 = vmatpush.bf16.msra.mxu0 %v1846
      %1870 = vmatmul.bf16.gmra.mxu0 %v1798
      %v1871 = vpop.f32.mrf.mxu0
      %v1872 = vadd.f32 %v1727, %v1871
      %v1873 = vpop.f32.mrf.mxu0
      %v1874 = vadd.f32 %v1729, %v1873
      %1875 = vmatmul.bf16.gmra.mxu0 %v1799
      %v1876 = vpop.f32.mrf.mxu0
      %v1877 = vadd.f32 %v1732, %v1876
      %v1878 = vpop.f32.mrf.mxu0
      %v1879 = vadd.f32 %v1734, %v1878
      %1880 = vmatmul.bf16.gmra.mxu0 %v1800
      %v1881 = vpop.f32.mrf.mxu0
      %v1882 = vadd.f32 %v1737, %v1881
      %v1883 = vpop.f32.mrf.mxu0
      %v1884 = vadd.f32 %v1739, %v1883
      %1885 = vmatmul.bf16.gmra.mxu0 %v1801
      %v1886 = vpop.f32.mrf.mxu0
      %v1887 = vadd.f32 %v1742, %v1886
      %v1888 = vpop.f32.mrf.mxu0
      %v1889 = vadd.f32 %v1744, %v1888
      %1890 = vmatmul.bf16.gmra.mxu0 %v1802
      %v1891 = vpop.f32.mrf.mxu0
      %v1892 = vadd.f32 %v1747, %v1891
      %v1893 = vpop.f32.mrf.mxu0
      %v1894 = vadd.f32 %v1749, %v1893
      %1895 = vmatmul.bf16.gmra.mxu0 %v1803
      %v1896 = vpop.f32.mrf.mxu0
      %v1897 = vadd.f32 %v1752, %v1896
      %v1898 = vpop.f32.mrf.mxu0
      %v1899 = vadd.f32 %v1754, %v1898
      %1900 = vmatmul.bf16.gmra.mxu0 %v1804
      %v1901 = vpop.f32.mrf.mxu0
      %v1902 = vadd.f32 %v1757, %v1901
      %v1903 = vpop.f32.mrf.mxu0
      %v1904 = vadd.f32 %v1759, %v1903
      %1905 = vmatmul.bf16.gmra.mxu0 %v1805
      %v1906 = vpop.f32.mrf.mxu0
      %v1907 = vadd.f32 %v1762, %v1906
      %v1908 = vpop.f32.mrf.mxu0
      %v1909 = vadd.f32 %v1764, %v1908
      %1910 = vdwg.mxu0
      %s1911 = scalar_lea.vmem %s3, 128
      %v1912 = vld [vmem:[%s1911] sm:$0xf]
      %v1913 = vld [vmem:[%s1911 + $0x4] sm:$0xf]
      %v1914 = vld [vmem:[%s1911 + $0x8] sm:$0xf]
      %v1915 = vld [vmem:[%s1911 + $0xc] sm:$0xf]
      %v1916 = vld [vmem:[%s1911 + $0x10] sm:$0xf]
      %v1917 = vld [vmem:[%s1911 + $0x14] sm:$0xf]
      %v1918 = vld [vmem:[%s1911 + $0x18] sm:$0xf]
      %v1919 = vld [vmem:[%s1911 + $0x1c] sm:$0xf]
      %v1920 = vld [vmem:[%s1911 + $0x20] sm:$0xf]
      %v1921 = vld [vmem:[%s1911 + $0x24] sm:$0xf]
      %v1922 = vld [vmem:[%s1911 + $0x28] sm:$0xf]
      %v1923 = vld [vmem:[%s1911 + $0x2c] sm:$0xf]
      %v1924 = vld [vmem:[%s1911 + $0x30] sm:$0xf]
      %v1925 = vld [vmem:[%s1911 + $0x34] sm:$0xf]
      %v1926 = vld [vmem:[%s1911 + $0x38] sm:$0xf]
      %v1927 = vld [vmem:[%s1911 + $0x3c] sm:$0xf]
      %v1929 = vunpack.c.l.b16 %v1549
      %v1930 = vpack.c.b16 %v1929, %v1929
      %vm1931 = vsmask.f32 7424
      %v1933 = vshrl.u32 %v1798, 16
      %v1935 = vshll.u32 %v1798, 16
      %v1937 = vrot.slane %v1935, 1
      %v1938 = vor.u32 %v1933, %v1937
      %v1940 = vshll.u32 %v1799, 16
      %v1942 = vrot.slane %v1940, 1
      %v1943 = vsel %vm1931, %v1938, %v1942
      %v1944 = vshrl.u32 %v1799, 16
      %v1946 = vor.u32 %v1944, %v1942
      %v1948 = vshll.u32 %v1800, 16
      %v1950 = vrot.slane %v1948, 1
      %v1951 = vsel %vm1931, %v1946, %v1950
      %v1952 = vshrl.u32 %v1800, 16
      %v1954 = vor.u32 %v1952, %v1950
      %v1956 = vshll.u32 %v1801, 16
      %v1958 = vrot.slane %v1956, 1
      %v1959 = vsel %vm1931, %v1954, %v1958
      %v1960 = vshrl.u32 %v1801, 16
      %v1962 = vor.u32 %v1960, %v1958
      %v1964 = vshll.u32 %v1802, 16
      %v1966 = vrot.slane %v1964, 1
      %v1967 = vsel %vm1931, %v1962, %v1966
      %v1968 = vshrl.u32 %v1802, 16
      %v1970 = vor.u32 %v1968, %v1966
      %v1972 = vshll.u32 %v1803, 16
      %v1974 = vrot.slane %v1972, 1
      %v1975 = vsel %vm1931, %v1970, %v1974
      %v1976 = vshrl.u32 %v1803, 16
      %v1978 = vor.u32 %v1976, %v1974
      %v1980 = vshll.u32 %v1804, 16
      %v1982 = vrot.slane %v1980, 1
      %v1983 = vsel %vm1931, %v1978, %v1982
      %v1984 = vshrl.u32 %v1804, 16
      %v1986 = vor.u32 %v1984, %v1982
      %v1988 = vshll.u32 %v1805, 16
      %v1990 = vrot.slane %v1988, 1
      %v1991 = vsel %vm1931, %v1986, %v1990
      %v1992 = vshrl.u32 %v1805, 16
      %v1994 = vor.u32 %v1992, %v1990
      %v1996 = vshll.u32 %v1930, 16
      %v1998 = vrot.slane %v1996, 1
      %v1999 = vsel %vm1931, %v1994, %v1998
      %v2024 = vunpack.c.l.b16 %v1912
      %v2025 = vunpack.c.l.b16 %v1913
      %v2026 = vunpack.c.l.b16 %v1914
      %v2027 = vunpack.c.l.b16 %v1915
      %v2028 = vunpack.c.l.b16 %v1916
      %v2029 = vunpack.c.l.b16 %v1917
      %v2030 = vunpack.c.l.b16 %v1918
      %v2031 = vunpack.c.l.b16 %v1919
      %v2032 = vunpack.c.l.b16 %v1920
      %v2033 = vunpack.c.l.b16 %v1921
      %v2034 = vunpack.c.l.b16 %v1922
      %v2035 = vunpack.c.l.b16 %v1923
      %v2036 = vunpack.c.l.b16 %v1924
      %v2037 = vunpack.c.l.b16 %v1925
      %v2038 = vunpack.c.l.b16 %v1926
      %v2039 = vunpack.c.l.b16 %v1927
      %v2040 = vpack.c.b16 %v2025, %v2024
      %v2041 = vpack.c.b16 %v2027, %v2026
      %v2042 = vpack.c.b16 %v2029, %v2028
      %v2043 = vpack.c.b16 %v2031, %v2030
      %v2044 = vpack.c.b16 %v2033, %v2032
      %v2045 = vpack.c.b16 %v2035, %v2034
      %v2046 = vpack.c.b16 %v2037, %v2036
      %v2047 = vpack.c.b16 %v2039, %v2038
      %2056 = vmatpush.bf16.msra.mxu0 %v2047
      %2057 = vmatpush.bf16.msra.mxu0 %v2046
      %2058 = vmatpush.bf16.msra.mxu0 %v2045
      %2059 = vmatpush.bf16.msra.mxu0 %v2044
      %2060 = vmatpush.bf16.msra.mxu0 %v2043
      %2061 = vmatpush.bf16.msra.mxu0 %v2042
      %2062 = vmatpush.bf16.msra.mxu0 %v2041
      %2063 = vmatpush.bf16.msra.mxu0 %v2040
      %2064 = vmatmul.bf16.gmra.mxu0 %v1943
      %v2065 = vpop.f32.mrf.mxu0
      %v2066 = vadd.f32 0.0, %v2065
      %v2067 = vpop.f32.mrf.mxu0
      %v2068 = vadd.f32 0.0, %v2067
      %2069 = vmatmul.bf16.gmra.mxu0 %v1951
      %v2070 = vpop.f32.mrf.mxu0
      %v2071 = vadd.f32 0.0, %v2070
      %v2072 = vpop.f32.mrf.mxu0
      %v2073 = vadd.f32 0.0, %v2072
      %2074 = vmatmul.bf16.gmra.mxu0 %v1959
      %v2075 = vpop.f32.mrf.mxu0
      %v2076 = vadd.f32 0.0, %v2075
      %v2077 = vpop.f32.mrf.mxu0
      %v2078 = vadd.f32 0.0, %v2077
      %2079 = vmatmul.bf16.gmra.mxu0 %v1967
      %v2080 = vpop.f32.mrf.mxu0
      %v2081 = vadd.f32 0.0, %v2080
      %v2082 = vpop.f32.mrf.mxu0
      %v2083 = vadd.f32 0.0, %v2082
      %2084 = vmatmul.bf16.gmra.mxu0 %v1975
      %v2085 = vpop.f32.mrf.mxu0
      %v2086 = vadd.f32 0.0, %v2085
      %v2087 = vpop.f32.mrf.mxu0
      %v2088 = vadd.f32 0.0, %v2087
      %2089 = vmatmul.bf16.gmra.mxu0 %v1983
      %v2090 = vpop.f32.mrf.mxu0
      %v2091 = vadd.f32 0.0, %v2090
      %v2092 = vpop.f32.mrf.mxu0
      %v2093 = vadd.f32 0.0, %v2092
      %2094 = vmatmul.bf16.gmra.mxu0 %v1991
      %v2095 = vpop.f32.mrf.mxu0
      %v2096 = vadd.f32 0.0, %v2095
      %v2097 = vpop.f32.mrf.mxu0
      %v2098 = vadd.f32 0.0, %v2097
      %2099 = vmatmul.bf16.gmra.mxu0 %v1999
      %v2100 = vpop.f32.mrf.mxu0
      %v2101 = vadd.f32 0.0, %v2100
      %v2102 = vpop.f32.mrf.mxu0
      %v2103 = vadd.f32 0.0, %v2102
      %2104 = vdwg.mxu0
      %v2105 = vadd.f32 %v1872, %v2066
      %v2106 = vadd.f32 %v1874, %v2068
      %v2107 = vadd.f32 %v1877, %v2071
      %v2108 = vadd.f32 %v1879, %v2073
      %v2109 = vadd.f32 %v1882, %v2076
      %v2110 = vadd.f32 %v1884, %v2078
      %v2111 = vadd.f32 %v1887, %v2081
      %v2112 = vadd.f32 %v1889, %v2083
      %v2113 = vadd.f32 %v1892, %v2086
      %v2114 = vadd.f32 %v1894, %v2088
      %v2115 = vadd.f32 %v1897, %v2091
      %v2116 = vadd.f32 %v1899, %v2093
      %v2117 = vadd.f32 %v1902, %v2096
      %v2118 = vadd.f32 %v1904, %v2098
      %v2119 = vadd.f32 %v1907, %v2101
      %v2120 = vadd.f32 %v1909, %v2103
      %s2121 = scalar_lea.vmem %s3, 192
      %v2122 = vld [vmem:[%s2121] sm:$0xf]
      %v2123 = vld [vmem:[%s2121 + $0x4] sm:$0xf]
      %v2124 = vld [vmem:[%s2121 + $0x8] sm:$0xf]
      %v2125 = vld [vmem:[%s2121 + $0xc] sm:$0xf]
      %v2126 = vld [vmem:[%s2121 + $0x10] sm:$0xf]
      %v2127 = vld [vmem:[%s2121 + $0x14] sm:$0xf]
      %v2128 = vld [vmem:[%s2121 + $0x18] sm:$0xf]
      %v2129 = vld [vmem:[%s2121 + $0x1c] sm:$0xf]
      %v2130 = vld [vmem:[%s2121 + $0x20] sm:$0xf]
      %v2131 = vld [vmem:[%s2121 + $0x24] sm:$0xf]
      %v2132 = vld [vmem:[%s2121 + $0x28] sm:$0xf]
      %v2133 = vld [vmem:[%s2121 + $0x2c] sm:$0xf]
      %v2134 = vld [vmem:[%s2121 + $0x30] sm:$0xf]
      %v2135 = vld [vmem:[%s2121 + $0x34] sm:$0xf]
      %v2136 = vld [vmem:[%s2121 + $0x38] sm:$0xf]
      %v2137 = vld [vmem:[%s2121 + $0x3c] sm:$0xf]
      %v2154 = vunpack.c.l.b16 %v1550
      %v2155 = vunpack.c.l.b16 %v1551
      %v2156 = vunpack.c.l.b16 %v1552
      %v2157 = vunpack.c.l.b16 %v1553
      %v2158 = vunpack.c.l.b16 %v1554
      %v2159 = vunpack.c.l.b16 %v1555
      %v2160 = vunpack.c.l.b16 %v1556
      %v2161 = vunpack.c.l.b16 %v1557
      %v2162 = vunpack.c.l.b16 %v1558
      %v2163 = vunpack.c.l.b16 %v1559
      %v2164 = vunpack.c.l.b16 %v1560
      %v2165 = vunpack.c.l.b16 %v1561
      %v2166 = vunpack.c.l.b16 %v1562
      %v2167 = vunpack.c.l.b16 %v1563
      %v2168 = vunpack.c.l.b16 %v1564
      %v2169 = vunpack.c.l.b16 %v1565
      %v2170 = vpack.c.b16 %v2155, %v2154
      %v2171 = vpack.c.b16 %v2157, %v2156
      %v2172 = vpack.c.b16 %v2159, %v2158
      %v2173 = vpack.c.b16 %v2161, %v2160
      %v2174 = vpack.c.b16 %v2163, %v2162
      %v2175 = vpack.c.b16 %v2165, %v2164
      %v2176 = vpack.c.b16 %v2167, %v2166
      %v2177 = vpack.c.b16 %v2169, %v2168
      %v2202 = vunpack.c.l.b16 %v2122
      %v2203 = vunpack.c.l.b16 %v2123
      %v2204 = vunpack.c.l.b16 %v2124
      %v2205 = vunpack.c.l.b16 %v2125
      %v2206 = vunpack.c.l.b16 %v2126
      %v2207 = vunpack.c.l.b16 %v2127
      %v2208 = vunpack.c.l.b16 %v2128
      %v2209 = vunpack.c.l.b16 %v2129
      %v2210 = vunpack.c.l.b16 %v2130
      %v2211 = vunpack.c.l.b16 %v2131
      %v2212 = vunpack.c.l.b16 %v2132
      %v2213 = vunpack.c.l.b16 %v2133
      %v2214 = vunpack.c.l.b16 %v2134
      %v2215 = vunpack.c.l.b16 %v2135
      %v2216 = vunpack.c.l.b16 %v2136
      %v2217 = vunpack.c.l.b16 %v2137
      %v2218 = vpack.c.b16 %v2203, %v2202
      %v2219 = vpack.c.b16 %v2205, %v2204
      %v2220 = vpack.c.b16 %v2207, %v2206
      %v2221 = vpack.c.b16 %v2209, %v2208
      %v2222 = vpack.c.b16 %v2211, %v2210
      %v2223 = vpack.c.b16 %v2213, %v2212
      %v2224 = vpack.c.b16 %v2215, %v2214
      %v2225 = vpack.c.b16 %v2217, %v2216
      %2234 = vmatpush.bf16.msra.mxu0 %v2225
      %2235 = vmatpush.bf16.msra.mxu0 %v2224
      %2236 = vmatpush.bf16.msra.mxu0 %v2223
      %2237 = vmatpush.bf16.msra.mxu0 %v2222
      %2238 = vmatpush.bf16.msra.mxu0 %v2221
      %2239 = vmatpush.bf16.msra.mxu0 %v2220
      %2240 = vmatpush.bf16.msra.mxu0 %v2219
      %2241 = vmatpush.bf16.msra.mxu0 %v2218
      %2242 = vmatmul.bf16.gmra.mxu0 %v2170
      %v2243 = vpop.f32.mrf.mxu0
      %v2244 = vadd.f32 0.0, %v2243
      %v2245 = vpop.f32.mrf.mxu0
      %v2246 = vadd.f32 0.0, %v2245
      %2247 = vmatmul.bf16.gmra.mxu0 %v2171
      %v2248 = vpop.f32.mrf.mxu0
      %v2249 = vadd.f32 0.0, %v2248
      %v2250 = vpop.f32.mrf.mxu0
      %v2251 = vadd.f32 0.0, %v2250
      %2252 = vmatmul.bf16.gmra.mxu0 %v2172
      %v2253 = vpop.f32.mrf.mxu0
      %v2254 = vadd.f32 0.0, %v2253
      %v2255 = vpop.f32.mrf.mxu0
      %v2256 = vadd.f32 0.0, %v2255
      %2257 = vmatmul.bf16.gmra.mxu0 %v2173
      %v2258 = vpop.f32.mrf.mxu0
      %v2259 = vadd.f32 0.0, %v2258
      %v2260 = vpop.f32.mrf.mxu0
      %v2261 = vadd.f32 0.0, %v2260
      %2262 = vmatmul.bf16.gmra.mxu0 %v2174
      %v2263 = vpop.f32.mrf.mxu0
      %v2264 = vadd.f32 0.0, %v2263
      %v2265 = vpop.f32.mrf.mxu0
      %v2266 = vadd.f32 0.0, %v2265
      %2267 = vmatmul.bf16.gmra.mxu0 %v2175
      %v2268 = vpop.f32.mrf.mxu0
      %v2269 = vadd.f32 0.0, %v2268
      %v2270 = vpop.f32.mrf.mxu0
      %v2271 = vadd.f32 0.0, %v2270
      %2272 = vmatmul.bf16.gmra.mxu0 %v2176
      %v2273 = vpop.f32.mrf.mxu0
      %v2274 = vadd.f32 0.0, %v2273
      %v2275 = vpop.f32.mrf.mxu0
      %v2276 = vadd.f32 0.0, %v2275
      %2277 = vmatmul.bf16.gmra.mxu0 %v2177
      %v2278 = vpop.f32.mrf.mxu0
      %v2279 = vadd.f32 0.0, %v2278
      %v2280 = vpop.f32.mrf.mxu0
      %v2281 = vadd.f32 0.0, %v2280
      %2282 = vdwg.mxu0
      %v2283 = vadd.f32 %v2105, %v2244
      %v2284 = vadd.f32 %v2106, %v2246
      %v2285 = vadd.f32 %v2107, %v2249
      %v2286 = vadd.f32 %v2108, %v2251
      %v2287 = vadd.f32 %v2109, %v2254
      %v2288 = vadd.f32 %v2110, %v2256
      %v2289 = vadd.f32 %v2111, %v2259
      %v2290 = vadd.f32 %v2112, %v2261
      %v2291 = vadd.f32 %v2113, %v2264
      %v2292 = vadd.f32 %v2114, %v2266
      %v2293 = vadd.f32 %v2115, %v2269
      %v2294 = vadd.f32 %v2116, %v2271
      %v2295 = vadd.f32 %v2117, %v2274
      %v2296 = vadd.f32 %v2118, %v2276
      %v2297 = vadd.f32 %v2119, %v2279
      %v2298 = vadd.f32 %v2120, %v2281
      %s2299 = scalar_lea.vmem %s3, 256
      %v2300 = vld [vmem:[%s2299] sm:$0xf]
      %v2301 = vld [vmem:[%s2299 + $0x4] sm:$0xf]
      %v2302 = vld [vmem:[%s2299 + $0x8] sm:$0xf]
      %v2303 = vld [vmem:[%s2299 + $0xc] sm:$0xf]
      %v2304 = vld [vmem:[%s2299 + $0x10] sm:$0xf]
      %v2305 = vld [vmem:[%s2299 + $0x14] sm:$0xf]
      %v2306 = vld [vmem:[%s2299 + $0x18] sm:$0xf]
      %v2307 = vld [vmem:[%s2299 + $0x1c] sm:$0xf]
      %v2308 = vld [vmem:[%s2299 + $0x20] sm:$0xf]
      %v2309 = vld [vmem:[%s2299 + $0x24] sm:$0xf]
      %v2310 = vld [vmem:[%s2299 + $0x28] sm:$0xf]
      %v2311 = vld [vmem:[%s2299 + $0x2c] sm:$0xf]
      %v2312 = vld [vmem:[%s2299 + $0x30] sm:$0xf]
      %v2313 = vld [vmem:[%s2299 + $0x34] sm:$0xf]
      %v2314 = vld [vmem:[%s2299 + $0x38] sm:$0xf]
      %v2315 = vld [vmem:[%s2299 + $0x3c] sm:$0xf]
      %v2332 = vunpack.c.l.b16 %v1566
      %v2333 = vunpack.c.l.b16 %v1567
      %v2334 = vunpack.c.l.b16 %v1568
      %v2335 = vunpack.c.l.b16 %v1569
      %v2336 = vunpack.c.l.b16 %v1570
      %v2337 = vunpack.c.l.b16 %v1571
      %v2338 = vunpack.c.l.b16 %v1572
      %v2339 = vunpack.c.l.b16 %v1573
      %v2340 = vunpack.c.l.b16 %v1574
      %v2341 = vunpack.c.l.b16 %v1575
      %v2342 = vunpack.c.l.b16 %v1576
      %v2343 = vunpack.c.l.b16 %v1577
      %v2344 = vunpack.c.l.b16 %v1578
      %v2345 = vunpack.c.l.b16 %v1579
      %v2346 = vunpack.c.l.b16 %v1580
      %v2347 = vunpack.c.l.b16 %v1581
      %v2348 = vpack.c.b16 %v2333, %v2332
      %v2349 = vpack.c.b16 %v2335, %v2334
      %v2350 = vpack.c.b16 %v2337, %v2336
      %v2351 = vpack.c.b16 %v2339, %v2338
      %v2352 = vpack.c.b16 %v2341, %v2340
      %v2353 = vpack.c.b16 %v2343, %v2342
      %v2354 = vpack.c.b16 %v2345, %v2344
      %v2355 = vpack.c.b16 %v2347, %v2346
      %v2380 = vunpack.c.l.b16 %v2300
      %v2381 = vunpack.c.l.b16 %v2301
      %v2382 = vunpack.c.l.b16 %v2302
      %v2383 = vunpack.c.l.b16 %v2303
      %v2384 = vunpack.c.l.b16 %v2304
      %v2385 = vunpack.c.l.b16 %v2305
      %v2386 = vunpack.c.l.b16 %v2306
      %v2387 = vunpack.c.l.b16 %v2307
      %v2388 = vunpack.c.l.b16 %v2308
      %v2389 = vunpack.c.l.b16 %v2309
      %v2390 = vunpack.c.l.b16 %v2310
      %v2391 = vunpack.c.l.b16 %v2311
      %v2392 = vunpack.c.l.b16 %v2312
      %v2393 = vunpack.c.l.b16 %v2313
      %v2394 = vunpack.c.l.b16 %v2314
      %v2395 = vunpack.c.l.b16 %v2315
      %v2396 = vpack.c.b16 %v2381, %v2380
      %v2397 = vpack.c.b16 %v2383, %v2382
      %v2398 = vpack.c.b16 %v2385, %v2384
      %v2399 = vpack.c.b16 %v2387, %v2386
      %v2400 = vpack.c.b16 %v2389, %v2388
      %v2401 = vpack.c.b16 %v2391, %v2390
      %v2402 = vpack.c.b16 %v2393, %v2392
      %v2403 = vpack.c.b16 %v2395, %v2394
      %2412 = vmatpush.bf16.msra.mxu0 %v2403
      %2413 = vmatpush.bf16.msra.mxu0 %v2402
      %2414 = vmatpush.bf16.msra.mxu0 %v2401
      %2415 = vmatpush.bf16.msra.mxu0 %v2400
      %2416 = vmatpush.bf16.msra.mxu0 %v2399
      %2417 = vmatpush.bf16.msra.mxu0 %v2398
      %2418 = vmatpush.bf16.msra.mxu0 %v2397
      %2419 = vmatpush.bf16.msra.mxu0 %v2396
      %2420 = vmatmul.bf16.gmra.mxu0 %v2348
      %v2421 = vpop.f32.mrf.mxu0
      %v2422 = vadd.f32 0.0, %v2421
      %v2423 = vpop.f32.mrf.mxu0
      %v2424 = vadd.f32 0.0, %v2423
      %2425 = vmatmul.bf16.gmra.mxu0 %v2349
      %v2426 = vpop.f32.mrf.mxu0
      %v2427 = vadd.f32 0.0, %v2426
      %v2428 = vpop.f32.mrf.mxu0
      %v2429 = vadd.f32 0.0, %v2428
      %2430 = vmatmul.bf16.gmra.mxu0 %v2350
      %v2431 = vpop.f32.mrf.mxu0
      %v2432 = vadd.f32 0.0, %v2431
      %v2433 = vpop.f32.mrf.mxu0
      %v2434 = vadd.f32 0.0, %v2433
      %2435 = vmatmul.bf16.gmra.mxu0 %v2351
      %v2436 = vpop.f32.mrf.mxu0
      %v2437 = vadd.f32 0.0, %v2436
      %v2438 = vpop.f32.mrf.mxu0
      %v2439 = vadd.f32 0.0, %v2438
      %2440 = vmatmul.bf16.gmra.mxu0 %v2352
      %v2441 = vpop.f32.mrf.mxu0
      %v2442 = vadd.f32 0.0, %v2441
      %v2443 = vpop.f32.mrf.mxu0
      %v2444 = vadd.f32 0.0, %v2443
      %2445 = vmatmul.bf16.gmra.mxu0 %v2353
      %v2446 = vpop.f32.mrf.mxu0
      %v2447 = vadd.f32 0.0, %v2446
      %v2448 = vpop.f32.mrf.mxu0
      %v2449 = vadd.f32 0.0, %v2448
      %2450 = vmatmul.bf16.gmra.mxu0 %v2354
      %v2451 = vpop.f32.mrf.mxu0
      %v2452 = vadd.f32 0.0, %v2451
      %v2453 = vpop.f32.mrf.mxu0
      %v2454 = vadd.f32 0.0, %v2453
      %2455 = vmatmul.bf16.gmra.mxu0 %v2355
      %v2456 = vpop.f32.mrf.mxu0
      %v2457 = vadd.f32 0.0, %v2456
      %v2458 = vpop.f32.mrf.mxu0
      %v2459 = vadd.f32 0.0, %v2458
      %2460 = vdwg.mxu0
      %v2461 = vadd.f32 %v2283, %v2422
      %v2462 = vadd.f32 %v2284, %v2424
      %v2463 = vadd.f32 %v2285, %v2427
      %v2464 = vadd.f32 %v2286, %v2429
      %v2465 = vadd.f32 %v2287, %v2432
      %v2466 = vadd.f32 %v2288, %v2434
      %v2467 = vadd.f32 %v2289, %v2437
      %v2468 = vadd.f32 %v2290, %v2439
      %v2469 = vadd.f32 %v2291, %v2442
      %v2470 = vadd.f32 %v2292, %v2444
      %v2471 = vadd.f32 %v2293, %v2447
      %v2472 = vadd.f32 %v2294, %v2449
      %v2473 = vadd.f32 %v2295, %v2452
      %v2474 = vadd.f32 %v2296, %v2454
      %v2475 = vadd.f32 %v2297, %v2457
      %v2476 = vadd.f32 %v2298, %v2459
      %s2477 = scalar_lea.vmem %s3, 320
      %v2478 = vld [vmem:[%s2477] sm:$0xf]
      %v2479 = vld [vmem:[%s2477 + $0x4] sm:$0xf]
      %v2480 = vld [vmem:[%s2477 + $0x8] sm:$0xf]
      %v2481 = vld [vmem:[%s2477 + $0xc] sm:$0xf]
      %v2482 = vld [vmem:[%s2477 + $0x10] sm:$0xf]
      %v2483 = vld [vmem:[%s2477 + $0x14] sm:$0xf]
      %v2484 = vld [vmem:[%s2477 + $0x18] sm:$0xf]
      %v2485 = vld [vmem:[%s2477 + $0x1c] sm:$0xf]
      %v2486 = vld [vmem:[%s2477 + $0x20] sm:$0xf]
      %v2487 = vld [vmem:[%s2477 + $0x24] sm:$0xf]
      %v2488 = vld [vmem:[%s2477 + $0x28] sm:$0xf]
      %v2489 = vld [vmem:[%s2477 + $0x2c] sm:$0xf]
      %v2490 = vld [vmem:[%s2477 + $0x30] sm:$0xf]
      %v2491 = vld [vmem:[%s2477 + $0x34] sm:$0xf]
      %v2492 = vld [vmem:[%s2477 + $0x38] sm:$0xf]
      %v2493 = vld [vmem:[%s2477 + $0x3c] sm:$0xf]
      %v2495 = vunpack.c.l.b16 %v1582
      %v2496 = vpack.c.b16 %v2495, %v2495
      %v2498 = vshrl.u32 %v2170, 16
      %v2500 = vshll.u32 %v2170, 16
      %v2502 = vrot.slane %v2500, 1
      %v2503 = vor.u32 %v2498, %v2502
      %v2505 = vshll.u32 %v2171, 16
      %v2507 = vrot.slane %v2505, 1
      %v2508 = vsel %vm1931, %v2503, %v2507
      %v2509 = vshrl.u32 %v2171, 16
      %v2511 = vor.u32 %v2509, %v2507
      %v2513 = vshll.u32 %v2172, 16
      %v2515 = vrot.slane %v2513, 1
      %v2516 = vsel %vm1931, %v2511, %v2515
      %v2517 = vshrl.u32 %v2172, 16
      %v2519 = vor.u32 %v2517, %v2515
      %v2521 = vshll.u32 %v2173, 16
      %v2523 = vrot.slane %v2521, 1
      %v2524 = vsel %vm1931, %v2519, %v2523
      %v2525 = vshrl.u32 %v2173, 16
      %v2527 = vor.u32 %v2525, %v2523
      %v2529 = vshll.u32 %v2174, 16
      %v2531 = vrot.slane %v2529, 1
      %v2532 = vsel %vm1931, %v2527, %v2531
      %v2533 = vshrl.u32 %v2174, 16
      %v2535 = vor.u32 %v2533, %v2531
      %v2537 = vshll.u32 %v2175, 16
      %v2539 = vrot.slane %v2537, 1
      %v2540 = vsel %vm1931, %v2535, %v2539
      %v2541 = vshrl.u32 %v2175, 16
      %v2543 = vor.u32 %v2541, %v2539
      %v2545 = vshll.u32 %v2176, 16
      %v2547 = vrot.slane %v2545, 1
      %v2548 = vsel %vm1931, %v2543, %v2547
      %v2549 = vshrl.u32 %v2176, 16
      %v2551 = vor.u32 %v2549, %v2547
      %v2553 = vshll.u32 %v2177, 16
      %v2555 = vrot.slane %v2553, 1
      %v2556 = vsel %vm1931, %v2551, %v2555
      %v2557 = vshrl.u32 %v2177, 16
      %v2559 = vor.u32 %v2557, %v2555
      %v2561 = vshll.u32 %v2496, 16
      %v2563 = vrot.slane %v2561, 1
      %v2564 = vsel %vm1931, %v2559, %v2563
      %v2589 = vunpack.c.l.b16 %v2478
      %v2590 = vunpack.c.l.b16 %v2479
      %v2591 = vunpack.c.l.b16 %v2480
      %v2592 = vunpack.c.l.b16 %v2481
      %v2593 = vunpack.c.l.b16 %v2482
      %v2594 = vunpack.c.l.b16 %v2483
      %v2595 = vunpack.c.l.b16 %v2484
      %v2596 = vunpack.c.l.b16 %v2485
      %v2597 = vunpack.c.l.b16 %v2486
      %v2598 = vunpack.c.l.b16 %v2487
      %v2599 = vunpack.c.l.b16 %v2488
      %v2600 = vunpack.c.l.b16 %v2489
      %v2601 = vunpack.c.l.b16 %v2490
      %v2602 = vunpack.c.l.b16 %v2491
      %v2603 = vunpack.c.l.b16 %v2492
      %v2604 = vunpack.c.l.b16 %v2493
      %v2605 = vpack.c.b16 %v2590, %v2589
      %v2606 = vpack.c.b16 %v2592, %v2591
      %v2607 = vpack.c.b16 %v2594, %v2593
      %v2608 = vpack.c.b16 %v2596, %v2595
      %v2609 = vpack.c.b16 %v2598, %v2597
      %v2610 = vpack.c.b16 %v2600, %v2599
      %v2611 = vpack.c.b16 %v2602, %v2601
      %v2612 = vpack.c.b16 %v2604, %v2603
      %2621 = vmatpush.bf16.msra.mxu0 %v2612
      %2622 = vmatpush.bf16.msra.mxu0 %v2611
      %2623 = vmatpush.bf16.msra.mxu0 %v2610
      %2624 = vmatpush.bf16.msra.mxu0 %v2609
      %2625 = vmatpush.bf16.msra.mxu0 %v2608
      %2626 = vmatpush.bf16.msra.mxu0 %v2607
      %2627 = vmatpush.bf16.msra.mxu0 %v2606
      %2628 = vmatpush.bf16.msra.mxu0 %v2605
      %2629 = vmatmul.bf16.gmra.mxu0 %v2508
      %v2630 = vpop.f32.mrf.mxu0
      %v2631 = vadd.f32 0.0, %v2630
      %v2632 = vpop.f32.mrf.mxu0
      %v2633 = vadd.f32 0.0, %v2632
      %2634 = vmatmul.bf16.gmra.mxu0 %v2516
      %v2635 = vpop.f32.mrf.mxu0
      %v2636 = vadd.f32 0.0, %v2635
      %v2637 = vpop.f32.mrf.mxu0
      %v2638 = vadd.f32 0.0, %v2637
      %2639 = vmatmul.bf16.gmra.mxu0 %v2524
      %v2640 = vpop.f32.mrf.mxu0
      %v2641 = vadd.f32 0.0, %v2640
      %v2642 = vpop.f32.mrf.mxu0
      %v2643 = vadd.f32 0.0, %v2642
      %2644 = vmatmul.bf16.gmra.mxu0 %v2532
      %v2645 = vpop.f32.mrf.mxu0
      %v2646 = vadd.f32 0.0, %v2645
      %v2647 = vpop.f32.mrf.mxu0
      %v2648 = vadd.f32 0.0, %v2647
      %2649 = vmatmul.bf16.gmra.mxu0 %v2540
      %v2650 = vpop.f32.mrf.mxu0
      %v2651 = vadd.f32 0.0, %v2650
      %v2652 = vpop.f32.mrf.mxu0
      %v2653 = vadd.f32 0.0, %v2652
      %2654 = vmatmul.bf16.gmra.mxu0 %v2548
      %v2655 = vpop.f32.mrf.mxu0
      %v2656 = vadd.f32 0.0, %v2655
      %v2657 = vpop.f32.mrf.mxu0
      %v2658 = vadd.f32 0.0, %v2657
      %2659 = vmatmul.bf16.gmra.mxu0 %v2556
      %v2660 = vpop.f32.mrf.mxu0
      %v2661 = vadd.f32 0.0, %v2660
      %v2662 = vpop.f32.mrf.mxu0
      %v2663 = vadd.f32 0.0, %v2662
      %2664 = vmatmul.bf16.gmra.mxu0 %v2564
      %v2665 = vpop.f32.mrf.mxu0
      %v2666 = vadd.f32 0.0, %v2665
      %v2667 = vpop.f32.mrf.mxu0
      %v2668 = vadd.f32 0.0, %v2667
      %2669 = vdwg.mxu0
      %v2670 = vadd.f32 %v2461, %v2631
      %v2671 = vadd.f32 %v2462, %v2633
      %v2672 = vadd.f32 %v2463, %v2636
      %v2673 = vadd.f32 %v2464, %v2638
      %v2674 = vadd.f32 %v2465, %v2641
      %v2675 = vadd.f32 %v2466, %v2643
      %v2676 = vadd.f32 %v2467, %v2646
      %v2677 = vadd.f32 %v2468, %v2648
      %v2678 = vadd.f32 %v2469, %v2651
      %v2679 = vadd.f32 %v2470, %v2653
      %v2680 = vadd.f32 %v2471, %v2656
      %v2681 = vadd.f32 %v2472, %v2658
      %v2682 = vadd.f32 %v2473, %v2661
      %v2683 = vadd.f32 %v2474, %v2663
      %v2684 = vadd.f32 %v2475, %v2666
      %v2685 = vadd.f32 %v2476, %v2668
      %s2686 = scalar_lea.vmem %s3, 384
      %v2687 = vld [vmem:[%s2686] sm:$0xf]
      %v2688 = vld [vmem:[%s2686 + $0x4] sm:$0xf]
      %v2689 = vld [vmem:[%s2686 + $0x8] sm:$0xf]
      %v2690 = vld [vmem:[%s2686 + $0xc] sm:$0xf]
      %v2691 = vld [vmem:[%s2686 + $0x10] sm:$0xf]
      %v2692 = vld [vmem:[%s2686 + $0x14] sm:$0xf]
      %v2693 = vld [vmem:[%s2686 + $0x18] sm:$0xf]
      %v2694 = vld [vmem:[%s2686 + $0x1c] sm:$0xf]
      %v2695 = vld [vmem:[%s2686 + $0x20] sm:$0xf]
      %v2696 = vld [vmem:[%s2686 + $0x24] sm:$0xf]
      %v2697 = vld [vmem:[%s2686 + $0x28] sm:$0xf]
      %v2698 = vld [vmem:[%s2686 + $0x2c] sm:$0xf]
      %v2699 = vld [vmem:[%s2686 + $0x30] sm:$0xf]
      %v2700 = vld [vmem:[%s2686 + $0x34] sm:$0xf]
      %v2701 = vld [vmem:[%s2686 + $0x38] sm:$0xf]
      %v2702 = vld [vmem:[%s2686 + $0x3c] sm:$0xf]
      %v2705 = vunpack.c.l.b16 %v1583
      %v2706 = vunpack.c.l.b16 %v1584
      %v2707 = vpack.c.b16 %v2706, %v2705
      %v2725 = vunpack.c.l.b16 %v2687
      %v2726 = vunpack.c.l.b16 %v2688
      %v2727 = vunpack.c.l.b16 %v2689
      %v2728 = vunpack.c.l.b16 %v2690
      %v2729 = vunpack.c.l.b16 %v2691
      %v2730 = vunpack.c.l.b16 %v2692
      %v2731 = vunpack.c.l.b16 %v2693
      %v2732 = vunpack.c.l.b16 %v2694
      %v2733 = vunpack.c.l.b16 %v2695
      %v2734 = vunpack.c.l.b16 %v2696
      %v2735 = vunpack.c.l.b16 %v2697
      %v2736 = vunpack.c.l.b16 %v2698
      %v2737 = vunpack.c.l.b16 %v2699
      %v2738 = vunpack.c.l.b16 %v2700
      %v2739 = vunpack.c.l.b16 %v2701
      %v2740 = vunpack.c.l.b16 %v2702
      %v2741 = vpack.c.b16 %v2726, %v2725
      %v2742 = vpack.c.b16 %v2728, %v2727
      %v2743 = vpack.c.b16 %v2730, %v2729
      %v2744 = vpack.c.b16 %v2732, %v2731
      %v2745 = vpack.c.b16 %v2734, %v2733
      %v2746 = vpack.c.b16 %v2736, %v2735
      %v2747 = vpack.c.b16 %v2738, %v2737
      %v2748 = vpack.c.b16 %v2740, %v2739
      %2757 = vmatpush.bf16.msra.mxu0 %v2748
      %2758 = vmatpush.bf16.msra.mxu0 %v2747
      %2759 = vmatpush.bf16.msra.mxu0 %v2746
      %2760 = vmatpush.bf16.msra.mxu0 %v2745
      %2761 = vmatpush.bf16.msra.mxu0 %v2744
      %2762 = vmatpush.bf16.msra.mxu0 %v2743
      %2763 = vmatpush.bf16.msra.mxu0 %v2742
      %2764 = vmatpush.bf16.msra.mxu0 %v2741
      %2765 = vmatmul.bf16.gmra.mxu0 %v1799
      %v2766 = vpop.f32.mrf.mxu0
      %v2767 = vadd.f32 0.0, %v2766
      %v2768 = vpop.f32.mrf.mxu0
      %v2769 = vadd.f32 0.0, %v2768
      %2770 = vmatmul.bf16.gmra.mxu0 %v1800
      %v2771 = vpop.f32.mrf.mxu0
      %v2772 = vadd.f32 0.0, %v2771
      %v2773 = vpop.f32.mrf.mxu0
      %v2774 = vadd.f32 0.0, %v2773
      %2775 = vmatmul.bf16.gmra.mxu0 %v1801
      %v2776 = vpop.f32.mrf.mxu0
      %v2777 = vadd.f32 0.0, %v2776
      %v2778 = vpop.f32.mrf.mxu0
      %v2779 = vadd.f32 0.0, %v2778
      %2780 = vmatmul.bf16.gmra.mxu0 %v1802
      %v2781 = vpop.f32.mrf.mxu0
      %v2782 = vadd.f32 0.0, %v2781
      %v2783 = vpop.f32.mrf.mxu0
      %v2784 = vadd.f32 0.0, %v2783
      %2785 = vmatmul.bf16.gmra.mxu0 %v1803
      %v2786 = vpop.f32.mrf.mxu0
      %v2787 = vadd.f32 0.0, %v2786
      %v2788 = vpop.f32.mrf.mxu0
      %v2789 = vadd.f32 0.0, %v2788
      %2790 = vmatmul.bf16.gmra.mxu0 %v1804
      %v2791 = vpop.f32.mrf.mxu0
      %v2792 = vadd.f32 0.0, %v2791
      %v2793 = vpop.f32.mrf.mxu0
      %v2794 = vadd.f32 0.0, %v2793
      %2795 = vmatmul.bf16.gmra.mxu0 %v1805
      %v2796 = vpop.f32.mrf.mxu0
      %v2797 = vadd.f32 0.0, %v2796
      %v2798 = vpop.f32.mrf.mxu0
      %v2799 = vadd.f32 0.0, %v2798
      %2800 = vmatmul.bf16.gmra.mxu0 %v2707
      %v2801 = vpop.f32.mrf.mxu0
      %v2802 = vadd.f32 0.0, %v2801
      %v2803 = vpop.f32.mrf.mxu0
      %v2804 = vadd.f32 0.0, %v2803
      %2805 = vdwg.mxu0
      %v2806 = vadd.f32 %v2670, %v2767
      %v2807 = vadd.f32 %v2671, %v2769
      %v2808 = vadd.f32 %v2672, %v2772
      %v2809 = vadd.f32 %v2673, %v2774
      %v2810 = vadd.f32 %v2674, %v2777
      %v2811 = vadd.f32 %v2675, %v2779
      %v2812 = vadd.f32 %v2676, %v2782
      %v2813 = vadd.f32 %v2677, %v2784
      %v2814 = vadd.f32 %v2678, %v2787
      %v2815 = vadd.f32 %v2679, %v2789
      %v2816 = vadd.f32 %v2680, %v2792
      %v2817 = vadd.f32 %v2681, %v2794
      %v2818 = vadd.f32 %v2682, %v2797
      %v2819 = vadd.f32 %v2683, %v2799
      %v2820 = vadd.f32 %v2684, %v2802
      %v2821 = vadd.f32 %v2685, %v2804
      %s2822 = scalar_lea.vmem %s3, 448
      %v2823 = vld [vmem:[%s2822] sm:$0xf]
      %v2824 = vld [vmem:[%s2822 + $0x4] sm:$0xf]
      %v2825 = vld [vmem:[%s2822 + $0x8] sm:$0xf]
      %v2826 = vld [vmem:[%s2822 + $0xc] sm:$0xf]
      %v2827 = vld [vmem:[%s2822 + $0x10] sm:$0xf]
      %v2828 = vld [vmem:[%s2822 + $0x14] sm:$0xf]
      %v2829 = vld [vmem:[%s2822 + $0x18] sm:$0xf]
      %v2830 = vld [vmem:[%s2822 + $0x1c] sm:$0xf]
      %v2831 = vld [vmem:[%s2822 + $0x20] sm:$0xf]
      %v2832 = vld [vmem:[%s2822 + $0x24] sm:$0xf]
      %v2833 = vld [vmem:[%s2822 + $0x28] sm:$0xf]
      %v2834 = vld [vmem:[%s2822 + $0x2c] sm:$0xf]
      %v2835 = vld [vmem:[%s2822 + $0x30] sm:$0xf]
      %v2836 = vld [vmem:[%s2822 + $0x34] sm:$0xf]
      %v2837 = vld [vmem:[%s2822 + $0x38] sm:$0xf]
      %v2838 = vld [vmem:[%s2822 + $0x3c] sm:$0xf]
      %v2841 = vunpack.c.l.b16 %v1585
      %v2842 = vunpack.c.l.b16 %v1586
      %v2843 = vpack.c.b16 %v2842, %v2841
      %v2861 = vunpack.c.l.b16 %v2823
      %v2862 = vunpack.c.l.b16 %v2824
      %v2863 = vunpack.c.l.b16 %v2825
      %v2864 = vunpack.c.l.b16 %v2826
      %v2865 = vunpack.c.l.b16 %v2827
      %v2866 = vunpack.c.l.b16 %v2828
      %v2867 = vunpack.c.l.b16 %v2829
      %v2868 = vunpack.c.l.b16 %v2830
      %v2869 = vunpack.c.l.b16 %v2831
      %v2870 = vunpack.c.l.b16 %v2832
      %v2871 = vunpack.c.l.b16 %v2833
      %v2872 = vunpack.c.l.b16 %v2834
      %v2873 = vunpack.c.l.b16 %v2835
      %v2874 = vunpack.c.l.b16 %v2836
      %v2875 = vunpack.c.l.b16 %v2837
      %v2876 = vunpack.c.l.b16 %v2838
      %v2877 = vpack.c.b16 %v2862, %v2861
      %v2878 = vpack.c.b16 %v2864, %v2863
      %v2879 = vpack.c.b16 %v2866, %v2865
      %v2880 = vpack.c.b16 %v2868, %v2867
      %v2881 = vpack.c.b16 %v2870, %v2869
      %v2882 = vpack.c.b16 %v2872, %v2871
      %v2883 = vpack.c.b16 %v2874, %v2873
      %v2884 = vpack.c.b16 %v2876, %v2875
      %2893 = vmatpush.bf16.msra.mxu0 %v2884
      %2894 = vmatpush.bf16.msra.mxu0 %v2883
      %2895 = vmatpush.bf16.msra.mxu0 %v2882
      %2896 = vmatpush.bf16.msra.mxu0 %v2881
      %2897 = vmatpush.bf16.msra.mxu0 %v2880
      %2898 = vmatpush.bf16.msra.mxu0 %v2879
      %2899 = vmatpush.bf16.msra.mxu0 %v2878
      %2900 = vmatpush.bf16.msra.mxu0 %v2877
      %2901 = vmatmul.bf16.gmra.mxu0 %v1654
      %v2902 = vpop.f32.mrf.mxu0
      %v2903 = vadd.f32 0.0, %v2902
      %v2904 = vpop.f32.mrf.mxu0
      %v2905 = vadd.f32 0.0, %v2904
      %2906 = vmatmul.bf16.gmra.mxu0 %v1655
      %v2907 = vpop.f32.mrf.mxu0
      %v2908 = vadd.f32 0.0, %v2907
      %v2909 = vpop.f32.mrf.mxu0
      %v2910 = vadd.f32 0.0, %v2909
      %2911 = vmatmul.bf16.gmra.mxu0 %v1656
      %v2912 = vpop.f32.mrf.mxu0
      %v2913 = vadd.f32 0.0, %v2912
      %v2914 = vpop.f32.mrf.mxu0
      %v2915 = vadd.f32 0.0, %v2914
      %2916 = vmatmul.bf16.gmra.mxu0 %v1657
      %v2917 = vpop.f32.mrf.mxu0
      %v2918 = vadd.f32 0.0, %v2917
      %v2919 = vpop.f32.mrf.mxu0
      %v2920 = vadd.f32 0.0, %v2919
      %2921 = vmatmul.bf16.gmra.mxu0 %v1658
      %v2922 = vpop.f32.mrf.mxu0
      %v2923 = vadd.f32 0.0, %v2922
      %v2924 = vpop.f32.mrf.mxu0
      %v2925 = vadd.f32 0.0, %v2924
      %2926 = vmatmul.bf16.gmra.mxu0 %v1659
      %v2927 = vpop.f32.mrf.mxu0
      %v2928 = vadd.f32 0.0, %v2927
      %v2929 = vpop.f32.mrf.mxu0
      %v2930 = vadd.f32 0.0, %v2929
      %2931 = vmatmul.bf16.gmra.mxu0 %v1660
      %v2932 = vpop.f32.mrf.mxu0
      %v2933 = vadd.f32 0.0, %v2932
      %v2934 = vpop.f32.mrf.mxu0
      %v2935 = vadd.f32 0.0, %v2934
      %2936 = vmatmul.bf16.gmra.mxu0 %v2843
      %v2937 = vpop.f32.mrf.mxu0
      %v2938 = vadd.f32 0.0, %v2937
      %v2939 = vpop.f32.mrf.mxu0
      %v2940 = vadd.f32 0.0, %v2939
      %2941 = vdwg.mxu0
      %v2942 = vadd.f32 %v2806, %v2903
      %v2943 = vadd.f32 %v2807, %v2905
      %v2944 = vadd.f32 %v2808, %v2908
      %v2945 = vadd.f32 %v2809, %v2910
      %v2946 = vadd.f32 %v2810, %v2913
      %v2947 = vadd.f32 %v2811, %v2915
      %v2948 = vadd.f32 %v2812, %v2918
      %v2949 = vadd.f32 %v2813, %v2920
      %v2950 = vadd.f32 %v2814, %v2923
      %v2951 = vadd.f32 %v2815, %v2925
      %v2952 = vadd.f32 %v2816, %v2928
      %v2953 = vadd.f32 %v2817, %v2930
      %v2954 = vadd.f32 %v2818, %v2933
      %v2955 = vadd.f32 %v2819, %v2935
      %v2956 = vadd.f32 %v2820, %v2938
      %v2957 = vadd.f32 %v2821, %v2940
      %s2958 = scalar_lea.vmem %s3, 512
      %v2959 = vld [vmem:[%s2958] sm:$0xf]
      %v2960 = vld [vmem:[%s2958 + $0x4] sm:$0xf]
      %v2961 = vld [vmem:[%s2958 + $0x8] sm:$0xf]
      %v2962 = vld [vmem:[%s2958 + $0xc] sm:$0xf]
      %v2963 = vld [vmem:[%s2958 + $0x10] sm:$0xf]
      %v2964 = vld [vmem:[%s2958 + $0x14] sm:$0xf]
      %v2965 = vld [vmem:[%s2958 + $0x18] sm:$0xf]
      %v2966 = vld [vmem:[%s2958 + $0x1c] sm:$0xf]
      %v2967 = vld [vmem:[%s2958 + $0x20] sm:$0xf]
      %v2968 = vld [vmem:[%s2958 + $0x24] sm:$0xf]
      %v2969 = vld [vmem:[%s2958 + $0x28] sm:$0xf]
      %v2970 = vld [vmem:[%s2958 + $0x2c] sm:$0xf]
      %v2971 = vld [vmem:[%s2958 + $0x30] sm:$0xf]
      %v2972 = vld [vmem:[%s2958 + $0x34] sm:$0xf]
      %v2973 = vld [vmem:[%s2958 + $0x38] sm:$0xf]
      %v2974 = vld [vmem:[%s2958 + $0x3c] sm:$0xf]
      %v2976 = vunpack.c.l.b16 %v1587
      %v2977 = vpack.c.b16 %v2976, %v2976
      %v2979 = vshll.u32 %v2707, 16
      %v2981 = vrot.slane %v2979, 1
      %v2982 = vsel %vm1931, %v1994, %v2981
      %v2983 = vshrl.u32 %v2707, 16
      %v2985 = vor.u32 %v2983, %v2981
      %v2987 = vshll.u32 %v2977, 16
      %v2989 = vrot.slane %v2987, 1
      %v2990 = vsel %vm1931, %v2985, %v2989
      %v3009 = vunpack.c.l.b16 %v2959
      %v3010 = vunpack.c.l.b16 %v2960
      %v3011 = vunpack.c.l.b16 %v2961
      %v3012 = vunpack.c.l.b16 %v2962
      %v3013 = vunpack.c.l.b16 %v2963
      %v3014 = vunpack.c.l.b16 %v2964
      %v3015 = vunpack.c.l.b16 %v2965
      %v3016 = vunpack.c.l.b16 %v2966
      %v3017 = vunpack.c.l.b16 %v2967
      %v3018 = vunpack.c.l.b16 %v2968
      %v3019 = vunpack.c.l.b16 %v2969
      %v3020 = vunpack.c.l.b16 %v2970
      %v3021 = vunpack.c.l.b16 %v2971
      %v3022 = vunpack.c.l.b16 %v2972
      %v3023 = vunpack.c.l.b16 %v2973
      %v3024 = vunpack.c.l.b16 %v2974
      %v3025 = vpack.c.b16 %v3010, %v3009
      %v3026 = vpack.c.b16 %v3012, %v3011
      %v3027 = vpack.c.b16 %v3014, %v3013
      %v3028 = vpack.c.b16 %v3016, %v3015
      %v3029 = vpack.c.b16 %v3018, %v3017
      %v3030 = vpack.c.b16 %v3020, %v3019
      %v3031 = vpack.c.b16 %v3022, %v3021
      %v3032 = vpack.c.b16 %v3024, %v3023
      %3041 = vmatpush.bf16.msra.mxu0 %v3032
      %3042 = vmatpush.bf16.msra.mxu0 %v3031
      %3043 = vmatpush.bf16.msra.mxu0 %v3030
      %3044 = vmatpush.bf16.msra.mxu0 %v3029
      %3045 = vmatpush.bf16.msra.mxu0 %v3028
      %3046 = vmatpush.bf16.msra.mxu0 %v3027
      %3047 = vmatpush.bf16.msra.mxu0 %v3026
      %3048 = vmatpush.bf16.msra.mxu0 %v3025
      %3049 = vmatmul.bf16.gmra.mxu0 %v1951
      %v3050 = vpop.f32.mrf.mxu0
      %v3051 = vadd.f32 0.0, %v3050
      %v3052 = vpop.f32.mrf.mxu0
      %v3053 = vadd.f32 0.0, %v3052
      %3054 = vmatmul.bf16.gmra.mxu0 %v1959
      %v3055 = vpop.f32.mrf.mxu0
      %v3056 = vadd.f32 0.0, %v3055
      %v3057 = vpop.f32.mrf.mxu0
      %v3058 = vadd.f32 0.0, %v3057
      %3059 = vmatmul.bf16.gmra.mxu0 %v1967
      %v3060 = vpop.f32.mrf.mxu0
      %v3061 = vadd.f32 0.0, %v3060
      %v3062 = vpop.f32.mrf.mxu0
      %v3063 = vadd.f32 0.0, %v3062
      %3064 = vmatmul.bf16.gmra.mxu0 %v1975
      %v3065 = vpop.f32.mrf.mxu0
      %v3066 = vadd.f32 0.0, %v3065
      %v3067 = vpop.f32.mrf.mxu0
      %v3068 = vadd.f32 0.0, %v3067
      %3069 = vmatmul.bf16.gmra.mxu0 %v1983
      %v3070 = vpop.f32.mrf.mxu0
      %v3071 = vadd.f32 0.0, %v3070
      %v3072 = vpop.f32.mrf.mxu0
      %v3073 = vadd.f32 0.0, %v3072
      %3074 = vmatmul.bf16.gmra.mxu0 %v1991
      %v3075 = vpop.f32.mrf.mxu0
      %v3076 = vadd.f32 0.0, %v3075
      %v3077 = vpop.f32.mrf.mxu0
      %v3078 = vadd.f32 0.0, %v3077
      %3079 = vmatmul.bf16.gmra.mxu0 %v2982
      %v3080 = vpop.f32.mrf.mxu0
      %v3081 = vadd.f32 0.0, %v3080
      %v3082 = vpop.f32.mrf.mxu0
      %v3083 = vadd.f32 0.0, %v3082
      %3084 = vmatmul.bf16.gmra.mxu0 %v2990
      %v3085 = vpop.f32.mrf.mxu0
      %v3086 = vadd.f32 0.0, %v3085
      %v3087 = vpop.f32.mrf.mxu0
      %v3088 = vadd.f32 0.0, %v3087
      %3089 = vdwg.mxu0
      %v3090 = vadd.f32 %v2942, %v3051
      %v3091 = vadd.f32 %v2943, %v3053
      %v3092 = vadd.f32 %v2944, %v3056
      %v3093 = vadd.f32 %v2945, %v3058
      %v3094 = vadd.f32 %v2946, %v3061
      %v3095 = vadd.f32 %v2947, %v3063
      %v3096 = vadd.f32 %v2948, %v3066
      %v3097 = vadd.f32 %v2949, %v3068
      %v3098 = vadd.f32 %v2950, %v3071
      %v3099 = vadd.f32 %v2951, %v3073
      %v3100 = vadd.f32 %v2952, %v3076
      %v3101 = vadd.f32 %v2953, %v3078
      %v3102 = vadd.f32 %v2954, %v3081
      %v3103 = vadd.f32 %v2955, %v3083
      %v3104 = vadd.f32 %v2956, %v3086
      %v3105 = vadd.f32 %v2957, %v3088
      %v3106 = vunpack.c.l.bf16 %v1517
      %v3107 = vunpack.c.l.bf16 %v1518
      %v3108 = vunpack.c.l.bf16 %v1519
      %v3109 = vunpack.c.l.bf16 %v1520
      %v3110 = vunpack.c.l.bf16 %v1521
      %v3111 = vunpack.c.l.bf16 %v1522
      %v3112 = vunpack.c.l.bf16 %v1523
      %v3113 = vunpack.c.l.bf16 %v1524
      %v3114 = vunpack.c.l.bf16 %v1525
      %v3115 = vunpack.c.l.bf16 %v1526
      %v3116 = vunpack.c.l.bf16 %v1527
      %v3117 = vunpack.c.l.bf16 %v1528
      %v3118 = vunpack.c.l.bf16 %v1529
      %v3119 = vunpack.c.l.bf16 %v1530
      %v3120 = vunpack.c.l.bf16 %v1531
      %v3121 = vunpack.c.l.bf16 %v1532
      %v3122 = vunpack.c.l.bf16 %v1533
      %v3123 = vunpack.c.l.bf16 %v1534
      %v3124 = vunpack.c.l.bf16 %v1535
      %v3125 = vunpack.c.l.bf16 %v1536
      %v3126 = vunpack.c.l.bf16 %v1537
      %v3127 = vunpack.c.l.bf16 %v1538
      %v3128 = vunpack.c.l.bf16 %v1539
      %v3129 = vunpack.c.l.bf16 %v1540
      %v3130 = vunpack.c.l.bf16 %v1541
      %v3131 = vunpack.c.l.bf16 %v1542
      %v3132 = vunpack.c.l.bf16 %v1543
      %v3133 = vunpack.c.l.bf16 %v1544
      %v3134 = vunpack.c.l.bf16 %v1545
      %v3135 = vunpack.c.l.bf16 %v1546
      %v3136 = vunpack.c.l.bf16 %v1547
      %v3137 = vunpack.c.l.bf16 %v1548
      %v3138 = vmax.f32 %v3106, %v3122
      %v3139 = vmax.f32 %v3107, %v3123
      %v3140 = vmax.f32 %v3108, %v3124
      %v3141 = vmax.f32 %v3109, %v3125
      %v3142 = vmax.f32 %v3110, %v3126
      %v3143 = vmax.f32 %v3111, %v3127
      %v3144 = vmax.f32 %v3112, %v3128
      %v3145 = vmax.f32 %v3113, %v3129
      %v3146 = vmax.f32 %v3114, %v3130
      %v3147 = vmax.f32 %v3115, %v3131
      %v3148 = vmax.f32 %v3116, %v3132
      %v3149 = vmax.f32 %v3117, %v3133
      %v3150 = vmax.f32 %v3118, %v3134
      %v3151 = vmax.f32 %v3119, %v3135
      %v3152 = vmax.f32 %v3120, %v3136
      %v3153 = vmax.f32 %v3121, %v3137
      %v3154 = vpack.c.bf16 %v3138, %v3138
      %v3155 = vpack.c.bf16 %v3139, %v3139
      %v3156 = vpack.c.bf16 %v3140, %v3140
      %v3157 = vpack.c.bf16 %v3141, %v3141
      %v3158 = vpack.c.bf16 %v3142, %v3142
      %v3159 = vpack.c.bf16 %v3143, %v3143
      %v3160 = vpack.c.bf16 %v3144, %v3144
      %v3161 = vpack.c.bf16 %v3145, %v3145
      %v3162 = vpack.c.bf16 %v3146, %v3146
      %v3163 = vpack.c.bf16 %v3147, %v3147
      %v3164 = vpack.c.bf16 %v3148, %v3148
      %v3165 = vpack.c.bf16 %v3149, %v3149
      %v3166 = vpack.c.bf16 %v3150, %v3150
      %v3167 = vpack.c.bf16 %v3151, %v3151
      %v3168 = vpack.c.bf16 %v3152, %v3152
      %v3169 = vpack.c.bf16 %v3153, %v3153
      %v3170 = vunpack.c.l.bf16 %v3154
      %v3171 = vunpack.c.l.bf16 %v3155
      %v3172 = vunpack.c.l.bf16 %v3156
      %v3173 = vunpack.c.l.bf16 %v3157
      %v3174 = vunpack.c.l.bf16 %v3158
      %v3175 = vunpack.c.l.bf16 %v3159
      %v3176 = vunpack.c.l.bf16 %v3160
      %v3177 = vunpack.c.l.bf16 %v3161
      %v3178 = vunpack.c.l.bf16 %v3162
      %v3179 = vunpack.c.l.bf16 %v3163
      %v3180 = vunpack.c.l.bf16 %v3164
      %v3181 = vunpack.c.l.bf16 %v3165
      %v3182 = vunpack.c.l.bf16 %v3166
      %v3183 = vunpack.c.l.bf16 %v3167
      %v3184 = vunpack.c.l.bf16 %v3168
      %v3185 = vunpack.c.l.bf16 %v3169
      %v3186 = vunpack.c.l.bf16 %v1549
      %vm3204 = vcmask 1046528
      %v3205 = vrot.slane %v3106, 1
      %v3206 = vrot.slane %v3107, 1
      %v3207 = vsel %vm3204, %v3205, %v3206
      %v3208 = vrot.slane %v3108, 1
      %v3209 = vsel %vm3204, %v3206, %v3208
      %v3210 = vrot.slane %v3109, 1
      %v3211 = vsel %vm3204, %v3208, %v3210
      %v3212 = vrot.slane %v3110, 1
      %v3213 = vsel %vm3204, %v3210, %v3212
      %v3214 = vrot.slane %v3111, 1
      %v3215 = vsel %vm3204, %v3212, %v3214
      %v3216 = vrot.slane %v3112, 1
      %v3217 = vsel %vm3204, %v3214, %v3216
      %v3218 = vrot.slane %v3113, 1
      %v3219 = vsel %vm3204, %v3216, %v3218
      %v3220 = vrot.slane %v3114, 1
      %v3221 = vsel %vm3204, %v3218, %v3220
      %v3222 = vrot.slane %v3115, 1
      %v3223 = vsel %vm3204, %v3220, %v3222
      %v3224 = vrot.slane %v3116, 1
      %v3225 = vsel %vm3204, %v3222, %v3224
      %v3226 = vrot.slane %v3117, 1
      %v3227 = vsel %vm3204, %v3224, %v3226
      %v3228 = vrot.slane %v3118, 1
      %v3229 = vsel %vm3204, %v3226, %v3228
      %v3230 = vrot.slane %v3119, 1
      %v3231 = vsel %vm3204, %v3228, %v3230
      %v3232 = vrot.slane %v3120, 1
      %v3233 = vsel %vm3204, %v3230, %v3232
      %v3234 = vrot.slane %v3121, 1
      %v3235 = vsel %vm3204, %v3232, %v3234
      %v3236 = vrot.slane %v3186, 1
      %v3237 = vsel %vm3204, %v3234, %v3236
      %v3254 = vmax.f32 %v3170, %v3207
      %v3255 = vmax.f32 %v3171, %v3209
      %v3256 = vmax.f32 %v3172, %v3211
      %v3257 = vmax.f32 %v3173, %v3213
      %v3258 = vmax.f32 %v3174, %v3215
      %v3259 = vmax.f32 %v3175, %v3217
      %v3260 = vmax.f32 %v3176, %v3219
      %v3261 = vmax.f32 %v3177, %v3221
      %v3262 = vmax.f32 %v3178, %v3223
      %v3263 = vmax.f32 %v3179, %v3225
      %v3264 = vmax.f32 %v3180, %v3227
      %v3265 = vmax.f32 %v3181, %v3229
      %v3266 = vmax.f32 %v3182, %v3231
      %v3267 = vmax.f32 %v3183, %v3233
      %v3268 = vmax.f32 %v3184, %v3235
      %v3269 = vmax.f32 %v3185, %v3237
      %v3270 = vpack.c.bf16 %v3254, %v3254
      %v3271 = vpack.c.bf16 %v3255, %v3255
      %v3272 = vpack.c.bf16 %v3256, %v3256
      %v3273 = vpack.c.bf16 %v3257, %v3257
      %v3274 = vpack.c.bf16 %v3258, %v3258
      %v3275 = vpack.c.bf16 %v3259, %v3259
      %v3276 = vpack.c.bf16 %v3260, %v3260
      %v3277 = vpack.c.bf16 %v3261, %v3261
      %v3278 = vpack.c.bf16 %v3262, %v3262
      %v3279 = vpack.c.bf16 %v3263, %v3263
      %v3280 = vpack.c.bf16 %v3264, %v3264
      %v3281 = vpack.c.bf16 %v3265, %v3265
      %v3282 = vpack.c.bf16 %v3266, %v3266
      %v3283 = vpack.c.bf16 %v3267, %v3267
      %v3284 = vpack.c.bf16 %v3268, %v3268
      %v3285 = vpack.c.bf16 %v3269, %v3269
      %v3286 = vunpack.c.l.bf16 %v3270
      %v3287 = vunpack.c.l.bf16 %v3271
      %v3288 = vunpack.c.l.bf16 %v3272
      %v3289 = vunpack.c.l.bf16 %v3273
      %v3290 = vunpack.c.l.bf16 %v3274
      %v3291 = vunpack.c.l.bf16 %v3275
      %v3292 = vunpack.c.l.bf16 %v3276
      %v3293 = vunpack.c.l.bf16 %v3277
      %v3294 = vunpack.c.l.bf16 %v3278
      %v3295 = vunpack.c.l.bf16 %v3279
      %v3296 = vunpack.c.l.bf16 %v3280
      %v3297 = vunpack.c.l.bf16 %v3281
      %v3298 = vunpack.c.l.bf16 %v3282
      %v3299 = vunpack.c.l.bf16 %v3283
      %v3300 = vunpack.c.l.bf16 %v3284
      %v3301 = vunpack.c.l.bf16 %v3285
      %v3302 = vunpack.c.l.bf16 %v1550
      %v3303 = vunpack.c.l.bf16 %v1551
      %v3304 = vunpack.c.l.bf16 %v1552
      %v3305 = vunpack.c.l.bf16 %v1553
      %v3306 = vunpack.c.l.bf16 %v1554
      %v3307 = vunpack.c.l.bf16 %v1555
      %v3308 = vunpack.c.l.bf16 %v1556
      %v3309 = vunpack.c.l.bf16 %v1557
      %v3310 = vunpack.c.l.bf16 %v1558
      %v3311 = vunpack.c.l.bf16 %v1559
      %v3312 = vunpack.c.l.bf16 %v1560
      %v3313 = vunpack.c.l.bf16 %v1561
      %v3314 = vunpack.c.l.bf16 %v1562
      %v3315 = vunpack.c.l.bf16 %v1563
      %v3316 = vunpack.c.l.bf16 %v1564
      %v3317 = vunpack.c.l.bf16 %v1565
      %v3318 = vmax.f32 %v3286, %v3302
      %v3319 = vmax.f32 %v3287, %v3303
      %v3320 = vmax.f32 %v3288, %v3304
      %v3321 = vmax.f32 %v3289, %v3305
      %v3322 = vmax.f32 %v3290, %v3306
      %v3323 = vmax.f32 %v3291, %v3307
      %v3324 = vmax.f32 %v3292, %v3308
      %v3325 = vmax.f32 %v3293, %v3309
      %v3326 = vmax.f32 %v3294, %v3310
      %v3327 = vmax.f32 %v3295, %v3311
      %v3328 = vmax.f32 %v3296, %v3312
      %v3329 = vmax.f32 %v3297, %v3313
      %v3330 = vmax.f32 %v3298, %v3314
      %v3331 = vmax.f32 %v3299, %v3315
      %v3332 = vmax.f32 %v3300, %v3316
      %v3333 = vmax.f32 %v3301, %v3317
      %v3334 = vpack.c.bf16 %v3318, %v3318
      %v3335 = vpack.c.bf16 %v3319, %v3319
      %v3336 = vpack.c.bf16 %v3320, %v3320
      %v3337 = vpack.c.bf16 %v3321, %v3321
      %v3338 = vpack.c.bf16 %v3322, %v3322
      %v3339 = vpack.c.bf16 %v3323, %v3323
      %v3340 = vpack.c.bf16 %v3324, %v3324
      %v3341 = vpack.c.bf16 %v3325, %v3325
      %v3342 = vpack.c.bf16 %v3326, %v3326
      %v3343 = vpack.c.bf16 %v3327, %v3327
      %v3344 = vpack.c.bf16 %v3328, %v3328
      %v3345 = vpack.c.bf16 %v3329, %v3329
      %v3346 = vpack.c.bf16 %v3330, %v3330
      %v3347 = vpack.c.bf16 %v3331, %v3331
      %v3348 = vpack.c.bf16 %v3332, %v3332
      %v3349 = vpack.c.bf16 %v3333, %v3333
      %v3350 = vunpack.c.l.bf16 %v3334
      %v3351 = vunpack.c.l.bf16 %v3335
      %v3352 = vunpack.c.l.bf16 %v3336
      %v3353 = vunpack.c.l.bf16 %v3337
      %v3354 = vunpack.c.l.bf16 %v3338
      %v3355 = vunpack.c.l.bf16 %v3339
      %v3356 = vunpack.c.l.bf16 %v3340
      %v3357 = vunpack.c.l.bf16 %v3341
      %v3358 = vunpack.c.l.bf16 %v3342
      %v3359 = vunpack.c.l.bf16 %v3343
      %v3360 = vunpack.c.l.bf16 %v3344
      %v3361 = vunpack.c.l.bf16 %v3345
      %v3362 = vunpack.c.l.bf16 %v3346
      %v3363 = vunpack.c.l.bf16 %v3347
      %v3364 = vunpack.c.l.bf16 %v3348
      %v3365 = vunpack.c.l.bf16 %v3349
      %v3366 = vunpack.c.l.bf16 %v1566
      %v3367 = vunpack.c.l.bf16 %v1567
      %v3368 = vunpack.c.l.bf16 %v1568
      %v3369 = vunpack.c.l.bf16 %v1569
      %v3370 = vunpack.c.l.bf16 %v1570
      %v3371 = vunpack.c.l.bf16 %v1571
      %v3372 = vunpack.c.l.bf16 %v1572
      %v3373 = vunpack.c.l.bf16 %v1573
      %v3374 = vunpack.c.l.bf16 %v1574
      %v3375 = vunpack.c.l.bf16 %v1575
      %v3376 = vunpack.c.l.bf16 %v1576
      %v3377 = vunpack.c.l.bf16 %v1577
      %v3378 = vunpack.c.l.bf16 %v1578
      %v3379 = vunpack.c.l.bf16 %v1579
      %v3380 = vunpack.c.l.bf16 %v1580
      %v3381 = vunpack.c.l.bf16 %v1581
      %v3382 = vmax.f32 %v3350, %v3366
      %v3383 = vmax.f32 %v3351, %v3367
      %v3384 = vmax.f32 %v3352, %v3368
      %v3385 = vmax.f32 %v3353, %v3369
      %v3386 = vmax.f32 %v3354, %v3370
      %v3387 = vmax.f32 %v3355, %v3371
      %v3388 = vmax.f32 %v3356, %v3372
      %v3389 = vmax.f32 %v3357, %v3373
      %v3390 = vmax.f32 %v3358, %v3374
      %v3391 = vmax.f32 %v3359, %v3375
      %v3392 = vmax.f32 %v3360, %v3376
      %v3393 = vmax.f32 %v3361, %v3377
      %v3394 = vmax.f32 %v3362, %v3378
      %v3395 = vmax.f32 %v3363, %v3379
      %v3396 = vmax.f32 %v3364, %v3380
      %v3397 = vmax.f32 %v3365, %v3381
      %v3398 = vpack.c.bf16 %v3382, %v3382
      %v3399 = vpack.c.bf16 %v3383, %v3383
      %v3400 = vpack.c.bf16 %v3384, %v3384
      %v3401 = vpack.c.bf16 %v3385, %v3385
      %v3402 = vpack.c.bf16 %v3386, %v3386
      %v3403 = vpack.c.bf16 %v3387, %v3387
      %v3404 = vpack.c.bf16 %v3388, %v3388
      %v3405 = vpack.c.bf16 %v3389, %v3389
      %v3406 = vpack.c.bf16 %v3390, %v3390
      %v3407 = vpack.c.bf16 %v3391, %v3391
      %v3408 = vpack.c.bf16 %v3392, %v3392
      %v3409 = vpack.c.bf16 %v3393, %v3393
      %v3410 = vpack.c.bf16 %v3394, %v3394
      %v3411 = vpack.c.bf16 %v3395, %v3395
      %v3412 = vpack.c.bf16 %v3396, %v3396
      %v3413 = vpack.c.bf16 %v3397, %v3397
      %v3414 = vunpack.c.l.bf16 %v3398
      %v3415 = vunpack.c.l.bf16 %v3399
      %v3416 = vunpack.c.l.bf16 %v3400
      %v3417 = vunpack.c.l.bf16 %v3401
      %v3418 = vunpack.c.l.bf16 %v3402
      %v3419 = vunpack.c.l.bf16 %v3403
      %v3420 = vunpack.c.l.bf16 %v3404
      %v3421 = vunpack.c.l.bf16 %v3405
      %v3422 = vunpack.c.l.bf16 %v3406
      %v3423 = vunpack.c.l.bf16 %v3407
      %v3424 = vunpack.c.l.bf16 %v3408
      %v3425 = vunpack.c.l.bf16 %v3409
      %v3426 = vunpack.c.l.bf16 %v3410
      %v3427 = vunpack.c.l.bf16 %v3411
      %v3428 = vunpack.c.l.bf16 %v3412
      %v3429 = vunpack.c.l.bf16 %v3413
      %v3430 = vunpack.c.l.bf16 %v1582
      %v3448 = vrot.slane %v3302, 1
      %v3449 = vrot.slane %v3303, 1
      %v3450 = vsel %vm3204, %v3448, %v3449
      %v3451 = vrot.slane %v3304, 1
      %v3452 = vsel %vm3204, %v3449, %v3451
      %v3453 = vrot.slane %v3305, 1
      %v3454 = vsel %vm3204, %v3451, %v3453
      %v3455 = vrot.slane %v3306, 1
      %v3456 = vsel %vm3204, %v3453, %v3455
      %v3457 = vrot.slane %v3307, 1
      %v3458 = vsel %vm3204, %v3455, %v3457
      %v3459 = vrot.slane %v3308, 1
      %v3460 = vsel %vm3204, %v3457, %v3459
      %v3461 = vrot.slane %v3309, 1
      %v3462 = vsel %vm3204, %v3459, %v3461
      %v3463 = vrot.slane %v3310, 1
      %v3464 = vsel %vm3204, %v3461, %v3463
      %v3465 = vrot.slane %v3311, 1
      %v3466 = vsel %vm3204, %v3463, %v3465
      %v3467 = vrot.slane %v3312, 1
      %v3468 = vsel %vm3204, %v3465, %v3467
      %v3469 = vrot.slane %v3313, 1
      %v3470 = vsel %vm3204, %v3467, %v3469
      %v3471 = vrot.slane %v3314, 1
      %v3472 = vsel %vm3204, %v3469, %v3471
      %v3473 = vrot.slane %v3315, 1
      %v3474 = vsel %vm3204, %v3471, %v3473
      %v3475 = vrot.slane %v3316, 1
      %v3476 = vsel %vm3204, %v3473, %v3475
      %v3477 = vrot.slane %v3317, 1
      %v3478 = vsel %vm3204, %v3475, %v3477
      %v3479 = vrot.slane %v3430, 1
      %v3480 = vsel %vm3204, %v3477, %v3479
      %v3497 = vmax.f32 %v3414, %v3450
      %v3498 = vmax.f32 %v3415, %v3452
      %v3499 = vmax.f32 %v3416, %v3454
      %v3500 = vmax.f32 %v3417, %v3456
      %v3501 = vmax.f32 %v3418, %v3458
      %v3502 = vmax.f32 %v3419, %v3460
      %v3503 = vmax.f32 %v3420, %v3462
      %v3504 = vmax.f32 %v3421, %v3464
      %v3505 = vmax.f32 %v3422, %v3466
      %v3506 = vmax.f32 %v3423, %v3468
      %v3507 = vmax.f32 %v3424, %v3470
      %v3508 = vmax.f32 %v3425, %v3472
      %v3509 = vmax.f32 %v3426, %v3474
      %v3510 = vmax.f32 %v3427, %v3476
      %v3511 = vmax.f32 %v3428, %v3478
      %v3512 = vmax.f32 %v3429, %v3480
      %v3513 = vpack.c.bf16 %v3497, %v3497
      %v3514 = vpack.c.bf16 %v3498, %v3498
      %v3515 = vpack.c.bf16 %v3499, %v3499
      %v3516 = vpack.c.bf16 %v3500, %v3500
      %v3517 = vpack.c.bf16 %v3501, %v3501
      %v3518 = vpack.c.bf16 %v3502, %v3502
      %v3519 = vpack.c.bf16 %v3503, %v3503
      %v3520 = vpack.c.bf16 %v3504, %v3504
      %v3521 = vpack.c.bf16 %v3505, %v3505
      %v3522 = vpack.c.bf16 %v3506, %v3506
      %v3523 = vpack.c.bf16 %v3507, %v3507
      %v3524 = vpack.c.bf16 %v3508, %v3508
      %v3525 = vpack.c.bf16 %v3509, %v3509
      %v3526 = vpack.c.bf16 %v3510, %v3510
      %v3527 = vpack.c.bf16 %v3511, %v3511
      %v3528 = vpack.c.bf16 %v3512, %v3512
      %v3529 = vunpack.c.l.bf16 %v3513
      %v3530 = vunpack.c.l.bf16 %v3514
      %v3531 = vunpack.c.l.bf16 %v3515
      %v3532 = vunpack.c.l.bf16 %v3516
      %v3533 = vunpack.c.l.bf16 %v3517
      %v3534 = vunpack.c.l.bf16 %v3518
      %v3535 = vunpack.c.l.bf16 %v3519
      %v3536 = vunpack.c.l.bf16 %v3520
      %v3537 = vunpack.c.l.bf16 %v3521
      %v3538 = vunpack.c.l.bf16 %v3522
      %v3539 = vunpack.c.l.bf16 %v3523
      %v3540 = vunpack.c.l.bf16 %v3524
      %v3541 = vunpack.c.l.bf16 %v3525
      %v3542 = vunpack.c.l.bf16 %v3526
      %v3543 = vunpack.c.l.bf16 %v3527
      %v3544 = vunpack.c.l.bf16 %v3528
      %v3545 = vunpack.c.l.bf16 %v1583
      %v3546 = vunpack.c.l.bf16 %v1584
      %v3547 = vmax.f32 %v3529, %v3108
      %v3548 = vmax.f32 %v3530, %v3109
      %v3549 = vmax.f32 %v3531, %v3110
      %v3550 = vmax.f32 %v3532, %v3111
      %v3551 = vmax.f32 %v3533, %v3112
      %v3552 = vmax.f32 %v3534, %v3113
      %v3553 = vmax.f32 %v3535, %v3114
      %v3554 = vmax.f32 %v3536, %v3115
      %v3555 = vmax.f32 %v3537, %v3116
      %v3556 = vmax.f32 %v3538, %v3117
      %v3557 = vmax.f32 %v3539, %v3118
      %v3558 = vmax.f32 %v3540, %v3119
      %v3559 = vmax.f32 %v3541, %v3120
      %v3560 = vmax.f32 %v3542, %v3121
      %v3561 = vmax.f32 %v3543, %v3545
      %v3562 = vmax.f32 %v3544, %v3546
      %v3563 = vpack.c.bf16 %v3547, %v3547
      %v3564 = vpack.c.bf16 %v3548, %v3548
      %v3565 = vpack.c.bf16 %v3549, %v3549
      %v3566 = vpack.c.bf16 %v3550, %v3550
      %v3567 = vpack.c.bf16 %v3551, %v3551
      %v3568 = vpack.c.bf16 %v3552, %v3552
      %v3569 = vpack.c.bf16 %v3553, %v3553
      %v3570 = vpack.c.bf16 %v3554, %v3554
      %v3571 = vpack.c.bf16 %v3555, %v3555
      %v3572 = vpack.c.bf16 %v3556, %v3556
      %v3573 = vpack.c.bf16 %v3557, %v3557
      %v3574 = vpack.c.bf16 %v3558, %v3558
      %v3575 = vpack.c.bf16 %v3559, %v3559
      %v3576 = vpack.c.bf16 %v3560, %v3560
      %v3577 = vpack.c.bf16 %v3561, %v3561
      %v3578 = vpack.c.bf16 %v3562, %v3562
      %v3579 = vunpack.c.l.bf16 %v3563
      %v3580 = vunpack.c.l.bf16 %v3564
      %v3581 = vunpack.c.l.bf16 %v3565
      %v3582 = vunpack.c.l.bf16 %v3566
      %v3583 = vunpack.c.l.bf16 %v3567
      %v3584 = vunpack.c.l.bf16 %v3568
      %v3585 = vunpack.c.l.bf16 %v3569
      %v3586 = vunpack.c.l.bf16 %v3570
      %v3587 = vunpack.c.l.bf16 %v3571
      %v3588 = vunpack.c.l.bf16 %v3572
      %v3589 = vunpack.c.l.bf16 %v3573
      %v3590 = vunpack.c.l.bf16 %v3574
      %v3591 = vunpack.c.l.bf16 %v3575
      %v3592 = vunpack.c.l.bf16 %v3576
      %v3593 = vunpack.c.l.bf16 %v3577
      %v3594 = vunpack.c.l.bf16 %v3578
      %v3595 = vunpack.c.l.bf16 %v1585
      %v3596 = vunpack.c.l.bf16 %v1586
      %v3597 = vmax.f32 %v3579, %v3124
      %v3598 = vmax.f32 %v3580, %v3125
      %v3599 = vmax.f32 %v3581, %v3126
      %v3600 = vmax.f32 %v3582, %v3127
      %v3601 = vmax.f32 %v3583, %v3128
      %v3602 = vmax.f32 %v3584, %v3129
      %v3603 = vmax.f32 %v3585, %v3130
      %v3604 = vmax.f32 %v3586, %v3131
      %v3605 = vmax.f32 %v3587, %v3132
      %v3606 = vmax.f32 %v3588, %v3133
      %v3607 = vmax.f32 %v3589, %v3134
      %v3608 = vmax.f32 %v3590, %v3135
      %v3609 = vmax.f32 %v3591, %v3136
      %v3610 = vmax.f32 %v3592, %v3137
      %v3611 = vmax.f32 %v3593, %v3595
      %v3612 = vmax.f32 %v3594, %v3596
      %v3613 = vpack.c.bf16 %v3597, %v3597
      %v3614 = vpack.c.bf16 %v3598, %v3598
      %v3615 = vpack.c.bf16 %v3599, %v3599
      %v3616 = vpack.c.bf16 %v3600, %v3600
      %v3617 = vpack.c.bf16 %v3601, %v3601
      %v3618 = vpack.c.bf16 %v3602, %v3602
      %v3619 = vpack.c.bf16 %v3603, %v3603
      %v3620 = vpack.c.bf16 %v3604, %v3604
      %v3621 = vpack.c.bf16 %v3605, %v3605
      %v3622 = vpack.c.bf16 %v3606, %v3606
      %v3623 = vpack.c.bf16 %v3607, %v3607
      %v3624 = vpack.c.bf16 %v3608, %v3608
      %v3625 = vpack.c.bf16 %v3609, %v3609
      %v3626 = vpack.c.bf16 %v3610, %v3610
      %v3627 = vpack.c.bf16 %v3611, %v3611
      %v3628 = vpack.c.bf16 %v3612, %v3612
      %v3629 = vunpack.c.l.bf16 %v3613
      %v3630 = vunpack.c.l.bf16 %v3614
      %v3631 = vunpack.c.l.bf16 %v3615
      %v3632 = vunpack.c.l.bf16 %v3616
      %v3633 = vunpack.c.l.bf16 %v3617
      %v3634 = vunpack.c.l.bf16 %v3618
      %v3635 = vunpack.c.l.bf16 %v3619
      %v3636 = vunpack.c.l.bf16 %v3620
      %v3637 = vunpack.c.l.bf16 %v3621
      %v3638 = vunpack.c.l.bf16 %v3622
      %v3639 = vunpack.c.l.bf16 %v3623
      %v3640 = vunpack.c.l.bf16 %v3624
      %v3641 = vunpack.c.l.bf16 %v3625
      %v3642 = vunpack.c.l.bf16 %v3626
      %v3643 = vunpack.c.l.bf16 %v3627
      %v3644 = vunpack.c.l.bf16 %v3628
      %v3645 = vunpack.c.l.bf16 %v1587
      %v3649 = vrot.slane %v3545, 1
      %v3650 = vsel %vm3204, %v3234, %v3649
      %v3651 = vrot.slane %v3546, 1
      %v3652 = vsel %vm3204, %v3649, %v3651
      %v3653 = vrot.slane %v3645, 1
      %v3654 = vsel %vm3204, %v3651, %v3653
      %v3658 = vmax.f32 %v3629, %v3211
      %v3659 = vmax.f32 %v3630, %v3213
      %v3660 = vmax.f32 %v3631, %v3215
      %v3661 = vmax.f32 %v3632, %v3217
      %v3662 = vmax.f32 %v3633, %v3219
      %v3663 = vmax.f32 %v3634, %v3221
      %v3664 = vmax.f32 %v3635, %v3223
      %v3665 = vmax.f32 %v3636, %v3225
      %v3666 = vmax.f32 %v3637, %v3227
      %v3667 = vmax.f32 %v3638, %v3229
      %v3668 = vmax.f32 %v3639, %v3231
      %v3669 = vmax.f32 %v3640, %v3233
      %v3670 = vmax.f32 %v3641, %v3235
      %v3671 = vmax.f32 %v3642, %v3650
      %v3672 = vmax.f32 %v3643, %v3652
      %v3673 = vmax.f32 %v3644, %v3654
      %v3674 = vpack.c.bf16 %v3658, %v3658
      %v3675 = vpack.c.bf16 %v3659, %v3659
      %v3676 = vpack.c.bf16 %v3660, %v3660
      %v3677 = vpack.c.bf16 %v3661, %v3661
      %v3678 = vpack.c.bf16 %v3662, %v3662
      %v3679 = vpack.c.bf16 %v3663, %v3663
      %v3680 = vpack.c.bf16 %v3664, %v3664
      %v3681 = vpack.c.bf16 %v3665, %v3665
      %v3682 = vpack.c.bf16 %v3666, %v3666
      %v3683 = vpack.c.bf16 %v3667, %v3667
      %v3684 = vpack.c.bf16 %v3668, %v3668
      %v3685 = vpack.c.bf16 %v3669, %v3669
      %v3686 = vpack.c.bf16 %v3670, %v3670
      %v3687 = vpack.c.bf16 %v3671, %v3671
      %v3688 = vpack.c.bf16 %v3672, %v3672
      %v3689 = vpack.c.bf16 %v3673, %v3673
      %v3690 = vunpack.c.l.bf16 %v3674
      %v3691 = vunpack.c.l.bf16 %v3675
      %v3692 = vunpack.c.l.bf16 %v3676
      %v3693 = vunpack.c.l.bf16 %v3677
      %v3694 = vunpack.c.l.bf16 %v3678
      %v3695 = vunpack.c.l.bf16 %v3679
      %v3696 = vunpack.c.l.bf16 %v3680
      %v3697 = vunpack.c.l.bf16 %v3681
      %v3698 = vunpack.c.l.bf16 %v3682
      %v3699 = vunpack.c.l.bf16 %v3683
      %v3700 = vunpack.c.l.bf16 %v3684
      %v3701 = vunpack.c.l.bf16 %v3685
      %v3702 = vunpack.c.l.bf16 %v3686
      %v3703 = vunpack.c.l.bf16 %v3687
      %v3704 = vunpack.c.l.bf16 %v3688
      %v3705 = vunpack.c.l.bf16 %v3689
      %3706 = vst [vmem:[%s251] sm:$0xff] %v3690
      %3707 = vst [vmem:[%s251 + $0x8] sm:$0xff] %v3691
      %3708 = vst [vmem:[%s251 + $0x10] sm:$0xff] %v3692
      %3709 = vst [vmem:[%s251 + $0x18] sm:$0xff] %v3693
      %3710 = vst [vmem:[%s251 + $0x20] sm:$0xff] %v3694
      %3711 = vst [vmem:[%s251 + $0x28] sm:$0xff] %v3695
      %3712 = vst [vmem:[%s251 + $0x30] sm:$0xff] %v3696
      %3713 = vst [vmem:[%s251 + $0x38] sm:$0xff] %v3697
      %3714 = vst [vmem:[%s251 + $0x40] sm:$0xff] %v3698
      %3715 = vst [vmem:[%s251 + $0x48] sm:$0xff] %v3699
      %3716 = vst [vmem:[%s251 + $0x50] sm:$0xff] %v3700
      %3717 = vst [vmem:[%s251 + $0x58] sm:$0xff] %v3701
      %3718 = vst [vmem:[%s251 + $0x60] sm:$0xff] %v3702
      %3719 = vst [vmem:[%s251 + $0x68] sm:$0xff] %v3703
      %3720 = vst [vmem:[%s251 + $0x70] sm:$0xff] %v3704
      %3721 = vst [vmem:[%s251 + $0x78] sm:$0xff] %v3705
      %v3722 = vld [vmem:[%s4] sm:$0x1]
      %v3724 = vperm.slane %v3722, 0
      %v3726 = vadd.f32 %v3090, %v3724
      %v3727 = vadd.f32 %v3091, %v3724
      %v3728 = vadd.f32 %v3092, %v3724
      %v3729 = vadd.f32 %v3093, %v3724
      %v3730 = vadd.f32 %v3094, %v3724
      %v3731 = vadd.f32 %v3095, %v3724
      %v3732 = vadd.f32 %v3096, %v3724
      %v3733 = vadd.f32 %v3097, %v3724
      %v3734 = vadd.f32 %v3098, %v3724
      %v3735 = vadd.f32 %v3099, %v3724
      %v3736 = vadd.f32 %v3100, %v3724
      %v3737 = vadd.f32 %v3101, %v3724
      %v3738 = vadd.f32 %v3102, %v3724
      %v3739 = vadd.f32 %v3103, %v3724
      %v3740 = vadd.f32 %v3104, %v3724
      %v3741 = vadd.f32 %v3105, %v3724
      %s3742 = scalar_lea.vmem %s251, 128
      %3743 = vst [vmem:[%s3742] sm:$0xff] %v3726
      %3744 = vst [vmem:[%s3742 + $0x8] sm:$0xff] %v3727
      %3745 = vst [vmem:[%s3742 + $0x10] sm:$0xff] %v3728
      %3746 = vst [vmem:[%s3742 + $0x18] sm:$0xff] %v3729
      %3747 = vst [vmem:[%s3742 + $0x20] sm:$0xff] %v3730
      %3748 = vst [vmem:[%s3742 + $0x28] sm:$0xff] %v3731
      %3749 = vst [vmem:[%s3742 + $0x30] sm:$0xff] %v3732
      %3750 = vst [vmem:[%s3742 + $0x38] sm:$0xff] %v3733
      %3751 = vst [vmem:[%s3742 + $0x40] sm:$0xff] %v3734
      %3752 = vst [vmem:[%s3742 + $0x48] sm:$0xff] %v3735
      %3753 = vst [vmem:[%s3742 + $0x50] sm:$0xff] %v3736
      %3754 = vst [vmem:[%s3742 + $0x58] sm:$0xff] %v3737
      %3755 = vst [vmem:[%s3742 + $0x60] sm:$0xff] %v3738
      %3756 = vst [vmem:[%s3742 + $0x68] sm:$0xff] %v3739
      %3757 = vst [vmem:[%s3742 + $0x70] sm:$0xff] %v3740
      %3758 = vst [vmem:[%s3742 + $0x78] sm:$0xff] %v3741
      %p3759 = scmp.lt.s32.totalorder %s17, 1
      %s3760 = scalar_select %p3759, %s17, 1
      %s3761 = smul.addr %s3760, 32
      %s3762 = smul.addr %s3761, 8
      %s3763 = scalar_lea.vmem %s6, %s3762
      // Predicated region
      $region45: #{maxpool_block_forward.1} parent=43 // pred_check
        %p3764 = pneg %p166
      $region46: #{maxpool_block_forward.1} parent=43 // pred_check_branch
        %3766 = sbr.rel (%p3764) target = $region48
      $region47: #{maxpool_block_forward.1} parent=43 // pred_region
        _
      $region48: #{maxpool_block_forward.1} parent=43 // pred_fallthru
        _
    $region44: #{maxpool_block_forward.1} parent=5 // pred_fallthru
      _
    %p3767 = scmp.le.s32.totalorder 2, %s12
    // Predicated region
    $region49: #{maxpool_block_forward.1} parent=5 // pred_check
      %p3768 = pneg %p3767
    $region50: #{maxpool_block_forward.1} parent=5 // pred_check_branch
      %3770 = sbr.rel (%p3768) target = $region52
    $region51: #{maxpool_block_forward.1} parent=5 // pred_region
      %s3771 = ssub.s32 %s12, 2
      // Predicated region
      $region53: #{maxpool_block_forward.1} parent=51 // pred_check
        %p3772 = pneg %p172
      $region54: #{maxpool_block_forward.1} parent=51 // pred_check_branch
        %3774 = sbr.rel (%p3772) target = $region56
      $region55: #{maxpool_block_forward.1} parent=51 // pred_region
        %p3775 = scmp.lt.s32.totalorder %s18, 1
        %s3776 = scalar_select %p3775, %s18, 1
        %s3777 = smul.addr %s3776, 32
        %s3778 = smul.addr %s3777, 8
        %s3779 = scalar_lea.vmem %s6, %s3778
      $region56: #{maxpool_block_forward.1} parent=51 // pred_fallthru
        _
    $region52: #{maxpool_block_forward.1} parent=5 // pred_fallthru
      _
  $region6: #{maxpool_block_forward.1} parent=0 // loop_footer
    %s16 = sadd.s32 1, %s12
  $region7: #{maxpool_block_forward.1} parent=0 // loop_footer_branch
    %11 = sbr.rel target = $region3
  $region8: #{maxpool_block_forward.1} parent=0 // loop_exit
    _

</llo_original>
